<compile_context>
chip_gen: v5e
topology: v5e:2x2
jax: 0.10.0
libtpu: 0.0.40
codegen_flags: <defaults>
</compile_context>

<pallas_src>
import functools
import math

import jax
import jax.numpy as jnp
from jax import lax
from jax.experimental import pallas as pl
from jax.experimental.pallas import tpu as pltpu


# Conservative scoped-VMEM budget: v7x only has 64 MiB physical per TensorCore,
# so stay well below it (also fine on v5e/v6e's 128 MiB).
VMEM_LIMIT_BYTES = 40 * 1024 * 1024


def _pick_tile(dim, target, mult):
    """Largest multiple of `mult` <= target that evenly divides `dim`; else `dim`."""
    if dim <= target:
        return dim
    t = (min(target, dim) // mult) * mult
    while t >= mult:
        if dim % t == 0:
            return t
        t -= mult
    return dim


def _itemsize(dt):
    return jnp.dtype(dt).itemsize


# ----------------------------- tiled linear (+relu) --------------------------

def _linear_kernel(x_ref, w_ref, b_ref, o_ref, acc_ref, *, act):
    k = pl.program_id(2)

    @pl.when(k == 0)
    def _():
        acc_ref[...] = jnp.zeros_like(acc_ref)

    # bf16 x bf16 -> f32 accumulation on the MXU.
    acc_ref[...] += jnp.dot(x_ref[...], w_ref[...],
                            preferred_element_type=jnp.float32)

    @pl.when(k == pl.num_programs(2) - 1)
    def _():
        y = acc_ref[...] + b_ref[...]
        if act == "relu":
            y = jnp.maximum(y, 0.0)
        o_ref[...] = y.astype(o_ref.dtype)


def linear(x, w, b, act=None, out_dtype=None, tm=512, tn=256, tk=512):
    """y = act(x @ w + b). x:[M,K] bf16, w:[K,N] bf16, b:[1,N] f32."""
    M, K = x.shape
    _, N = w.shape
    out_dtype = out_dtype or x.dtype
    tm = _pick_tile(M, tm, 16)      # bf16 sublane packing -> multiple of 16
    tn = _pick_tile(N, tn, 128)
    tk = _pick_tile(K, tk, 128)
    grid = (M // tm, N // tn, K // tk)
    cost = pl.CostEstimate(
        flops=2 * M * N * K,
        transcendentals=0,
        bytes_accessed=(M * K * _itemsize(x.dtype) + K * N * _itemsize(w.dtype)
                        + M * N * _itemsize(out_dtype) + N * 4))
    return pl.pallas_call(
        functools.partial(_linear_kernel, act=act),
        out_shape=jax.ShapeDtypeStruct((M, N), out_dtype),
        grid=grid,
        in_specs=[
            pl.BlockSpec((tm, tk), lambda i, j, k: (i, k)),
            pl.BlockSpec((tk, tn), lambda i, j, k: (k, j)),
            pl.BlockSpec((1, tn), lambda i, j, k: (0, j)),
        ],
        out_specs=pl.BlockSpec((tm, tn), lambda i, j, k: (i, j)),
        scratch_shapes=[pltpu.VMEM((tm, tn), jnp.float32)],
        compiler_params=pltpu.CompilerParams(
            dimension_semantics=("parallel", "parallel", "arbitrary"),
            vmem_limit_bytes=VMEM_LIMIT_BYTES),
        cost_estimate=cost,
    )(x, w, b)


# ------------------ tiled linear fused with residual + LayerNorm -------------

def _linear_res_ln_kernel(x_ref, w_ref, b_ref, res_ref, g_ref, bb_ref,
                          o_ref, acc_ref, *, eps):
    k = pl.program_id(1)

    @pl.when(k == 0)
    def _():
        acc_ref[...] = jnp.zeros_like(acc_ref)

    acc_ref[...] += jnp.dot(x_ref[...], w_ref[...],
                            preferred_element_type=jnp.float32)

    @pl.when(k == pl.num_programs(1) - 1)
    def _():
        h = acc_ref[...] + b_ref[...] + res_ref[...].astype(jnp.float32)
        mean = jnp.mean(h, axis=-1, keepdims=True)
        c = h - mean
        var = jnp.mean(c * c, axis=-1, keepdims=True)
        inv = lax.rsqrt(var + eps)
        o_ref[...] = (c * inv * g_ref[...] + bb_ref[...]).astype(o_ref.dtype)


def linear_residual_layernorm(x, w, b, res, gamma, beta, eps=1e-5,
                              out_dtype=None, tm=256, tk=256):
    """LayerNorm((x @ w + b) + res).  The full-N output row stays resident so the
    LN epilogue fuses into the last K step (no separate HBM pass).
    TODO(synk): for very large d_model (> ~8k) switch to an N-tiled matmul +
    separate LN kernel to stay inside v7x's 64 MiB VMEM."""
    M, K = x.shape
    _, N = w.shape
    out_dtype = out_dtype or x.dtype
    tm = _pick_tile(M, tm, 16)
    tk = _pick_tile(K, tk, 128)
    grid = (M // tm, K // tk)
    cost = pl.CostEstimate(
        flops=2 * M * N * K + 8 * M * N,
        transcendentals=M,
        bytes_accessed=(M * K * _itemsize(x.dtype) + K * N * _itemsize(w.dtype)
                        + M * N * _itemsize(res.dtype)
                        + M * N * _itemsize(out_dtype) + 3 * N * 4))
    return pl.pallas_call(
        functools.partial(_linear_res_ln_kernel, eps=eps),
        out_shape=jax.ShapeDtypeStruct((M, N), out_dtype),
        grid=grid,
        in_specs=[
            pl.BlockSpec((tm, tk), lambda i, k: (i, k)),
            pl.BlockSpec((tk, N), lambda i, k: (k, 0)),
            pl.BlockSpec((1, N), lambda i, k: (0, 0)),
            pl.BlockSpec((tm, N), lambda i, k: (i, 0)),
            pl.BlockSpec((1, N), lambda i, k: (0, 0)),
            pl.BlockSpec((1, N), lambda i, k: (0, 0)),
        ],
        out_specs=pl.BlockSpec((tm, N), lambda i, k: (i, 0)),
        scratch_shapes=[pltpu.VMEM((tm, N), jnp.float32)],
        compiler_params=pltpu.CompilerParams(
            dimension_semantics=("parallel", "arbitrary"),
            vmem_limit_bytes=VMEM_LIMIT_BYTES),
        cost_estimate=cost,
    )(x, w, b, res, gamma, beta)


# --------------------------- multi-head self-attention -----------------------

def _mha_kernel(qkv_ref, o_ref, *, n_heads, d_model, tq, scale):
    # qkv_ref: [S, 3D] block for one batch (fetched once per batch; the block
    # index is constant along the inner q-tile grid axis).
    # o_ref: [tq, D] lane-dense output block for this (batch, q-tile).
    hd = d_model // n_heads
    qi = pl.program_id(1)
    row0 = pl.multiple_of(qi * tq, tq)

    outs = []
    # TODO(synk): heads stay in a static loop because hd=64 lane slices are not
    # 128-aligned, which blocks a fori_loop / head-grid-axis variant; q-tiling
    # already bounds the live [tq, S] score tiles per head.
    for h in range(n_heads):
        q = qkv_ref[pl.ds(row0, tq), pl.ds(h * hd, hd)]                    # [tq, hd]
        k = qkv_ref[:, pl.ds(d_model + h * hd, hd)]                        # [S, hd]
        v = qkv_ref[:, pl.ds(2 * d_model + h * hd, hd)]                    # [S, hd]
        # contract on head_dim directly (no k.T relayout through the XLU)
        s = lax.dot_general(q, k, (((1,), (1,)), ((), ())),
                            preferred_element_type=jnp.float32) * scale    # [tq, S]
        s = s - jnp.max(s, axis=-1, keepdims=True)
        p = jnp.exp(s)
        inv = pl.reciprocal(jnp.sum(p, axis=-1, keepdims=True), approx=True)
        p = p * inv
        outs.append(jnp.dot(p.astype(v.dtype), v,
                            preferred_element_type=jnp.float32))           # [tq, hd]
    # single lane-dense [tq, D] store (unmasked vst path)
    o_ref[...] = jnp.concatenate(outs, axis=-1).astype(o_ref.dtype)


def mha(qkv, n_heads, seq_len, batch, d_model, tq=128):
    """Self-attention over the packed QKV buffer, no wrapper transposes.

    qkv: [S*B, 3D] bf16, seq-major rows.  Viewed (for free) as [S, B*3D]; each
    grid step picks one batch's contiguous (S, 3D) column block and one q-row
    tile, and writes a [tq, D] block of the [S, B*D] output view.
    Returns [S*B, D] (before out-projection).
    TODO(synk): for very long sequences switch to a KV-tiled online-softmax
    (flash) variant; here scores are bounded to [tq, S] per head.
    """
    M, threeD = qkv.shape
    assert threeD == 3 * d_model
    hd = d_model // n_heads
    qkv2 = qkv.reshape(seq_len, batch * threeD)          # free view (seq-major)
    tq = _pick_tile(seq_len, tq, 16)
    n_q = seq_len // tq

    cost = pl.CostEstimate(
        flops=4 * batch * seq_len * seq_len * d_model,
        transcendentals=batch * n_heads * seq_len * seq_len,
        bytes_accessed=(seq_len * batch * threeD * _itemsize(qkv.dtype)
                        + seq_len * batch * d_model * _itemsize(qkv.dtype)))

    out = pl.pallas_call(
        functools.partial(_mha_kernel, n_heads=n_heads, d_model=d_model,
                          tq=tq, scale=1.0 / math.sqrt(hd)),
        out_shape=jax.ShapeDtypeStruct((seq_len, batch * d_model), qkv.dtype),
        grid=(batch, n_q),
        in_specs=[
            # full (S, 3D) block of batch b; constant across the inner q axis
            pl.BlockSpec((seq_len, threeD), lambda b, qi: (0, b)),
        ],
        out_specs=pl.BlockSpec((tq, d_model), lambda b, qi: (qi, b)),
        compiler_params=pltpu.CompilerParams(
            dimension_semantics=("parallel", "parallel"),
            vmem_limit_bytes=VMEM_LIMIT_BYTES),
        cost_estimate=cost,
    )(qkv2)
    return out.reshape(seq_len * batch, d_model)          # free view


# --------------------------- Encoder layer forward ---------------------------

def transformer_encoder_layer(src, params, n_heads):
    """src: [S, B, D] float32 (seq-first, like nn.TransformerEncoderLayer)."""
    S, B, D = src.shape
    assert D % n_heads == 0
    assert D % 128 == 0, "d_model must be a multiple of 128 (lane tiling)"
    assert S % 8 == 0, "seq_len must be a multiple of 8"  # TODO(synk): pad path

    bf16 = jnp.bfloat16
    # seq-major flattened tokens: a FREE view of [S, B, D] (no transpose)
    x = src.reshape(S * B, D).astype(bf16)

    w_in, w_out = params["w_in"].astype(bf16), params["w_out"].astype(bf16)
    w1, w2 = params["w1"].astype(bf16), params["w2"].astype(bf16)

    # --- Multi-head self-attention ---
    # TODO(synk): the QKV projection could be fused into the MHA kernel to avoid
    # the [S*B, 3D] HBM round trip.
    qkv = linear(x, w_in, params["b_in"])                              # bf16 [S*B, 3D]
    attn = mha(qkv, n_heads, S, B, D)                                  # bf16 [S*B, D]
    # out-projection fused with (residual + LayerNorm1); dropout1 = identity
    h = linear_residual_layernorm(attn, w_out, params["b_out"],
                                  x, params["ln1_g"], params["ln1_b"],
                                  out_dtype=bf16)

    # --- Feed-forward ---
    ff = linear(h, w1, params["b1"], act="relu")                       # bf16 [S*B, FF]
    # FFN2 fused with (residual + LayerNorm2); dropouts = identity
    out = linear_residual_layernorm(ff, w2, params["b2"],
                                    h, params["ln2_g"], params["ln2_b"],
                                    out_dtype=jnp.float32)             # f32 [S*B, D]

    return out.reshape(S, B, D)                                        # free view


# ------------------------------ Reference (JAX) -------------------------------

def reference_encoder_layer(src, params, n_heads, eps=1e-5):
    S, B, D = src.shape
    H, hd = n_heads, D // n_heads
    x = src.reshape(S * B, D)

    qkv = x @ params["w_in"] + params["b_in"]
    qkv = qkv.reshape(S, B, 3 * D)
    q, k, v = jnp.split(qkv, 3, axis=-1)
    to_h = lambda t: t.reshape(S, B, H, hd).transpose(1, 2, 0, 3)
    qh, kh, vh = to_h(q), to_h(k), to_h(v)
    s = jnp.einsum("bhqd,bhkd->bhqk", qh, kh) / math.sqrt(hd)
    p = jax.nn.softmax(s, axis=-1)
    oh = jnp.einsum("bhqk,bhkd->bhqd", p, vh)
    attn = oh.transpose(2, 0, 1, 3).reshape(S * B, D)
    attn = attn @ params["w_out"] + params["b_out"]

    def ln(h, g, b):
        m = h.mean(-1, keepdims=True)
        c = h - m
        var = (c * c).mean(-1, keepdims=True)
        return c / jnp.sqrt(var + eps) * g + b

    h = ln(x + attn, params["ln1_g"], params["ln1_b"])
    ff = jnp.maximum(h @ params["w1"] + params["b1"], 0.0) @ params["w2"] + params["b2"]
    out = ln(h + ff, params["ln2_g"], params["ln2_b"])
    return out.reshape(S, B, D)


# ---------------------------------- Main --------------------------------------

if __name__ == "__main__":
    # Small shapes consistent with the module structure:
    # d_model % n_heads == 0, head_dim = 64 like the spec (2304 / 36).
    S, B, D, H, FF = 16, 2, 256, 4, 512
    dtype = jnp.float32

    key = jax.random.PRNGKey(0)
    ks = jax.random.split(key, 13)
    init = lambda k, shape, s=0.02: (s * jax.random.normal(k, shape)).astype(dtype)

    params = {
        # in-projection (q|k|v stacked along output), stored [K, N]: y = x @ w + b
        "w_in":  init(ks[0], (D, 3 * D)),
        "b_in":  init(ks[1], (1, 3 * D)),
        "w_out": init(ks[2], (D, D)),
        "b_out": init(ks[3], (1, D)),
        "w1":    init(ks[4], (D, FF)),
        "b1":    init(ks[5], (1, FF)),
        "w2":    init(ks[6], (FF, D)),
        "b2":    init(ks[7], (1, D)),
        "ln1_g": (1.0 + 0.05 * jax.random.normal(ks[8], (1, D))).astype(dtype),
        "ln1_b": init(ks[9], (1, D)),
        "ln2_g": (1.0 + 0.05 * jax.random.normal(ks[10], (1, D))).astype(dtype),
        "ln2_b": init(ks[11], (1, D)),
    }

    src = jax.random.normal(ks[12], (S, B, D)).astype(dtype)

    fwd = jax.jit(functools.partial(transformer_encoder_layer, n_heads=H))
    out = jax.block_until_ready(fwd(src, params))

    ref = reference_encoder_layer(src, params, n_heads=H)
    assert out.shape == (S, B, D)
    # bf16 MXU vs f32 reference -> ~1% numerical drift expected
    assert jnp.allclose(out, ref, rtol=3e-2, atol=3e-2), "mismatch vs JAX reference"

    print("KERNEL_OK")
</pallas_src>

<mosaic_0001>
module attributes {stable_mosaic.version = 11 : i64} {
  func.func @_linear_kernel(%arg0: i32, %arg1: i32, %arg2: i32, %arg3: memref<32x256xbf16, #tpu.memory_space<vmem>>, %arg4: memref<256x256xbf16, #tpu.memory_space<vmem>>, %arg5: memref<1x256xf32, #tpu.memory_space<vmem>>, %arg6: memref<32x256xbf16, #tpu.memory_space<vmem>>, %arg7: memref<32x256xf32, #tpu.memory_space<vmem>>) attributes {dimension_semantics = [#tpu.dimension_semantics<parallel>, #tpu.dimension_semantics<parallel>, #tpu.dimension_semantics<arbitrary>], iteration_bounds = array<i64: 1, 3, 1>, scalar_prefetch = 0 : i64, scratch_operands = 1 : i64, tpu.core_type = #tpu.core_type<tc>, window_params = [{transform_indices = @transform_0, window_bounds = array<i64: 32, 256>}, {transform_indices = @transform_1, window_bounds = array<i64: 256, 256>}, {transform_indices = @transform_2, window_bounds = array<i64: 1, 256>}, {transform_indices = @transform_3, window_bounds = array<i64: 32, 256>}]} {
    %c0_i32 = arith.constant 0 : i32
    %0 = arith.cmpi eq, %arg2, %c0_i32 : i32
    %1 = arith.extui %0 : i1 to i32
    %c0_i32_0 = arith.constant 0 : i32
    %2 = arith.cmpi ne, %1, %c0_i32_0 : i32
    scf.if %2 {
      %cst_10 = arith.constant 0.000000e+00 : f32
      %12 = vector.broadcast %cst_10 : f32 to vector<32x256xf32>
      %c0_11 = arith.constant 0 : index
      %c0_12 = arith.constant 0 : index
      %13 = vector.load %arg7[%c0_11, %c0_12] : memref<32x256xf32, #tpu.memory_space<vmem>>, vector<32x256xf32>
      tpu.vector_store %arg7[%c0_11, %c0_12], %12 {strides = array<i32>} : memref<32x256xf32, #tpu.memory_space<vmem>>, vector<32x256xf32>,
    } else {
    }
    %c0 = arith.constant 0 : index
    %c0_1 = arith.constant 0 : index
    %3 = vector.load %arg7[%c0, %c0_1] : memref<32x256xf32, #tpu.memory_space<vmem>>, vector<32x256xf32>
    %c0_2 = arith.constant 0 : index
    %c0_3 = arith.constant 0 : index
    %4 = vector.load %arg3[%c0_2, %c0_3] : memref<32x256xbf16, #tpu.memory_space<vmem>>, vector<32x256xbf16>
    %c0_4 = arith.constant 0 : index
    %c0_5 = arith.constant 0 : index
    %5 = vector.load %arg4[%c0_4, %c0_5] : memref<256x256xbf16, #tpu.memory_space<vmem>>, vector<256x256xbf16>
    %cst = arith.constant dense<0.000000e+00> : vector<32x256xf32>
    %6 = tpu.matmul %4, %5, %cst {dimension_numbers = #tpu.dot_dimension_numbers<[1], [0], [0], [1], [0, 0, 1, 1], [], []>} : vector<32x256xbf16>, vector<256x256xbf16>, vector<32x256xf32> -> vector<32x256xf32>
    %7 = arith.addf %3, %6 : vector<32x256xf32>
    %c0_6 = arith.constant 0 : index
    %c0_7 = arith.constant 0 : index
    %8 = vector.load %arg7[%c0_6, %c0_7] : memref<32x256xf32, #tpu.memory_space<vmem>>, vector<32x256xf32>
    tpu.vector_store %arg7[%c0_6, %c0_7], %7 {strides = array<i32>} : memref<32x256xf32, #tpu.memory_space<vmem>>, vector<32x256xf32>,
    %c0_i32_8 = arith.constant 0 : i32
    %9 = arith.cmpi eq, %arg2, %c0_i32_8 : i32
    %10 = arith.extui %9 : i1 to i32
    %c0_i32_9 = arith.constant 0 : i32
    %11 = arith.cmpi ne, %10, %c0_i32_9 : i32
    scf.if %11 {
      %c0_10 = arith.constant 0 : index
      %c0_11 = arith.constant 0 : index
      %12 = vector.load %arg7[%c0_10, %c0_11] : memref<32x256xf32, #tpu.memory_space<vmem>>, vector<32x256xf32>
      %c0_12 = arith.constant 0 : index
      %c0_13 = arith.constant 0 : index
      %13 = vector.load %arg5[%c0_12, %c0_13] : memref<1x256xf32, #tpu.memory_space<vmem>>, vector<1x256xf32>
      %14 = vector.broadcast %13 : vector<1x256xf32> to vector<32x256xf32>
      %15 = arith.addf %12, %14 : vector<32x256xf32>
      %16 = arith.truncf %15 : vector<32x256xf32> to vector<32x256xbf16>
      %c0_14 = arith.constant 0 : index
      %c0_15 = arith.constant 0 : index
      %17 = vector.load %arg6[%c0_14, %c0_15] : memref<32x256xbf16, #tpu.memory_space<vmem>>, vector<32x256xbf16>
      tpu.vector_store %arg6[%c0_14, %c0_15], %16 {strides = array<i32>} : memref<32x256xbf16, #tpu.memory_space<vmem>>, vector<32x256xbf16>,
    } else {
    }
    return
  }
  func.func @transform_0(%arg0: i32, %arg1: i32, %arg2: i32) -> (i32, i32) {
    %c0_i32 = arith.constant 0 : i32
    return %arg0, %arg2 : i32, i32
  }
  func.func @transform_1(%arg0: i32, %arg1: i32, %arg2: i32) -> (i32, i32) {
    %c0_i32 = arith.constant 0 : i32
    return %arg2, %arg1 : i32, i32
  }
  func.func @transform_2(%arg0: i32, %arg1: i32, %arg2: i32) -> (i32, i32) {
    %c0_i32 = arith.constant 0 : i32
    %c0_i32_0 = arith.constant 0 : i32
    return %c0_i32, %arg1 : i32, i32
  }
  func.func @transform_3(%arg0: i32, %arg1: i32, %arg2: i32) -> (i32, i32) {
    %c0_i32 = arith.constant 0 : i32
    return %arg0, %arg1 : i32, i32
  }
}

module attributes {stable_mosaic.version = 11 : i64} {
  func.func @_mha_kernel(%arg0: i32, %arg1: i32, %arg2: memref<16x768xbf16, #tpu.memory_space<vmem>>, %arg3: memref<16x256xbf16, #tpu.memory_space<vmem>>) attributes {dimension_semantics = [#tpu.dimension_semantics<parallel>, #tpu.dimension_semantics<parallel>], iteration_bounds = array<i64: 2, 1>, scalar_prefetch = 0 : i64, scratch_operands = 0 : i64, tpu.core_type = #tpu.core_type<tc>, window_params = [{transform_indices = @transform_0, window_bounds = array<i64: 16, 768>}, {transform_indices = @transform_1, window_bounds = array<i64: 16, 256>}]} {
    %c16_i32 = arith.constant 16 : i32
    %0 = arith.muli %arg1, %c16_i32 : i32
    %1 = tpu.assume_multiple %0, 16 : i32
    %2 = arith.index_cast %1 : i32 to index
    %c0 = arith.constant 0 : index
    %3 = vector.load %arg2[%2, %c0] : memref<16x768xbf16, #tpu.memory_space<vmem>>, vector<16x64xbf16>
    %c0_0 = arith.constant 0 : index
    %c256 = arith.constant 256 : index
    %4 = vector.load %arg2[%c0_0, %c256] : memref<16x768xbf16, #tpu.memory_space<vmem>>, vector<16x64xbf16>
    %c0_1 = arith.constant 0 : index
    %c512 = arith.constant 512 : index
    %5 = vector.load %arg2[%c0_1, %c512] : memref<16x768xbf16, #tpu.memory_space<vmem>>, vector<16x64xbf16>
    %cst = arith.constant dense<0.000000e+00> : vector<16x16xf32>
    %6 = tpu.matmul %3, %4, %cst {dimension_numbers = #tpu.dot_dimension_numbers<[1], [1], [0], [0], [0, 0, 1, 0], [], []>} : vector<16x64xbf16>, vector<16x64xbf16>, vector<16x16xf32> -> vector<16x16xf32>
    %cst_2 = arith.constant 1.250000e-01 : f32
    %7 = vector.broadcast %cst_2 : f32 to vector<16x16xf32>
    %8 = arith.mulf %6, %7 : vector<16x16xf32>
    %cst_3 = arith.constant dense<0xFF800000> : vector<16xf32>
    %9 = vector.multi_reduction <maximumf>, %8, %cst_3 [1] : vector<16x16xf32> to vector<16xf32>
    %10 = vector.shape_cast %9 : vector<16xf32> to vector<16x1xf32>
    %11 = vector.broadcast %10 : vector<16x1xf32> to vector<16x16xf32>
    %12 = arith.subf %8, %11 : vector<16x16xf32>
    %13 = math.exp %12 : vector<16x16xf32>
    %cst_4 = arith.constant dense<0.000000e+00> : vector<16xf32>
    %14 = vector.multi_reduction <add>, %13, %cst_4 [1] : vector<16x16xf32> to vector<16xf32>
    %15 = vector.shape_cast %14 : vector<16xf32> to vector<16x1xf32>
    %16 = tpu.reciprocal %15 {approx = true} : vector<16x1xf32> -> vector<16x1xf32>
    %17 = vector.broadcast %16 : vector<16x1xf32> to vector<16x16xf32>
    %18 = arith.mulf %13, %17 : vector<16x16xf32>
    %19 = arith.truncf %18 : vector<16x16xf32> to vector<16x16xbf16>
    %cst_5 = arith.constant dense<0.000000e+00> : vector<16x64xf32>
    %20 = tpu.matmul %19, %5, %cst_5 {dimension_numbers = #tpu.dot_dimension_numbers<[1], [0], [0], [1], [0, 0, 1, 1], [], []>} : vector<16x16xbf16>, vector<16x64xbf16>, vector<16x64xf32> -> vector<16x64xf32>
    %21 = arith.index_cast %1 : i32 to index
    %c64 = arith.constant 64 : index
    %22 = vector.load %arg2[%21, %c64] : memref<16x768xbf16, #tpu.memory_space<vmem>>, vector<16x64xbf16>
    %c0_6 = arith.constant 0 : index
    %c320 = arith.constant 320 : index
    %23 = vector.load %arg2[%c0_6, %c320] : memref<16x768xbf16, #tpu.memory_space<vmem>>, vector<16x64xbf16>
    %c0_7 = arith.constant 0 : index
    %c576 = arith.constant 576 : index
    %24 = vector.load %arg2[%c0_7, %c576] : memref<16x768xbf16, #tpu.memory_space<vmem>>, vector<16x64xbf16>
    %cst_8 = arith.constant dense<0.000000e+00> : vector<16x16xf32>
    %25 = tpu.matmul %22, %23, %cst_8 {dimension_numbers = #tpu.dot_dimension_numbers<[1], [1], [0], [0], [0, 0, 1, 0], [], []>} : vector<16x64xbf16>, vector<16x64xbf16>, vector<16x16xf32> -> vector<16x16xf32>
    %cst_9 = arith.constant 1.250000e-01 : f32
    %26 = vector.broadcast %cst_9 : f32 to vector<16x16xf32>
    %27 = arith.mulf %25, %26 : vector<16x16xf32>
    %cst_10 = arith.constant dense<0xFF800000> : vector<16xf32>
    %28 = vector.multi_reduction <maximumf>, %27, %cst_10 [1] : vector<16x16xf32> to vector<16xf32>
    %29 = vector.shape_cast %28 : vector<16xf32> to vector<16x1xf32>
    %30 = vector.broadcast %29 : vector<16x1xf32> to vector<16x16xf32>
    %31 = arith.subf %27, %30 : vector<16x16xf32>
    %32 = math.exp %31 : vector<16x16xf32>
    %cst_11 = arith.constant dense<0.000000e+00> : vector<16xf32>
    %33 = vector.multi_reduction <add>, %32, %cst_11 [1] : vector<16x16xf32> to vector<16xf32>
    %34 = vector.shape_cast %33 : vector<16xf32> to vector<16x1xf32>
    %35 = tpu.reciprocal %34 {approx = true} : vector<16x1xf32> -> vector<16x1xf32>
    %36 = vector.broadcast %35 : vector<16x1xf32> to vector<16x16xf32>
    %37 = arith.mulf %32, %36 : vector<16x16xf32>
    %38 = arith.truncf %37 : vector<16x16xf32> to vector<16x16xbf16>
    %cst_12 = arith.constant dense<0.000000e+00> : vector<16x64xf32>
    %39 = tpu.matmul %38, %24, %cst_12 {dimension_numbers = #tpu.dot_dimension_numbers<[1], [0], [0], [1], [0, 0, 1, 1], [], []>} : vector<16x16xbf16>, vector<16x64xbf16>, vector<16x64xf32> -> vector<16x64xf32>
    %40 = arith.index_cast %1 : i32 to index
    %c128 = arith.constant 128 : index
    %41 = vector.load %arg2[%40, %c128] : memref<16x768xbf16, #tpu.memory_space<vmem>>, vector<16x64xbf16>
    %c0_13 = arith.constant 0 : index
    %c384 = arith.constant 384 : index
    %42 = vector.load %arg2[%c0_13, %c384] : memref<16x768xbf16, #tpu.memory_space<vmem>>, vector<16x64xbf16>
    %c0_14 = arith.constant 0 : index
    %c640 = arith.constant 640 : index
    %43 = vector.load %arg2[%c0_14, %c640] : memref<16x768xbf16, #tpu.memory_space<vmem>>, vector<16x64xbf16>
    %cst_15 = arith.constant dense<0.000000e+00> : vector<16x16xf32>
    %44 = tpu.matmul %41, %42, %cst_15 {dimension_numbers = #tpu.dot_dimension_numbers<[1], [1], [0], [0], [0, 0, 1, 0], [], []>} : vector<16x64xbf16>, vector<16x64xbf16>, vector<16x16xf32> -> vector<16x16xf32>
    %cst_16 = arith.constant 1.250000e-01 : f32
    %45 = vector.broadcast %cst_16 : f32 to vector<16x16xf32>
    %46 = arith.mulf %44, %45 : vector<16x16xf32>
    %cst_17 = arith.constant dense<0xFF800000> : vector<16xf32>
    %47 = vector.multi_reduction <maximumf>, %46, %cst_17 [1] : vector<16x16xf32> to vector<16xf32>
    %48 = vector.shape_cast %47 : vector<16xf32> to vector<16x1xf32>
    %49 = vector.broadcast %48 : vector<16x1xf32> to vector<16x16xf32>
    %50 = arith.subf %46, %49 : vector<16x16xf32>
    %51 = math.exp %50 : vector<16x16xf32>
    %cst_18 = arith.constant dense<0.000000e+00> : vector<16xf32>
    %52 = vector.multi_reduction <add>, %51, %cst_18 [1] : vector<16x16xf32> to vector<16xf32>
    %53 = vector.shape_cast %52 : vector<16xf32> to vector<16x1xf32>
    %54 = tpu.reciprocal %53 {approx = true} : vector<16x1xf32> -> vector<16x1xf32>
    %55 = vector.broadcast %54 : vector<16x1xf32> to vector<16x16xf32>
    %56 = arith.mulf %51, %55 : vector<16x16xf32>
    %57 = arith.truncf %56 : vector<16x16xf32> to vector<16x16xbf16>
    %cst_19 = arith.constant dense<0.000000e+00> : vector<16x64xf32>
    %58 = tpu.matmul %57, %43, %cst_19 {dimension_numbers = #tpu.dot_dimension_numbers<[1], [0], [0], [1], [0, 0, 1, 1], [], []>} : vector<16x16xbf16>, vector<16x64xbf16>, vector<16x64xf32> -> vector<16x64xf32>
    %59 = arith.index_cast %1 : i32 to index
    %c192 = arith.constant 192 : index
    %60 = vector.load %arg2[%59, %c192] : memref<16x768xbf16, #tpu.memory_space<vmem>>, vector<16x64xbf16>
    %c0_20 = arith.constant 0 : index
    %c448 = arith.constant 448 : index
    %61 = vector.load %arg2[%c0_20, %c448] : memref<16x768xbf16, #tpu.memory_space<vmem>>, vector<16x64xbf16>
    %c0_21 = arith.constant 0 : index
    %c704 = arith.constant 704 : index
    %62 = vector.load %arg2[%c0_21, %c704] : memref<16x768xbf16, #tpu.memory_space<vmem>>, vector<16x64xbf16>
    %cst_22 = arith.constant dense<0.000000e+00> : vector<16x16xf32>
    %63 = tpu.matmul %60, %61, %cst_22 {dimension_numbers = #tpu.dot_dimension_numbers<[1], [1], [0], [0], [0, 0, 1, 0], [], []>} : vector<16x64xbf16>, vector<16x64xbf16>, vector<16x16xf32> -> vector<16x16xf32>
    %cst_23 = arith.constant 1.250000e-01 : f32
    %64 = vector.broadcast %cst_23 : f32 to vector<16x16xf32>
    %65 = arith.mulf %63, %64 : vector<16x16xf32>
    %cst_24 = arith.constant dense<0xFF800000> : vector<16xf32>
    %66 = vector.multi_reduction <maximumf>, %65, %cst_24 [1] : vector<16x16xf32> to vector<16xf32>
    %67 = vector.shape_cast %66 : vector<16xf32> to vector<16x1xf32>
    %68 = vector.broadcast %67 : vector<16x1xf32> to vector<16x16xf32>
    %69 = arith.subf %65, %68 : vector<16x16xf32>
    %70 = math.exp %69 : vector<16x16xf32>
    %cst_25 = arith.constant dense<0.000000e+00> : vector<16xf32>
    %71 = vector.multi_reduction <add>, %70, %cst_25 [1] : vector<16x16xf32> to vector<16xf32>
    %72 = vector.shape_cast %71 : vector<16xf32> to vector<16x1xf32>
    %73 = tpu.reciprocal %72 {approx = true} : vector<16x1xf32> -> vector<16x1xf32>
    %74 = vector.broadcast %73 : vector<16x1xf32> to vector<16x16xf32>
    %75 = arith.mulf %70, %74 : vector<16x16xf32>
    %76 = arith.truncf %75 : vector<16x16xf32> to vector<16x16xbf16>
    %cst_26 = arith.constant dense<0.000000e+00> : vector<16x64xf32>
    %77 = tpu.matmul %76, %62, %cst_26 {dimension_numbers = #tpu.dot_dimension_numbers<[1], [0], [0], [1], [0, 0, 1, 1], [], []>} : vector<16x16xbf16>, vector<16x64xbf16>, vector<16x64xf32> -> vector<16x64xf32>
    %78 = tpu.concatenate %20, %39, %58, %77 in 1 : vector<16x64xf32>, vector<16x64xf32>, vector<16x64xf32>, vector<16x64xf32> -> vector<16x256xf32>
    %79 = arith.truncf %78 : vector<16x256xf32> to vector<16x256xbf16>
    %c0_27 = arith.constant 0 : index
    %c0_28 = arith.constant 0 : index
    %80 = vector.load %arg3[%c0_27, %c0_28] : memref<16x256xbf16, #tpu.memory_space<vmem>>, vector<16x256xbf16>
    tpu.vector_store %arg3[%c0_27, %c0_28], %79 {strides = array<i32>} : memref<16x256xbf16, #tpu.memory_space<vmem>>, vector<16x256xbf16>,
    return
  }
  func.func @transform_0(%arg0: i32, %arg1: i32) -> (i32, i32) {
    %c0_i32 = arith.constant 0 : i32
    %c0_i32_0 = arith.constant 0 : i32
    return %c0_i32, %arg0 : i32, i32
  }
  func.func @transform_1(%arg0: i32, %arg1: i32) -> (i32, i32) {
    %c0_i32 = arith.constant 0 : i32
    return %arg1, %arg0 : i32, i32
  }
}

module attributes {stable_mosaic.version = 11 : i64} {
  func.func @_linear_res_ln_kernel(%arg0: i32, %arg1: i32, %arg2: memref<32x256xbf16, #tpu.memory_space<vmem>>, %arg3: memref<256x256xbf16, #tpu.memory_space<vmem>>, %arg4: memref<1x256xf32, #tpu.memory_space<vmem>>, %arg5: memref<32x256xbf16, #tpu.memory_space<vmem>>, %arg6: memref<1x256xf32, #tpu.memory_space<vmem>>, %arg7: memref<1x256xf32, #tpu.memory_space<vmem>>, %arg8: memref<32x256xbf16, #tpu.memory_space<vmem>>, %arg9: memref<32x256xf32, #tpu.memory_space<vmem>>) attributes {dimension_semantics = [#tpu.dimension_semantics<parallel>, #tpu.dimension_semantics<arbitrary>], iteration_bounds = array<i64: 1, 1>, scalar_prefetch = 0 : i64, scratch_operands = 1 : i64, tpu.core_type = #tpu.core_type<tc>, window_params = [{transform_indices = @transform_0, window_bounds = array<i64: 32, 256>}, {transform_indices = @transform_1, window_bounds = array<i64: 256, 256>}, {pipeline_mode = #tpu.pipeline_mode<synchronous>, transform_indices = @transform_2, window_bounds = array<i64: 1, 256>}, {transform_indices = @transform_3, window_bounds = array<i64: 32, 256>}, {pipeline_mode = #tpu.pipeline_mode<synchronous>, transform_indices = @transform_4, window_bounds = array<i64: 1, 256>}, {pipeline_mode = #tpu.pipeline_mode<synchronous>, transform_indices = @transform_5, window_bounds = array<i64: 1, 256>}, {transform_indices = @transform_6, window_bounds = array<i64: 32, 256>}]} {
    %c0_i32 = arith.constant 0 : i32
    %0 = arith.cmpi eq, %arg1, %c0_i32 : i32
    %1 = arith.extui %0 : i1 to i32
    %c0_i32_0 = arith.constant 0 : i32
    %2 = arith.cmpi ne, %1, %c0_i32_0 : i32
    scf.if %2 {
      %cst_10 = arith.constant 0.000000e+00 : f32
      %12 = vector.broadcast %cst_10 : f32 to vector<32x256xf32>
      %c0_11 = arith.constant 0 : index
      %c0_12 = arith.constant 0 : index
      %13 = vector.load %arg9[%c0_11, %c0_12] : memref<32x256xf32, #tpu.memory_space<vmem>>, vector<32x256xf32>
      tpu.vector_store %arg9[%c0_11, %c0_12], %12 {strides = array<i32>} : memref<32x256xf32, #tpu.memory_space<vmem>>, vector<32x256xf32>,
    } else {
    }
    %c0 = arith.constant 0 : index
    %c0_1 = arith.constant 0 : index
    %3 = vector.load %arg9[%c0, %c0_1] : memref<32x256xf32, #tpu.memory_space<vmem>>, vector<32x256xf32>
    %c0_2 = arith.constant 0 : index
    %c0_3 = arith.constant 0 : index
    %4 = vector.load %arg2[%c0_2, %c0_3] : memref<32x256xbf16, #tpu.memory_space<vmem>>, vector<32x256xbf16>
    %c0_4 = arith.constant 0 : index
    %c0_5 = arith.constant 0 : index
    %5 = vector.load %arg3[%c0_4, %c0_5] : memref<256x256xbf16, #tpu.memory_space<vmem>>, vector<256x256xbf16>
    %cst = arith.constant dense<0.000000e+00> : vector<32x256xf32>
    %6 = tpu.matmul %4, %5, %cst {dimension_numbers = #tpu.dot_dimension_numbers<[1], [0], [0], [1], [0, 0, 1, 1], [], []>} : vector<32x256xbf16>, vector<256x256xbf16>, vector<32x256xf32> -> vector<32x256xf32>
    %7 = arith.addf %3, %6 : vector<32x256xf32>
    %c0_6 = arith.constant 0 : index
    %c0_7 = arith.constant 0 : index
    %8 = vector.load %arg9[%c0_6, %c0_7] : memref<32x256xf32, #tpu.memory_space<vmem>>, vector<32x256xf32>
    tpu.vector_store %arg9[%c0_6, %c0_7], %7 {strides = array<i32>} : memref<32x256xf32, #tpu.memory_space<vmem>>, vector<32x256xf32>,
    %c0_i32_8 = arith.constant 0 : i32
    %9 = arith.cmpi eq, %arg1, %c0_i32_8 : i32
    %10 = arith.extui %9 : i1 to i32
    %c0_i32_9 = arith.constant 0 : i32
    %11 = arith.cmpi ne, %10, %c0_i32_9 : i32
    scf.if %11 {
      %c0_10 = arith.constant 0 : index
      %c0_11 = arith.constant 0 : index
      %12 = vector.load %arg9[%c0_10, %c0_11] : memref<32x256xf32, #tpu.memory_space<vmem>>, vector<32x256xf32>
      %c0_12 = arith.constant 0 : index
      %c0_13 = arith.constant 0 : index
      %13 = vector.load %arg4[%c0_12, %c0_13] : memref<1x256xf32, #tpu.memory_space<vmem>>, vector<1x256xf32>
      %14 = vector.broadcast %13 : vector<1x256xf32> to vector<32x256xf32>
      %15 = arith.addf %12, %14 : vector<32x256xf32>
      %c0_14 = arith.constant 0 : index
      %c0_15 = arith.constant 0 : index
      %16 = vector.load %arg5[%c0_14, %c0_15] : memref<32x256xbf16, #tpu.memory_space<vmem>>, vector<32x256xbf16>
      %17 = arith.extf %16 : vector<32x256xbf16> to vector<32x256xf32>
      %18 = arith.addf %15, %17 : vector<32x256xf32>
      %cst_16 = arith.constant dense<0.000000e+00> : vector<32xf32>
      %19 = vector.multi_reduction <add>, %18, %cst_16 [1] : vector<32x256xf32> to vector<32xf32>
      %20 = vector.shape_cast %19 : vector<32xf32> to vector<32x1xf32>
      %cst_17 = arith.constant 2.560000e+02 : f32
      %21 = vector.broadcast %cst_17 : f32 to vector<32x1xf32>
      %22 = arith.divf %20, %21 : vector<32x1xf32>
      %23 = vector.broadcast %22 : vector<32x1xf32> to vector<32x256xf32>
      %24 = arith.subf %18, %23 : vector<32x256xf32>
      %25 = arith.mulf %24, %24 : vector<32x256xf32>
      %cst_18 = arith.constant dense<0.000000e+00> : vector<32xf32>
      %26 = vector.multi_reduction <add>, %25, %cst_18 [1] : vector<32x256xf32> to vector<32xf32>
      %27 = vector.shape_cast %26 : vector<32xf32> to vector<32x1xf32>
      %cst_19 = arith.constant 2.560000e+02 : f32
      %28 = vector.broadcast %cst_19 : f32 to vector<32x1xf32>
      %29 = arith.divf %27, %28 : vector<32x1xf32>
      %cst_20 = arith.constant 9.99999974E-6 : f32
      %30 = vector.broadcast %cst_20 : f32 to vector<32x1xf32>
      %31 = arith.addf %29, %30 : vector<32x1xf32>
      %32 = math.rsqrt %31 : vector<32x1xf32>
      %33 = vector.broadcast %32 : vector<32x1xf32> to vector<32x256xf32>
      %34 = arith.mulf %24, %33 : vector<32x256xf32>
      %c0_21 = arith.constant 0 : index
      %c0_22 = arith.constant 0 : index
      %35 = vector.load %arg6[%c0_21, %c0_22] : memref<1x256xf32, #tpu.memory_space<vmem>>, vector<1x256xf32>
      %36 = vector.broadcast %35 : vector<1x256xf32> to vector<32x256xf32>
      %37 = arith.mulf %34, %36 : vector<32x256xf32>
      %c0_23 = arith.constant 0 : index
      %c0_24 = arith.constant 0 : index
      %38 = vector.load %arg7[%c0_23, %c0_24] : memref<1x256xf32, #tpu.memory_space<vmem>>, vector<1x256xf32>
      %39 = vector.broadcast %38 : vector<1x256xf32> to vector<32x256xf32>
      %40 = arith.addf %37, %39 : vector<32x256xf32>
      %41 = arith.truncf %40 : vector<32x256xf32> to vector<32x256xbf16>
      %c0_25 = arith.constant 0 : index
      %c0_26 = arith.constant 0 : index
      %42 = vector.load %arg8[%c0_25, %c0_26] : memref<32x256xbf16, #tpu.memory_space<vmem>>, vector<32x256xbf16>
      tpu.vector_store %arg8[%c0_25, %c0_26], %41 {strides = array<i32>} : memref<32x256xbf16, #tpu.memory_space<vmem>>, vector<32x256xbf16>,
    } else {
    }
    return
  }
  func.func @transform_0(%arg0: i32, %arg1: i32) -> (i32, i32) {
    %c0_i32 = arith.constant 0 : i32
    return %arg0, %arg1 : i32, i32
  }
  func.func @transform_1(%arg0: i32, %arg1: i32) -> (i32, i32) {
    %c0_i32 = arith.constant 0 : i32
    %c0_i32_0 = arith.constant 0 : i32
    return %arg1, %c0_i32 : i32, i32
  }
  func.func @transform_2(%arg0: i32, %arg1: i32) -> (i32, i32) {
    %c0_i32 = arith.constant 0 : i32
    %c0_i32_0 = arith.constant 0 : i32
    %c0_i32_1 = arith.constant 0 : i32
    return %c0_i32, %c0_i32_0 : i32, i32
  }
  func.func @transform_3(%arg0: i32, %arg1: i32) -> (i32, i32) {
    %c0_i32 = arith.constant 0 : i32
    %c0_i32_0 = arith.constant 0 : i32
    return %arg0, %c0_i32 : i32, i32
  }
  func.func @transform_4(%arg0: i32, %arg1: i32) -> (i32, i32) {
    %c0_i32 = arith.constant 0 : i32
    %c0_i32_0 = arith.constant 0 : i32
    %c0_i32_1 = arith.constant 0 : i32
    return %c0_i32, %c0_i32_0 : i32, i32
  }
  func.func @transform_5(%arg0: i32, %arg1: i32) -> (i32, i32) {
    %c0_i32 = arith.constant 0 : i32
    %c0_i32_0 = arith.constant 0 : i32
    %c0_i32_1 = arith.constant 0 : i32
    return %c0_i32, %c0_i32_0 : i32, i32
  }
  func.func @transform_6(%arg0: i32, %arg1: i32) -> (i32, i32) {
    %c0_i32 = arith.constant 0 : i32
    %c0_i32_0 = arith.constant 0 : i32
    return %arg0, %c0_i32 : i32, i32
  }
}

module attributes {stable_mosaic.version = 11 : i64} {
  func.func @_linear_kernel(%arg0: i32, %arg1: i32, %arg2: i32, %arg3: memref<32x256xbf16, #tpu.memory_space<vmem>>, %arg4: memref<256x256xbf16, #tpu.memory_space<vmem>>, %arg5: memref<1x256xf32, #tpu.memory_space<vmem>>, %arg6: memref<32x256xbf16, #tpu.memory_space<vmem>>, %arg7: memref<32x256xf32, #tpu.memory_space<vmem>>) attributes {dimension_semantics = [#tpu.dimension_semantics<parallel>, #tpu.dimension_semantics<parallel>, #tpu.dimension_semantics<arbitrary>], iteration_bounds = array<i64: 1, 2, 1>, scalar_prefetch = 0 : i64, scratch_operands = 1 : i64, tpu.core_type = #tpu.core_type<tc>, window_params = [{transform_indices = @transform_0, window_bounds = array<i64: 32, 256>}, {transform_indices = @transform_1, window_bounds = array<i64: 256, 256>}, {transform_indices = @transform_2, window_bounds = array<i64: 1, 256>}, {transform_indices = @transform_3, window_bounds = array<i64: 32, 256>}]} {
    %c0_i32 = arith.constant 0 : i32
    %0 = arith.cmpi eq, %arg2, %c0_i32 : i32
    %1 = arith.extui %0 : i1 to i32
    %c0_i32_0 = arith.constant 0 : i32
    %2 = arith.cmpi ne, %1, %c0_i32_0 : i32
    scf.if %2 {
      %cst_10 = arith.constant 0.000000e+00 : f32
      %12 = vector.broadcast %cst_10 : f32 to vector<32x256xf32>
      %c0_11 = arith.constant 0 : index
      %c0_12 = arith.constant 0 : index
      %13 = vector.load %arg7[%c0_11, %c0_12] : memref<32x256xf32, #tpu.memory_space<vmem>>, vector<32x256xf32>
      tpu.vector_store %arg7[%c0_11, %c0_12], %12 {strides = array<i32>} : memref<32x256xf32, #tpu.memory_space<vmem>>, vector<32x256xf32>,
    } else {
    }
    %c0 = arith.constant 0 : index
    %c0_1 = arith.constant 0 : index
    %3 = vector.load %arg7[%c0, %c0_1] : memref<32x256xf32, #tpu.memory_space<vmem>>, vector<32x256xf32>
    %c0_2 = arith.constant 0 : index
    %c0_3 = arith.constant 0 : index
    %4 = vector.load %arg3[%c0_2, %c0_3] : memref<32x256xbf16, #tpu.memory_space<vmem>>, vector<32x256xbf16>
    %c0_4 = arith.constant 0 : index
    %c0_5 = arith.constant 0 : index
    %5 = vector.load %arg4[%c0_4, %c0_5] : memref<256x256xbf16, #tpu.memory_space<vmem>>, vector<256x256xbf16>
    %cst = arith.constant dense<0.000000e+00> : vector<32x256xf32>
    %6 = tpu.matmul %4, %5, %cst {dimension_numbers = #tpu.dot_dimension_numbers<[1], [0], [0], [1], [0, 0, 1, 1], [], []>} : vector<32x256xbf16>, vector<256x256xbf16>, vector<32x256xf32> -> vector<32x256xf32>
    %7 = arith.addf %3, %6 : vector<32x256xf32>
    %c0_6 = arith.constant 0 : index
    %c0_7 = arith.constant 0 : index
    %8 = vector.load %arg7[%c0_6, %c0_7] : memref<32x256xf32, #tpu.memory_space<vmem>>, vector<32x256xf32>
    tpu.vector_store %arg7[%c0_6, %c0_7], %7 {strides = array<i32>} : memref<32x256xf32, #tpu.memory_space<vmem>>, vector<32x256xf32>,
    %c0_i32_8 = arith.constant 0 : i32
    %9 = arith.cmpi eq, %arg2, %c0_i32_8 : i32
    %10 = arith.extui %9 : i1 to i32
    %c0_i32_9 = arith.constant 0 : i32
    %11 = arith.cmpi ne, %10, %c0_i32_9 : i32
    scf.if %11 {
      %c0_10 = arith.constant 0 : index
      %c0_11 = arith.constant 0 : index
      %12 = vector.load %arg7[%c0_10, %c0_11] : memref<32x256xf32, #tpu.memory_space<vmem>>, vector<32x256xf32>
      %c0_12 = arith.constant 0 : index
      %c0_13 = arith.constant 0 : index
      %13 = vector.load %arg5[%c0_12, %c0_13] : memref<1x256xf32, #tpu.memory_space<vmem>>, vector<1x256xf32>
      %14 = vector.broadcast %13 : vector<1x256xf32> to vector<32x256xf32>
      %15 = arith.addf %12, %14 : vector<32x256xf32>
      %cst_14 = arith.constant 0.000000e+00 : f32
      %16 = vector.broadcast %cst_14 : f32 to vector<32x256xf32>
      %17 = arith.maximumf %15, %16 : vector<32x256xf32>
      %18 = arith.truncf %17 : vector<32x256xf32> to vector<32x256xbf16>
      %c0_15 = arith.constant 0 : index
      %c0_16 = arith.constant 0 : index
      %19 = vector.load %arg6[%c0_15, %c0_16] : memref<32x256xbf16, #tpu.memory_space<vmem>>, vector<32x256xbf16>
      tpu.vector_store %arg6[%c0_15, %c0_16], %18 {strides = array<i32>} : memref<32x256xbf16, #tpu.memory_space<vmem>>, vector<32x256xbf16>,
    } else {
    }
    return
  }
  func.func @transform_0(%arg0: i32, %arg1: i32, %arg2: i32) -> (i32, i32) {
    %c0_i32 = arith.constant 0 : i32
    return %arg0, %arg2 : i32, i32
  }
  func.func @transform_1(%arg0: i32, %arg1: i32, %arg2: i32) -> (i32, i32) {
    %c0_i32 = arith.constant 0 : i32
    return %arg2, %arg1 : i32, i32
  }
  func.func @transform_2(%arg0: i32, %arg1: i32, %arg2: i32) -> (i32, i32) {
    %c0_i32 = arith.constant 0 : i32
    %c0_i32_0 = arith.constant 0 : i32
    return %c0_i32, %arg1 : i32, i32
  }
  func.func @transform_3(%arg0: i32, %arg1: i32, %arg2: i32) -> (i32, i32) {
    %c0_i32 = arith.constant 0 : i32
    return %arg0, %arg1 : i32, i32
  }
}

module attributes {stable_mosaic.version = 11 : i64} {
  func.func @_linear_res_ln_kernel(%arg0: i32, %arg1: i32, %arg2: memref<32x256xbf16, #tpu.memory_space<vmem>>, %arg3: memref<256x256xbf16, #tpu.memory_space<vmem>>, %arg4: memref<1x256xf32, #tpu.memory_space<vmem>>, %arg5: memref<32x256xbf16, #tpu.memory_space<vmem>>, %arg6: memref<1x256xf32, #tpu.memory_space<vmem>>, %arg7: memref<1x256xf32, #tpu.memory_space<vmem>>, %arg8: memref<32x256xf32, #tpu.memory_space<vmem>>, %arg9: memref<32x256xf32, #tpu.memory_space<vmem>>) attributes {dimension_semantics = [#tpu.dimension_semantics<parallel>, #tpu.dimension_semantics<arbitrary>], iteration_bounds = array<i64: 1, 2>, scalar_prefetch = 0 : i64, scratch_operands = 1 : i64, tpu.core_type = #tpu.core_type<tc>, window_params = [{transform_indices = @transform_0, window_bounds = array<i64: 32, 256>}, {transform_indices = @transform_1, window_bounds = array<i64: 256, 256>}, {pipeline_mode = #tpu.pipeline_mode<synchronous>, transform_indices = @transform_2, window_bounds = array<i64: 1, 256>}, {transform_indices = @transform_3, window_bounds = array<i64: 32, 256>}, {pipeline_mode = #tpu.pipeline_mode<synchronous>, transform_indices = @transform_4, window_bounds = array<i64: 1, 256>}, {pipeline_mode = #tpu.pipeline_mode<synchronous>, transform_indices = @transform_5, window_bounds = array<i64: 1, 256>}, {transform_indices = @transform_6, window_bounds = array<i64: 32, 256>}]} {
    %c0_i32 = arith.constant 0 : i32
    %0 = arith.cmpi eq, %arg1, %c0_i32 : i32
    %1 = arith.extui %0 : i1 to i32
    %c0_i32_0 = arith.constant 0 : i32
    %2 = arith.cmpi ne, %1, %c0_i32_0 : i32
    scf.if %2 {
      %cst_9 = arith.constant 0.000000e+00 : f32
      %12 = vector.broadcast %cst_9 : f32 to vector<32x256xf32>
      %c0_10 = arith.constant 0 : index
      %c0_11 = arith.constant 0 : index
      %13 = vector.load %arg9[%c0_10, %c0_11] : memref<32x256xf32, #tpu.memory_space<vmem>>, vector<32x256xf32>
      tpu.vector_store %arg9[%c0_10, %c0_11], %12 {strides = array<i32>} : memref<32x256xf32, #tpu.memory_space<vmem>>, vector<32x256xf32>,
    } else {
    }
    %c0 = arith.constant 0 : index
    %c0_1 = arith.constant 0 : index
    %3 = vector.load %arg9[%c0, %c0_1] : memref<32x256xf32, #tpu.memory_space<vmem>>, vector<32x256xf32>
    %c0_2 = arith.constant 0 : index
    %c0_3 = arith.constant 0 : index
    %4 = vector.load %arg2[%c0_2, %c0_3] : memref<32x256xbf16, #tpu.memory_space<vmem>>, vector<32x256xbf16>
    %c0_4 = arith.constant 0 : index
    %c0_5 = arith.constant 0 : index
    %5 = vector.load %arg3[%c0_4, %c0_5] : memref<256x256xbf16, #tpu.memory_space<vmem>>, vector<256x256xbf16>
    %cst = arith.constant dense<0.000000e+00> : vector<32x256xf32>
    %6 = tpu.matmul %4, %5, %cst {dimension_numbers = #tpu.dot_dimension_numbers<[1], [0], [0], [1], [0, 0, 1, 1], [], []>} : vector<32x256xbf16>, vector<256x256xbf16>, vector<32x256xf32> -> vector<32x256xf32>
    %7 = arith.addf %3, %6 : vector<32x256xf32>
    %c0_6 = arith.constant 0 : index
    %c0_7 = arith.constant 0 : index
    %8 = vector.load %arg9[%c0_6, %c0_7] : memref<32x256xf32, #tpu.memory_space<vmem>>, vector<32x256xf32>
    tpu.vector_store %arg9[%c0_6, %c0_7], %7 {strides = array<i32>} : memref<32x256xf32, #tpu.memory_space<vmem>>, vector<32x256xf32>,
    %c1_i32 = arith.constant 1 : i32
    %9 = arith.cmpi eq, %arg1, %c1_i32 : i32
    %10 = arith.extui %9 : i1 to i32
    %c0_i32_8 = arith.constant 0 : i32
    %11 = arith.cmpi ne, %10, %c0_i32_8 : i32
    scf.if %11 {
      %c0_9 = arith.constant 0 : index
      %c0_10 = arith.constant 0 : index
      %12 = vector.load %arg9[%c0_9, %c0_10] : memref<32x256xf32, #tpu.memory_space<vmem>>, vector<32x256xf32>
      %c0_11 = arith.constant 0 : index
      %c0_12 = arith.constant 0 : index
      %13 = vector.load %arg4[%c0_11, %c0_12] : memref<1x256xf32, #tpu.memory_space<vmem>>, vector<1x256xf32>
      %14 = vector.broadcast %13 : vector<1x256xf32> to vector<32x256xf32>
      %15 = arith.addf %12, %14 : vector<32x256xf32>
      %c0_13 = arith.constant 0 : index
      %c0_14 = arith.constant 0 : index
      %16 = vector.load %arg5[%c0_13, %c0_14] : memref<32x256xbf16, #tpu.memory_space<vmem>>, vector<32x256xbf16>
      %17 = arith.extf %16 : vector<32x256xbf16> to vector<32x256xf32>
      %18 = arith.addf %15, %17 : vector<32x256xf32>
      %cst_15 = arith.constant dense<0.000000e+00> : vector<32xf32>
      %19 = vector.multi_reduction <add>, %18, %cst_15 [1] : vector<32x256xf32> to vector<32xf32>
      %20 = vector.shape_cast %19 : vector<32xf32> to vector<32x1xf32>
      %cst_16 = arith.constant 2.560000e+02 : f32
      %21 = vector.broadcast %cst_16 : f32 to vector<32x1xf32>
      %22 = arith.divf %20, %21 : vector<32x1xf32>
      %23 = vector.broadcast %22 : vector<32x1xf32> to vector<32x256xf32>
      %24 = arith.subf %18, %23 : vector<32x256xf32>
      %25 = arith.mulf %24, %24 : vector<32x256xf32>
      %cst_17 = arith.constant dense<0.000000e+00> : vector<32xf32>
      %26 = vector.multi_reduction <add>, %25, %cst_17 [1] : vector<32x256xf32> to vector<32xf32>
      %27 = vector.shape_cast %26 : vector<32xf32> to vector<32x1xf32>
      %cst_18 = arith.constant 2.560000e+02 : f32
      %28 = vector.broadcast %cst_18 : f32 to vector<32x1xf32>
      %29 = arith.divf %27, %28 : vector<32x1xf32>
      %cst_19 = arith.constant 9.99999974E-6 : f32
      %30 = vector.broadcast %cst_19 : f32 to vector<32x1xf32>
      %31 = arith.addf %29, %30 : vector<32x1xf32>
      %32 = math.rsqrt %31 : vector<32x1xf32>
      %33 = vector.broadcast %32 : vector<32x1xf32> to vector<32x256xf32>
      %34 = arith.mulf %24, %33 : vector<32x256xf32>
      %c0_20 = arith.constant 0 : index
      %c0_21 = arith.constant 0 : index
      %35 = vector.load %arg6[%c0_20, %c0_21] : memref<1x256xf32, #tpu.memory_space<vmem>>, vector<1x256xf32>
      %36 = vector.broadcast %35 : vector<1x256xf32> to vector<32x256xf32>
      %37 = arith.mulf %34, %36 : vector<32x256xf32>
      %c0_22 = arith.constant 0 : index
      %c0_23 = arith.constant 0 : index
      %38 = vector.load %arg7[%c0_22, %c0_23] : memref<1x256xf32, #tpu.memory_space<vmem>>, vector<1x256xf32>
      %39 = vector.broadcast %38 : vector<1x256xf32> to vector<32x256xf32>
      %40 = arith.addf %37, %39 : vector<32x256xf32>
      %c0_24 = arith.constant 0 : index
      %c0_25 = arith.constant 0 : index
      %41 = vector.load %arg8[%c0_24, %c0_25] : memref<32x256xf32, #tpu.memory_space<vmem>>, vector<32x256xf32>
      tpu.vector_store %arg8[%c0_24, %c0_25], %40 {strides = array<i32>} : memref<32x256xf32, #tpu.memory_space<vmem>>, vector<32x256xf32>,
    } else {
    }
    return
  }
  func.func @transform_0(%arg0: i32, %arg1: i32) -> (i32, i32) {
    %c0_i32 = arith.constant 0 : i32
    return %arg0, %arg1 : i32, i32
  }
  func.func @transform_1(%arg0: i32, %arg1: i32) -> (i32, i32) {
    %c0_i32 = arith.constant 0 : i32
    %c0_i32_0 = arith.constant 0 : i32
    return %arg1, %c0_i32 : i32, i32
  }
  func.func @transform_2(%arg0: i32, %arg1: i32) -> (i32, i32) {
    %c0_i32 = arith.constant 0 : i32
    %c0_i32_0 = arith.constant 0 : i32
    %c0_i32_1 = arith.constant 0 : i32
    return %c0_i32, %c0_i32_0 : i32, i32
  }
  func.func @transform_3(%arg0: i32, %arg1: i32) -> (i32, i32) {
    %c0_i32 = arith.constant 0 : i32
    %c0_i32_0 = arith.constant 0 : i32
    return %arg0, %c0_i32 : i32, i32
  }
  func.func @transform_4(%arg0: i32, %arg1: i32) -> (i32, i32) {
    %c0_i32 = arith.constant 0 : i32
    %c0_i32_0 = arith.constant 0 : i32
    %c0_i32_1 = arith.constant 0 : i32
    return %c0_i32, %c0_i32_0 : i32, i32
  }
  func.func @transform_5(%arg0: i32, %arg1: i32) -> (i32, i32) {
    %c0_i32 = arith.constant 0 : i32
    %c0_i32_0 = arith.constant 0 : i32
    %c0_i32_1 = arith.constant 0 : i32
    return %c0_i32, %c0_i32_0 : i32, i32
  }
  func.func @transform_6(%arg0: i32, %arg1: i32) -> (i32, i32) {
    %c0_i32 = arith.constant 0 : i32
    %c0_i32_0 = arith.constant 0 : i32
    return %arg0, %c0_i32 : i32, i32
  }
}

</mosaic_0001>

<llo_original>
// kernel: transformer_encoder_layer.6
$region0: #{transformer_encoder_layer.6}
  #allocation0 [shape = 'u32[]', space=smem, size = 0x4, offset = 0x4, fixed_abs, tag = 'smem constant byte address 0x4 - core index']
  #allocation1 [shape = 'u32[72,128]{1,0:T(1,128)}', space=vmem, size = 0x9000, scoped, tag = 'internal scratch']
  %s0 = inlined_call_operand.vmem [shape: bf16[16,1536], index: 0, kind: input, shape index: {}]
  %s1 = inlined_call_operand.vmem [shape: bf16[16,512], index: 1, kind: output, shape index: {}]
  %s2 = sld [smem:[#allocation0]]
  $region94: #{transformer_encoder_layer.6} parent=0
    _
  %s4 = ssub.s32 1, %s2
  %s5 = scalar_select 0, %s4, %s2
  $region1: #{transformer_encoder_layer.6} parent=0
    #allocation2 [shape = 'u8[49152]{0}', space=vmem, size = 0xc000, scoped, tag = 'input window, operand 0']
    #allocation3 [shape = 'u8[16384]{0}', space=vmem, size = 0x4000, scoped, tag = 'output window, operand 0']
    loop: start=0, step=1, limit=4
    $region2: #{transformer_encoder_layer.6} parent=1 // loop_pre_header
      _
    $region3: #{transformer_encoder_layer.6} parent=1 // loop_header
      %s7 = sphi 0, %s11
      %p8 = scmp.ge.s32.totalorder %s7, 4
      %s14 = sphi 0, %s26
      %s15 = sphi 0, %s22
      %s16 = sphi 0, %s14
      %s17 = sphi 0, %s15
      %s18 = sphi 0, %s16
      %s19 = sphi 0, %s17
      %s29 = sphi 0, %s31
      %s32 = sphi 0, %s29
      %s33 = sphi 0, %s32
      %s49 = sphi 0, %s33
      %s57 = sphi 0, %s59
      %s60 = sphi 0, %s57
      %s61 = sphi 0, %s60
      %s77 = sphi 0, %s61
    $region4: #{transformer_encoder_layer.6} parent=1 // loop_header_branch
      %10 = sbr.rel (%p8) target = $region8
    $region5: #{transformer_encoder_layer.6} parent=1 // loop_body
      %s12 = ssub.s32 %s7, 1
      %s13 = ssub.s32 %s7, 2
      %s20 = sadd.s32 1, %s15
      %p21 = scmp.ge.s32.totalorder %s20, 1
      %s22 = scalar_select %p21, 0, %s20
      %s23 = sadd.s32 1, %s14
      %s24 = scalar_select %p21, %s23, %s14
      %p25 = scmp.ge.s32.totalorder %s24, 2
      %s26 = scalar_select %p25, 0, %s24
      %s27 = ssub.s32 %s14, %s26
      %p28 = scmp.eq.s32.totalorder %s27, 0
      %s30 = sadd.s32 %s29, 1
      %s31 = scalar_select %p28, %s29, %s30
      %p34 = pneg %p28
      %p35 = scmp.eq.s32.totalorder %s7, 1
      %p36 = por %p34, %p35
      %p37 = scmp.ne.s32.totalorder %s29, %s32
      %p38 = scmp.eq.s32.totalorder %s7, 0
      %p39 = por %p37, %p38
      %p40 = scmp.ne.s32.totalorder %s29, %s32
      %p41 = scmp.eq.s32.totalorder %s12, 1
      %p42 = por %p40, %p41
      %p43 = scmp.ne.s32.totalorder %s32, %s33
      %p44 = scmp.eq.s32.totalorder %s12, 0
      %p45 = por %p43, %p44
      %p46 = scmp.ne.s32.totalorder %s32, %s33
      %p47 = scmp.eq.s32.totalorder %s13, 1
      %p48 = por %p46, %p47
      %p50 = scmp.ne.s32.totalorder %s33, %s49
      %p51 = scmp.eq.s32.totalorder %s13, 0
      %p52 = por %p50, %p51
      %s53 = ssub.s32 %s15, %s22
      %s54 = ssub.s32 %s14, %s26
      %s55 = sor.u32 %s53, %s54
      %p56 = scmp.eq.s32.totalorder %s55, 0
      %s58 = sadd.s32 %s57, 1
      %s59 = scalar_select %p56, %s57, %s58
      %p62 = pneg %p56
      %p63 = scmp.eq.s32.totalorder %s7, 1
      %p64 = por %p62, %p63
      %p65 = scmp.ne.s32.totalorder %s57, %s60
      %p66 = scmp.eq.s32.totalorder %s7, 0
      %p67 = por %p65, %p66
      %p68 = scmp.ne.s32.totalorder %s57, %s60
      %p69 = scmp.eq.s32.totalorder %s12, 1
      %p70 = por %p68, %p69
      %p71 = scmp.ne.s32.totalorder %s60, %s61
      %p72 = scmp.eq.s32.totalorder %s12, 0
      %p73 = por %p71, %p72
      %p74 = scmp.ne.s32.totalorder %s60, %s61
      %p75 = scmp.eq.s32.totalorder %s13, 1
      %p76 = por %p74, %p75
      %p78 = scmp.ne.s32.totalorder %s61, %s77
      %p79 = scmp.eq.s32.totalorder %s13, 0
      %p80 = por %p78, %p79
      %p81 = scmp.le.s32.totalorder 1, %s7
      %p82 = scmp.lt.s32.totalorder %s7, 3
      %p83 = pnand %p81, %p82
      %p84 = pneg %p83
      // Predicated region
      $region9: #{transformer_encoder_layer.6} parent=5 // pred_check
        _
      $region10: #{transformer_encoder_layer.6} parent=5 // pred_check_branch
        %86 = sbr.rel (%p83) target = $region12
      $region11: #{transformer_encoder_layer.6} parent=5 // pred_region
        %s87 = ssub.s32 %s7, 1
      $region12: #{transformer_encoder_layer.6} parent=5 // pred_fallthru
        _
      %p88 = scmp.lt.s32.totalorder %s7, 2
      // Predicated region
      $region13: #{transformer_encoder_layer.6} parent=5 // pred_check
        %p89 = pneg %p88
      $region14: #{transformer_encoder_layer.6} parent=5 // pred_check_branch
        %91 = sbr.rel (%p89) target = $region16
      $region15: #{transformer_encoder_layer.6} parent=5 // pred_region
        // Predicated region
        $region17: #{transformer_encoder_layer.6} parent=15 // pred_check
          %p92 = pneg %p39
        $region18: #{transformer_encoder_layer.6} parent=15 // pred_check_branch
          %94 = sbr.rel (%p92) target = $region20
        $region19: #{transformer_encoder_layer.6} parent=15 // pred_region
          %s95 = sand.u32 %s29, 1
          %s96 = sand.u32 %s29, 1
          %s97 = smul.addr %s96, 48
          %s98 = scalar_lea.vmem [#allocation2], %s97
          %s99 = smul.u32 6, %s14
          %s100 = smul.addr %s99, 4
          %s101 = scalar_lea.vmem %s0, %s100
          // Predicated region
          $region21: #{transformer_encoder_layer.6} parent=19 // pred_check
            _
          $region22: #{transformer_encoder_layer.6} parent=19 // pred_check_branch
            %103 = sbr.rel (0) target = $region24
          $region23: #{transformer_encoder_layer.6} parent=19 // pred_region
            // Predicated region
            $region25: #{transformer_encoder_layer.6} parent=23 // pred_check
              _
            $region26: #{transformer_encoder_layer.6} parent=23 // pred_check_branch
              %105 = sbr.rel (0) target = $region28
            $region27: #{transformer_encoder_layer.6} parent=23 // pred_region
              loop: start=0, step=1, limit=1
              $region29: #{transformer_encoder_layer.6} parent=27 // loop_pre_header
                _
              $region30: #{transformer_encoder_layer.6} parent=27 // loop_header
                %s107 = sphi 0, %s111
                %p108 = scmp.ge.s32.totalorder %s107, 1
                %s112 = sphi %s101, %s101
                %s113 = sphi %s98, %s98
              $region31: #{transformer_encoder_layer.6} parent=27 // loop_header_branch
                %110 = sbr.rel (%p108) target = $region35
              $region32: #{transformer_encoder_layer.6} parent=27 // loop_body
                %v114 = vld [vmem:[%s112] sm:$0xff]
                %115 = vst [vmem:[%s113] sm:$0xff] %v114
                %v116 = vld [vmem:[%s112 + $0x8] sm:$0xff]
                %117 = vst [vmem:[%s113 + $0x8] sm:$0xff] %v116
                %v118 = vld [vmem:[%s112 + $0x10] sm:$0xff]
                %119 = vst [vmem:[%s113 + $0x10] sm:$0xff] %v118
                %v120 = vld [vmem:[%s112 + $0x30] sm:$0xff]
                %121 = vst [vmem:[%s113 + $0x18] sm:$0xff] %v120
                %v122 = vld [vmem:[%s112 + $0x38] sm:$0xff]
                %123 = vst [vmem:[%s113 + $0x20] sm:$0xff] %v122
                %v124 = vld [vmem:[%s112 + $0x40] sm:$0xff]
                %125 = vst [vmem:[%s113 + $0x28] sm:$0xff] %v124
              $region33: #{transformer_encoder_layer.6} parent=27 // loop_footer
                %s111 = sadd.s32 1, %s107
              $region34: #{transformer_encoder_layer.6} parent=27 // loop_footer_branch
                %106 = sbr.rel target = $region30
              $region35: #{transformer_encoder_layer.6} parent=27 // loop_exit
                _
            $region28: #{transformer_encoder_layer.6} parent=23 // pred_fallthru
              _
            // Predicated region
            $region36: #{transformer_encoder_layer.6} parent=23 // pred_check
              _
            $region37: #{transformer_encoder_layer.6} parent=23 // pred_check_branch
              %127 = sbr.rel target = $region39
            $region38: #{transformer_encoder_layer.6} parent=23 // pred_region
              _
            $region39: #{transformer_encoder_layer.6} parent=23 // pred_fallthru
              _
          $region24: #{transformer_encoder_layer.6} parent=19 // pred_fallthru
            _
          %128 = vnop
        $region20: #{transformer_encoder_layer.6} parent=15 // pred_fallthru
          _
      $region16: #{transformer_encoder_layer.6} parent=5 // pred_fallthru
        _
      %p129 = scmp.le.s32.totalorder 1, %s7
      %p130 = scmp.lt.s32.totalorder %s7, 3
      %p131 = pnand %p129, %p130
      %p132 = pneg %p131
      // Predicated region
      $region40: #{transformer_encoder_layer.6} parent=5 // pred_check
        _
      $region41: #{transformer_encoder_layer.6} parent=5 // pred_check_branch
        %134 = sbr.rel (%p131) target = $region43
      $region42: #{transformer_encoder_layer.6} parent=5 // pred_region
        %s135 = ssub.s32 %s7, 1
        %s136 = sand.u32 %s32, 1
        %s137 = sand.u32 %s32, 1
        %s138 = smul.addr %s137, 48
        %s139 = scalar_lea.vmem [#allocation2], %s138
        // Predicated region
        $region44: #{transformer_encoder_layer.6} parent=42 // pred_check
          %p140 = pneg %p45
        $region45: #{transformer_encoder_layer.6} parent=42 // pred_check_branch
          %142 = sbr.rel (%p140) target = $region47
        $region46: #{transformer_encoder_layer.6} parent=42 // pred_region
          _
        $region47: #{transformer_encoder_layer.6} parent=42 // pred_fallthru
          _
        %s143 = sand.u32 %s32, 1
        %s144 = sand.u32 %s32, 1
        %s145 = smul.addr %s144, 48
        %s146 = scalar_lea.vmem [#allocation2], %s145
        %p147 = pneg %p45
        %p148 = pneg %p42
        %p149 = pneg %p73
        %p150 = pneg %p70
        %s151 = sand.u32 %s60, 1
        %s152 = sand.u32 %s60, 1
        %s153 = smul.addr %s152, 16
        %s154 = scalar_lea.vmem [#allocation3], %s153
        %s155 = smul.u32 6, %s16
        %s156 = smul.u32 2, %s17
        %s157 = smul.u32 2, %s16
        %s159 = smul.u32 %s17, 16
        %s160 = sshra.s32 %s159, 3
        %s161 = sand.u32 %s159, 7
        %s162 = smul.u32 %s160, 6
        %s163 = smul.addr %s162, 4
        %s164 = scalar_lea.vmem %s139, %s163 [#allocation2]
        %v165 = vld [vmem:[%s164] sm:$0xf]
        %v166 = vld [vmem:[%s164 + $0x18] sm:$0xf]
        %v167 = vld [vmem:[%s139 + $0x8] sm:$0xf]
        %v168 = vld [vmem:[%s139 + $0x20] sm:$0xf]
        %v169 = vld [vmem:[%s139 + $0x10] sm:$0xf]
        %v170 = vld [vmem:[%s139 + $0x28] sm:$0xf]
        %v173 = vunpack.c.l.b16 %v165
        %v174 = vunpack.c.l.b16 %v166
        %v175 = vpack.c.b16 %v174, %v173
        %v178 = vunpack.c.l.b16 %v167
        %v179 = vunpack.c.l.b16 %v168
        %v180 = vpack.c.b16 %v179, %v178
        %vm181 = vcmask 523264
        %v183 = vsel %vm181, %v175, 0
        %v186 = vsel %vm181, %v180, 0
        %188 = vmatpush.bf16.xpose.msra.mxu0 0
        %189 = vmatpush.bf16.xpose.msra.mxu0 0
        %190 = vmatpush.bf16.xpose.msra.mxu0 0
        %191 = vmatpush.bf16.xpose.msra.mxu0 0
        %192 = vmatpush.bf16.xpose.msra.mxu0 0
        %193 = vmatpush.bf16.xpose.msra.mxu0 0
        %194 = vmatpush.bf16.xpose.msra.mxu0 0
        %195 = vmatpush.bf16.xpose.msra.mxu0 %v186
        %196 = vmatmul.bf16.gmra.mxu0 %v183
        %v197 = vpop.f32.mrf.mxu0
        %v198 = vadd.f32 0.0, %v197
        %v199 = vpop.f32.mrf.mxu0
        %v200 = vadd.f32 0.0, %v199
        %201 = vdwg.mxu0
        %v202 = vmul.f32 %v198, 0.125
        %v203 = vmul.f32 %v200, 0.125
        %vm204 = vcmask 130048
        %v205 = vsel %vm204, %v202, -inf
        %206 = vmax.xlane.f32.xlu0 %v205
        %v207 = vpop.xlane.xlu0 %206
        %v208 = vsel %vm204, %v203, -inf
        %209 = vmax.xlane.f32.xlu0 %v208
        %v210 = vpop.xlane.xlu0 %209
        %v211 = vsub.f32 %v202, %v207
        %v212 = vsub.f32 %v203, %v210
        %v213 = vmul.f32 %v211, 1.442695
        %v214 = vpow.pop %v213
        %v215 = vmul.f32 %v212, 1.442695
        %v216 = vpow.pop %v215
        %v217 = vsel %vm204, %v214, 0.0
        %218 = vadd.xlane.f32.xlu0 %v217
        %v219 = vpop.xlane.xlu0 %218
        %v220 = vsel %vm204, %v216, 0.0
        %221 = vadd.xlane.f32.xlu0 %v220
        %v222 = vpop.xlane.xlu0 %221
        %v223 = vrcp.pop %v219
        %v224 = vrcp.pop %v222
        %v225 = vmul.f32 %v214, %v223
        %v226 = vmul.f32 %v216, %v224
        %v227 = vpack.c.bf16 %v226, %v225
        %v230 = vunpack.c.l.b16 %v169
        %v231 = vunpack.c.l.b16 %v170
        %v232 = vpack.c.b16 %v231, %v230
        %v235 = vsel %vm204, %v227, 0
        %237 = vmatpush.bf16.msra.mxu0 0
        %238 = vmatpush.bf16.msra.mxu0 0
        %239 = vmatpush.bf16.msra.mxu0 0
        %240 = vmatpush.bf16.msra.mxu0 0
        %241 = vmatpush.bf16.msra.mxu0 0
        %242 = vmatpush.bf16.msra.mxu0 0
        %243 = vmatpush.bf16.msra.mxu0 0
        %244 = vmatpush.bf16.msra.mxu0 %v232
        %245 = vmatmul.bf16.gmra.mxu0 %v235
        %v246 = vpop.f32.mrf.mxu0
        %v247 = vadd.f32 0.0, %v246
        %v248 = vpop.f32.mrf.mxu0
        %v249 = vadd.f32 0.0, %v248
        %250 = vdwg.mxu0
        %251 = vrot.lane.b32.xlu0 %v175, 64
        %v252 = vpop.permute.xlu0 %251
        %253 = vrot.lane.b32.xlu0 %v180, 64
        %v254 = vpop.permute.xlu0 %253
        %v256 = vsel %vm181, %v252, 0
        %v259 = vsel %vm181, %v254, 0
        %261 = vmatpush.bf16.xpose.msra.mxu0 0
        %262 = vmatpush.bf16.xpose.msra.mxu0 0
        %263 = vmatpush.bf16.xpose.msra.mxu0 0
        %264 = vmatpush.bf16.xpose.msra.mxu0 0
        %265 = vmatpush.bf16.xpose.msra.mxu0 0
        %266 = vmatpush.bf16.xpose.msra.mxu0 0
        %267 = vmatpush.bf16.xpose.msra.mxu0 0
        %268 = vmatpush.bf16.xpose.msra.mxu0 %v259
        %269 = vmatmul.bf16.gmra.mxu0 %v256
        %v270 = vpop.f32.mrf.mxu0
        %v271 = vadd.f32 0.0, %v270
        %v272 = vpop.f32.mrf.mxu0
        %v273 = vadd.f32 0.0, %v272
        %274 = vdwg.mxu0
        %v275 = vmul.f32 %v271, 0.125
        %v276 = vmul.f32 %v273, 0.125
        %v277 = vsel %vm204, %v275, -inf
        %278 = vmax.xlane.f32.xlu0 %v277
        %v279 = vpop.xlane.xlu0 %278
        %v280 = vsel %vm204, %v276, -inf
        %281 = vmax.xlane.f32.xlu0 %v280
        %v282 = vpop.xlane.xlu0 %281
        %v283 = vsub.f32 %v275, %v279
        %v284 = vsub.f32 %v276, %v282
        %v285 = vmul.f32 %v283, 1.442695
        %v286 = vpow.pop %v285
        %v287 = vmul.f32 %v284, 1.442695
        %v288 = vpow.pop %v287
        %v289 = vsel %vm204, %v286, 0.0
        %290 = vadd.xlane.f32.xlu0 %v289
        %v291 = vpop.xlane.xlu0 %290
        %v292 = vsel %vm204, %v288, 0.0
        %293 = vadd.xlane.f32.xlu0 %v292
        %v294 = vpop.xlane.xlu0 %293
        %v295 = vrcp.pop %v291
        %v296 = vrcp.pop %v294
        %v297 = vmul.f32 %v286, %v295
        %v298 = vmul.f32 %v288, %v296
        %v299 = vpack.c.bf16 %v298, %v297
        %300 = vrot.lane.b32.xlu0 %v232, 64
        %v301 = vpop.permute.xlu0 %300
        %v304 = vsel %vm204, %v299, 0
        %306 = vmatpush.bf16.msra.mxu0 0
        %307 = vmatpush.bf16.msra.mxu0 0
        %308 = vmatpush.bf16.msra.mxu0 0
        %309 = vmatpush.bf16.msra.mxu0 0
        %310 = vmatpush.bf16.msra.mxu0 0
        %311 = vmatpush.bf16.msra.mxu0 0
        %312 = vmatpush.bf16.msra.mxu0 0
        %313 = vmatpush.bf16.msra.mxu0 %v301
        %314 = vmatmul.bf16.gmra.mxu0 %v304
        %v315 = vpop.f32.mrf.mxu0
        %v316 = vadd.f32 0.0, %v315
        %v317 = vpop.f32.mrf.mxu0
        %v318 = vadd.f32 0.0, %v317
        %319 = vdwg.mxu0
        %v320 = vld [vmem:[%s164 + $0x4] sm:$0xf]
        %v321 = vld [vmem:[%s164 + $0x1c] sm:$0xf]
        %v322 = vld [vmem:[%s139 + $0xc] sm:$0xf]
        %v323 = vld [vmem:[%s139 + $0x24] sm:$0xf]
        %v324 = vld [vmem:[%s139 + $0x14] sm:$0xf]
        %v325 = vld [vmem:[%s139 + $0x2c] sm:$0xf]
        %v328 = vunpack.c.l.b16 %v320
        %v329 = vunpack.c.l.b16 %v321
        %v330 = vpack.c.b16 %v329, %v328
        %v333 = vunpack.c.l.b16 %v322
        %v334 = vunpack.c.l.b16 %v323
        %v335 = vpack.c.b16 %v334, %v333
        %v337 = vsel %vm181, %v330, 0
        %v340 = vsel %vm181, %v335, 0
        %342 = vmatpush.bf16.xpose.msra.mxu0 0
        %343 = vmatpush.bf16.xpose.msra.mxu0 0
        %344 = vmatpush.bf16.xpose.msra.mxu0 0
        %345 = vmatpush.bf16.xpose.msra.mxu0 0
        %346 = vmatpush.bf16.xpose.msra.mxu0 0
        %347 = vmatpush.bf16.xpose.msra.mxu0 0
        %348 = vmatpush.bf16.xpose.msra.mxu0 0
        %349 = vmatpush.bf16.xpose.msra.mxu0 %v340
        %350 = vmatmul.bf16.gmra.mxu0 %v337
        %v351 = vpop.f32.mrf.mxu0
        %v352 = vadd.f32 0.0, %v351
        %v353 = vpop.f32.mrf.mxu0
        %v354 = vadd.f32 0.0, %v353
        %355 = vdwg.mxu0
        %v356 = vmul.f32 %v352, 0.125
        %v357 = vmul.f32 %v354, 0.125
        %v358 = vsel %vm204, %v356, -inf
        %359 = vmax.xlane.f32.xlu0 %v358
        %v360 = vpop.xlane.xlu0 %359
        %v361 = vsel %vm204, %v357, -inf
        %362 = vmax.xlane.f32.xlu0 %v361
        %v363 = vpop.xlane.xlu0 %362
        %v364 = vsub.f32 %v356, %v360
        %v365 = vsub.f32 %v357, %v363
        %v366 = vmul.f32 %v364, 1.442695
        %v367 = vpow.pop %v366
        %v368 = vmul.f32 %v365, 1.442695
        %v369 = vpow.pop %v368
        %v370 = vsel %vm204, %v367, 0.0
        %371 = vadd.xlane.f32.xlu0 %v370
        %v372 = vpop.xlane.xlu0 %371
        %v373 = vsel %vm204, %v369, 0.0
        %374 = vadd.xlane.f32.xlu0 %v373
        %v375 = vpop.xlane.xlu0 %374
        %v376 = vrcp.pop %v372
        %v377 = vrcp.pop %v375
        %v378 = vmul.f32 %v367, %v376
        %v379 = vmul.f32 %v369, %v377
        %v380 = vpack.c.bf16 %v379, %v378
        %v383 = vunpack.c.l.b16 %v324
        %v384 = vunpack.c.l.b16 %v325
        %v385 = vpack.c.b16 %v384, %v383
        %v388 = vsel %vm204, %v380, 0
        %390 = vmatpush.bf16.msra.mxu0 0
        %391 = vmatpush.bf16.msra.mxu0 0
        %392 = vmatpush.bf16.msra.mxu0 0
        %393 = vmatpush.bf16.msra.mxu0 0
        %394 = vmatpush.bf16.msra.mxu0 0
        %395 = vmatpush.bf16.msra.mxu0 0
        %396 = vmatpush.bf16.msra.mxu0 0
        %397 = vmatpush.bf16.msra.mxu0 %v385
        %398 = vmatmul.bf16.gmra.mxu0 %v388
        %v399 = vpop.f32.mrf.mxu0
        %v400 = vadd.f32 0.0, %v399
        %v401 = vpop.f32.mrf.mxu0
        %v402 = vadd.f32 0.0, %v401
        %403 = vdwg.mxu0
        %404 = vrot.lane.b32.xlu0 %v330, 64
        %v405 = vpop.permute.xlu0 %404
        %406 = vrot.lane.b32.xlu0 %v335, 64
        %v407 = vpop.permute.xlu0 %406
        %v409 = vsel %vm181, %v405, 0
        %v412 = vsel %vm181, %v407, 0
        %414 = vmatpush.bf16.xpose.msra.mxu0 0
        %415 = vmatpush.bf16.xpose.msra.mxu0 0
        %416 = vmatpush.bf16.xpose.msra.mxu0 0
        %417 = vmatpush.bf16.xpose.msra.mxu0 0
        %418 = vmatpush.bf16.xpose.msra.mxu0 0
        %419 = vmatpush.bf16.xpose.msra.mxu0 0
        %420 = vmatpush.bf16.xpose.msra.mxu0 0
        %421 = vmatpush.bf16.xpose.msra.mxu0 %v412
        %422 = vmatmul.bf16.gmra.mxu0 %v409
        %v423 = vpop.f32.mrf.mxu0
        %v424 = vadd.f32 0.0, %v423
        %v425 = vpop.f32.mrf.mxu0
        %v426 = vadd.f32 0.0, %v425
        %427 = vdwg.mxu0
        %v428 = vmul.f32 %v424, 0.125
        %v429 = vmul.f32 %v426, 0.125
        %v430 = vsel %vm204, %v428, -inf
        %431 = vmax.xlane.f32.xlu0 %v430
        %v432 = vpop.xlane.xlu0 %431
        %v433 = vsel %vm204, %v429, -inf
        %434 = vmax.xlane.f32.xlu0 %v433
        %v435 = vpop.xlane.xlu0 %434
        %v436 = vsub.f32 %v428, %v432
        %v437 = vsub.f32 %v429, %v435
        %v438 = vmul.f32 %v436, 1.442695
        %v439 = vpow.pop %v438
        %v440 = vmul.f32 %v437, 1.442695
        %v441 = vpow.pop %v440
        %v442 = vsel %vm204, %v439, 0.0
        %443 = vadd.xlane.f32.xlu0 %v442
        %v444 = vpop.xlane.xlu0 %443
        %v445 = vsel %vm204, %v441, 0.0
        %446 = vadd.xlane.f32.xlu0 %v445
        %v447 = vpop.xlane.xlu0 %446
        %v448 = vrcp.pop %v444
        %v449 = vrcp.pop %v447
        %v450 = vmul.f32 %v439, %v448
        %v451 = vmul.f32 %v441, %v449
        %v452 = vpack.c.bf16 %v451, %v450
        %453 = vrot.lane.b32.xlu0 %v385, 64
        %v454 = vpop.permute.xlu0 %453
        %v457 = vsel %vm204, %v452, 0
        %459 = vmatpush.bf16.msra.mxu0 0
        %460 = vmatpush.bf16.msra.mxu0 0
        %461 = vmatpush.bf16.msra.mxu0 0
        %462 = vmatpush.bf16.msra.mxu0 0
        %463 = vmatpush.bf16.msra.mxu0 0
        %464 = vmatpush.bf16.msra.mxu0 0
        %465 = vmatpush.bf16.msra.mxu0 0
        %466 = vmatpush.bf16.msra.mxu0 %v454
        %467 = vmatmul.bf16.gmra.mxu0 %v457
        %v468 = vpop.f32.mrf.mxu0
        %v469 = vadd.f32 0.0, %v468
        %v470 = vpop.f32.mrf.mxu0
        %v471 = vadd.f32 0.0, %v470
        %472 = vdwg.mxu0
        %475 = vrot.lane.b32.xlu0 %v316, 64
        %v476 = vpop.permute.xlu0 %475
        %477 = vrot.lane.b32.xlu0 %v318, 64
        %v478 = vpop.permute.xlu0 %477
        %483 = vrot.lane.b32.xlu0 %v469, 64
        %v484 = vpop.permute.xlu0 %483
        %485 = vrot.lane.b32.xlu0 %v471, 64
        %v486 = vpop.permute.xlu0 %485
        %v489 = vsel %vm181, %v247, %v476
        %v490 = vsel %vm181, %v249, %v478
        %v491 = vsel %vm181, %v400, %v484
        %v492 = vsel %vm181, %v402, %v486
        %v493 = vpack.c.bf16 %v491, %v489
        %v494 = vpack.c.bf16 %v492, %v490
        %495 = vst [vmem:[%s154] sm:$0xff] %v493
        %496 = vst [vmem:[%s154 + $0x8] sm:$0xff] %v494
        %s497 = sand.u32 %s60, 1
        %s498 = sand.u32 %s60, 1
        %s499 = smul.addr %s498, 16
        %s500 = scalar_lea.vmem [#allocation3], %s499
        // Predicated region
        $region48: #{transformer_encoder_layer.6} parent=42 // pred_check
          %p501 = pneg %p70
        $region49: #{transformer_encoder_layer.6} parent=42 // pred_check_branch
          %503 = sbr.rel (%p501) target = $region51
        $region50: #{transformer_encoder_layer.6} parent=42 // pred_region
          %s504 = smul.u32 2, %s17
          %s505 = smul.u32 2, %s16
          %s506 = smul.addr %s504, 4
          %s507 = sadd.s32 %s505, %s506
          %s508 = smul.addr %s507, 4
          %s509 = scalar_lea.vmem %s1, %s508
          // Predicated region
          $region52: #{transformer_encoder_layer.6} parent=50 // pred_check
            _
          $region53: #{transformer_encoder_layer.6} parent=50 // pred_check_branch
            %511 = sbr.rel (0) target = $region55
          $region54: #{transformer_encoder_layer.6} parent=50 // pred_region
            // Predicated region
            $region56: #{transformer_encoder_layer.6} parent=54 // pred_check
              _
            $region57: #{transformer_encoder_layer.6} parent=54 // pred_check_branch
              %513 = sbr.rel (0) target = $region59
            $region58: #{transformer_encoder_layer.6} parent=54 // pred_region
              // Predicated region
              $region71: #{transformer_encoder_layer.6} parent=58 // pred_check
                _
              $region72: #{transformer_encoder_layer.6} parent=58 // pred_check_branch
                %531 = sbr.rel (0) target = $region74
              $region73: #{transformer_encoder_layer.6} parent=58 // pred_region
                loop: start=0, step=1, limit=1
                $region75: #{transformer_encoder_layer.6} parent=73 // loop_pre_header
                  _
                $region76: #{transformer_encoder_layer.6} parent=73 // loop_header
                  %s533 = sphi 0, %s537
                  %p534 = scmp.ge.s32.totalorder %s533, 1
                  %s538 = sphi %s500, %s500
                  %s539 = sphi %s509, %s509
                $region77: #{transformer_encoder_layer.6} parent=73 // loop_header_branch
                  %536 = sbr.rel (%p534) target = $region81
                $region78: #{transformer_encoder_layer.6} parent=73 // loop_body
                  %v540 = vld [vmem:[%s538] sm:$0xff]
                  %541 = vst [vmem:[%s539] sm:$0xff] %v540
                  %v542 = vld [vmem:[%s538 + $0x8] sm:$0xff]
                  %543 = vst [vmem:[%s539 + $0x10] sm:$0xff] %v542
                $region79: #{transformer_encoder_layer.6} parent=73 // loop_footer
                  %s537 = sadd.s32 1, %s533
                $region80: #{transformer_encoder_layer.6} parent=73 // loop_footer_branch
                  %532 = sbr.rel target = $region76
                $region81: #{transformer_encoder_layer.6} parent=73 // loop_exit
                  _
              $region74: #{transformer_encoder_layer.6} parent=58 // pred_fallthru
                _
              // Predicated region
              $region82: #{transformer_encoder_layer.6} parent=58 // pred_check
                _
              $region83: #{transformer_encoder_layer.6} parent=58 // pred_check_branch
                %545 = sbr.rel target = $region85
              $region84: #{transformer_encoder_layer.6} parent=58 // pred_region
                _
              $region85: #{transformer_encoder_layer.6} parent=58 // pred_fallthru
                _
            $region59: #{transformer_encoder_layer.6} parent=54 // pred_fallthru
              _
            // Predicated region
            $region60: #{transformer_encoder_layer.6} parent=54 // pred_check
              _
            $region61: #{transformer_encoder_layer.6} parent=54 // pred_check_branch
              %515 = sbr.rel target = $region63
            $region62: #{transformer_encoder_layer.6} parent=54 // pred_region
              %s517 = ssub.s32 256, 1
              loop: start=0, step=1, limit=1
              $region64: #{transformer_encoder_layer.6} parent=62 // loop_pre_header
                _
              $region65: #{transformer_encoder_layer.6} parent=62 // loop_header
                %s519 = sphi 0, %s523
                %p520 = scmp.ge.s32.totalorder %s519, 1
                %s524 = sphi %s500, %s500
                %s525 = sphi %s509, %s509
              $region66: #{transformer_encoder_layer.6} parent=62 // loop_header_branch
                %522 = sbr.rel (%p520) target = $region70
              $region67: #{transformer_encoder_layer.6} parent=62 // loop_body
                %v526 = vld [vmem:[%s524] sm:%s517]
                %527 = vst [vmem:[%s525] sm:%s517] %v526
                %v528 = vld [vmem:[%s524 + $0x8] sm:%s517]
                %529 = vst [vmem:[%s525 + $0x10] sm:%s517] %v528
              $region68: #{transformer_encoder_layer.6} parent=62 // loop_footer
                %s523 = sadd.s32 1, %s519
              $region69: #{transformer_encoder_layer.6} parent=62 // loop_footer_branch
                %518 = sbr.rel target = $region65
              $region70: #{transformer_encoder_layer.6} parent=62 // loop_exit
                _
            $region63: #{transformer_encoder_layer.6} parent=54 // pred_fallthru
              _
          $region55: #{transformer_encoder_layer.6} parent=50 // pred_fallthru
            _
          %546 = vnop
        $region51: #{transformer_encoder_layer.6} parent=42 // pred_fallthru
          _
      $region43: #{transformer_encoder_layer.6} parent=5 // pred_fallthru
        _
      %p547 = scmp.le.s32.totalorder 2, %s7
      // Predicated region
      $region86: #{transformer_encoder_layer.6} parent=5 // pred_check
        %p548 = pneg %p547
      $region87: #{transformer_encoder_layer.6} parent=5 // pred_check_branch
        %550 = sbr.rel (%p548) target = $region89
      $region88: #{transformer_encoder_layer.6} parent=5 // pred_region
        %s551 = ssub.s32 %s7, 2
        // Predicated region
        $region90: #{transformer_encoder_layer.6} parent=88 // pred_check
          %p552 = pneg %p76
        $region91: #{transformer_encoder_layer.6} parent=88 // pred_check_branch
          %554 = sbr.rel (%p552) target = $region93
        $region92: #{transformer_encoder_layer.6} parent=88 // pred_region
          %s555 = sand.u32 %s61, 1
          %s556 = sand.u32 %s61, 1
          %s557 = smul.addr %s556, 16
          %s558 = scalar_lea.vmem [#allocation3], %s557
        $region93: #{transformer_encoder_layer.6} parent=88 // pred_fallthru
          _
      $region89: #{transformer_encoder_layer.6} parent=5 // pred_fallthru
        _
    $region6: #{transformer_encoder_layer.6} parent=1 // loop_footer
      %s11 = sadd.s32 1, %s7
    $region7: #{transformer_encoder_layer.6} parent=1 // loop_footer_branch
      %6 = sbr.rel target = $region3
    $region8: #{transformer_encoder_layer.6} parent=1 // loop_exit
      _

// kernel: transformer_encoder_layer.5
$region0: #{transformer_encoder_layer.5}
  #allocation0 [shape = 'u32[]', space=smem, size = 0x4, offset = 0x4, fixed_abs, tag = 'smem constant byte address 0x4 - core index']
  #allocation1 [shape = 'u32[72,128]{1,0:T(1,128)}', space=vmem, size = 0x9000, scoped, tag = 'internal scratch']
  #allocation2 [shape = 'f32[32,256]{1,0:T(8,128)}', space=vmem, size = 0x8000, scoped, tag = 'scratch operand']
  %s0 = inlined_call_operand.vmem [shape: bf16[32,256], index: 0, kind: input, shape index: {}]
  %s1 = inlined_call_operand.vmem [shape: bf16[256,768], index: 1, kind: input, shape index: {}]
  %s2 = inlined_call_operand.vmem [shape: f32[1,768], index: 2, kind: input, shape index: {}]
  %s3 = inlined_call_operand.vmem [shape: bf16[32,768], index: 3, kind: output, shape index: {}]
  %s4 = sld [smem:[#allocation0]]
  $region125: #{transformer_encoder_layer.5} parent=0
    _
  %s6 = ssub.s32 1, %s4
  %s7 = scalar_select 0, %s6, %s4
  $region1: #{transformer_encoder_layer.5} parent=0
    #allocation3 [shape = 'u8[262144]{0}', space=vmem, size = 0x40000, scoped, tag = 'input window, operand 1']
    #allocation4 [shape = 'u8[32768]{0}', space=vmem, size = 0x8000, scoped, tag = 'output window, operand 0']
    loop: start=0, step=1, limit=5
    $region2: #{transformer_encoder_layer.5} parent=1 // loop_pre_header
      _
    $region3: #{transformer_encoder_layer.5} parent=1 // loop_header
      %s9 = sphi 0, %s13
      %p10 = scmp.ge.s32.totalorder %s9, 5
      %s16 = sphi 0, %s35
      %s17 = sphi 0, %s31
      %s18 = sphi 0, %s27
      %s19 = sphi 0, %s16
      %s20 = sphi 0, %s17
      %s21 = sphi 0, %s18
      %s22 = sphi 0, %s19
      %s23 = sphi 0, %s20
      %s24 = sphi 0, %s21
      %s40 = sphi 0, %s42
      %s43 = sphi 0, %s40
      %s44 = sphi 0, %s43
      %s60 = sphi 0, %s44
      %s68 = sphi 0, %s70
      %s71 = sphi 0, %s68
      %s72 = sphi 0, %s71
      %s88 = sphi 0, %s72
      %s94 = sphi 0, %s96
      %s97 = sphi 0, %s94
      %s98 = sphi 0, %s97
      %s114 = sphi 0, %s98
      %s122 = sphi 0, %s124
      %s125 = sphi 0, %s122
      %s126 = sphi 0, %s125
      %s142 = sphi 0, %s126
    $region4: #{transformer_encoder_layer.5} parent=1 // loop_header_branch
      %12 = sbr.rel (%p10) target = $region8
    $region5: #{transformer_encoder_layer.5} parent=1 // loop_body
      %s14 = ssub.s32 %s9, 1
      %s15 = ssub.s32 %s9, 2
      %s25 = sadd.s32 1, %s18
      %p26 = scmp.ge.s32.totalorder %s25, 1
      %s27 = scalar_select %p26, 0, %s25
      %s28 = sadd.s32 1, %s17
      %s29 = scalar_select %p26, %s28, %s17
      %p30 = scmp.ge.s32.totalorder %s29, 3
      %s31 = scalar_select %p30, 0, %s29
      %s32 = sadd.s32 1, %s16
      %s33 = scalar_select %p30, %s32, %s16
      %p34 = scmp.ge.s32.totalorder %s33, 1
      %s35 = scalar_select %p34, 0, %s33
      %s36 = ssub.s32 %s16, %s35
      %s37 = ssub.s32 %s18, %s27
      %s38 = sor.u32 %s36, %s37
      %p39 = scmp.eq.s32.totalorder %s38, 0
      %s41 = sadd.s32 %s40, 1
      %s42 = scalar_select %p39, %s40, %s41
      %p45 = pneg %p39
      %p46 = scmp.eq.s32.totalorder %s9, 2
      %p47 = por %p45, %p46
      %p48 = scmp.ne.s32.totalorder %s40, %s43
      %p49 = scmp.eq.s32.totalorder %s9, 0
      %p50 = por %p48, %p49
      %p51 = scmp.ne.s32.totalorder %s40, %s43
      %p52 = scmp.eq.s32.totalorder %s14, 2
      %p53 = por %p51, %p52
      %p54 = scmp.ne.s32.totalorder %s43, %s44
      %p55 = scmp.eq.s32.totalorder %s14, 0
      %p56 = por %p54, %p55
      %p57 = scmp.ne.s32.totalorder %s43, %s44
      %p58 = scmp.eq.s32.totalorder %s15, 2
      %p59 = por %p57, %p58
      %p61 = scmp.ne.s32.totalorder %s44, %s60
      %p62 = scmp.eq.s32.totalorder %s15, 0
      %p63 = por %p61, %p62
      %s64 = ssub.s32 %s18, %s27
      %s65 = ssub.s32 %s17, %s31
      %s66 = sor.u32 %s64, %s65
      %p67 = scmp.eq.s32.totalorder %s66, 0
      %s69 = sadd.s32 %s68, 1
      %s70 = scalar_select %p67, %s68, %s69
      %p73 = pneg %p67
      %p74 = scmp.eq.s32.totalorder %s9, 2
      %p75 = por %p73, %p74
      %p76 = scmp.ne.s32.totalorder %s68, %s71
      %p77 = scmp.eq.s32.totalorder %s9, 0
      %p78 = por %p76, %p77
      %p79 = scmp.ne.s32.totalorder %s68, %s71
      %p80 = scmp.eq.s32.totalorder %s14, 2
      %p81 = por %p79, %p80
      %p82 = scmp.ne.s32.totalorder %s71, %s72
      %p83 = scmp.eq.s32.totalorder %s14, 0
      %p84 = por %p82, %p83
      %p85 = scmp.ne.s32.totalorder %s71, %s72
      %p86 = scmp.eq.s32.totalorder %s15, 2
      %p87 = por %p85, %p86
      %p89 = scmp.ne.s32.totalorder %s72, %s88
      %p90 = scmp.eq.s32.totalorder %s15, 0
      %p91 = por %p89, %p90
      %s92 = ssub.s32 %s17, %s31
      %p93 = scmp.eq.s32.totalorder %s92, 0
      %s95 = sadd.s32 %s94, 1
      %s96 = scalar_select %p93, %s94, %s95
      %p99 = pneg %p93
      %p100 = scmp.eq.s32.totalorder %s9, 2
      %p101 = por %p99, %p100
      %p102 = scmp.ne.s32.totalorder %s94, %s97
      %p103 = scmp.eq.s32.totalorder %s9, 0
      %p104 = por %p102, %p103
      %p105 = scmp.ne.s32.totalorder %s94, %s97
      %p106 = scmp.eq.s32.totalorder %s14, 2
      %p107 = por %p105, %p106
      %p108 = scmp.ne.s32.totalorder %s97, %s98
      %p109 = scmp.eq.s32.totalorder %s14, 0
      %p110 = por %p108, %p109
      %p111 = scmp.ne.s32.totalorder %s97, %s98
      %p112 = scmp.eq.s32.totalorder %s15, 2
      %p113 = por %p111, %p112
      %p115 = scmp.ne.s32.totalorder %s98, %s114
      %p116 = scmp.eq.s32.totalorder %s15, 0
      %p117 = por %p115, %p116
      %s118 = ssub.s32 %s16, %s35
      %s119 = ssub.s32 %s17, %s31
      %s120 = sor.u32 %s118, %s119
      %p121 = scmp.eq.s32.totalorder %s120, 0
      %s123 = sadd.s32 %s122, 1
      %s124 = scalar_select %p121, %s122, %s123
      %p127 = pneg %p121
      %p128 = scmp.eq.s32.totalorder %s9, 2
      %p129 = por %p127, %p128
      %p130 = scmp.ne.s32.totalorder %s122, %s125
      %p131 = scmp.eq.s32.totalorder %s9, 0
      %p132 = por %p130, %p131
      %p133 = scmp.ne.s32.totalorder %s122, %s125
      %p134 = scmp.eq.s32.totalorder %s14, 2
      %p135 = por %p133, %p134
      %p136 = scmp.ne.s32.totalorder %s125, %s126
      %p137 = scmp.eq.s32.totalorder %s14, 0
      %p138 = por %p136, %p137
      %p139 = scmp.ne.s32.totalorder %s125, %s126
      %p140 = scmp.eq.s32.totalorder %s15, 2
      %p141 = por %p139, %p140
      %p143 = scmp.ne.s32.totalorder %s126, %s142
      %p144 = scmp.eq.s32.totalorder %s15, 0
      %p145 = por %p143, %p144
      %p146 = scmp.le.s32.totalorder 1, %s9
      %p147 = scmp.lt.s32.totalorder %s9, 4
      %p148 = pnand %p146, %p147
      %p149 = pneg %p148
      // Predicated region
      $region9: #{transformer_encoder_layer.5} parent=5 // pred_check
        _
      $region10: #{transformer_encoder_layer.5} parent=5 // pred_check_branch
        %151 = sbr.rel (%p148) target = $region12
      $region11: #{transformer_encoder_layer.5} parent=5 // pred_region
        %s152 = ssub.s32 %s9, 1
        // Predicated region
        $region13: #{transformer_encoder_layer.5} parent=11 // pred_check
          %p153 = pneg %p56
        $region14: #{transformer_encoder_layer.5} parent=11 // pred_check_branch
          %155 = sbr.rel (%p153) target = $region16
        $region15: #{transformer_encoder_layer.5} parent=11 // pred_region
          %s156 = smul.u32 4, %s19
          %s157 = smul.u32 2, %s21
          %p158 = scmp.lt.s32.totalorder %s156, 3
          %s159 = scalar_select %p158, %s156, 3
          %p160 = scmp.lt.s32.totalorder %s157, 1
          %s161 = scalar_select %p160, %s157, 1
          %s162 = smul.addr %s159, 2
          %s163 = sadd.s32 %s161, %s162
          %s164 = smul.addr %s163, 4
          %s165 = scalar_lea.vmem %s0, %s164
          %s166 = smul.u32 4, %s19
          %s167 = smul.u32 2, %s21
        $region16: #{transformer_encoder_layer.5} parent=11 // pred_fallthru
          _
      $region12: #{transformer_encoder_layer.5} parent=5 // pred_fallthru
        _
      %p168 = scmp.lt.s32.totalorder %s9, 3
      // Predicated region
      $region17: #{transformer_encoder_layer.5} parent=5 // pred_check
        %p169 = pneg %p168
      $region18: #{transformer_encoder_layer.5} parent=5 // pred_check_branch
        %171 = sbr.rel (%p169) target = $region20
      $region19: #{transformer_encoder_layer.5} parent=5 // pred_region
        // Predicated region
        $region21: #{transformer_encoder_layer.5} parent=19 // pred_check
          %p172 = pneg %p78
        $region22: #{transformer_encoder_layer.5} parent=19 // pred_check_branch
          %174 = sbr.rel (%p172) target = $region24
        $region23: #{transformer_encoder_layer.5} parent=19 // pred_region
          %s175 = sand.u32 %s68, 1
          %s176 = sand.u32 %s68, 1
          %s177 = smul.addr %s176, 256
          %s178 = scalar_lea.vmem [#allocation3], %s177
          %s179 = smul.u32 32, %s18
          %s180 = smul.u32 2, %s17
          %s181 = smul.addr %s179, 6
          %s182 = sadd.s32 %s180, %s181
          %s183 = smul.addr %s182, 4
          %s184 = scalar_lea.vmem %s1, %s183
          // Predicated region
          $region25: #{transformer_encoder_layer.5} parent=23 // pred_check
            _
          $region26: #{transformer_encoder_layer.5} parent=23 // pred_check_branch
            %186 = sbr.rel (0) target = $region28
          $region27: #{transformer_encoder_layer.5} parent=23 // pred_region
            // Predicated region
            $region29: #{transformer_encoder_layer.5} parent=27 // pred_check
              _
            $region30: #{transformer_encoder_layer.5} parent=27 // pred_check_branch
              %188 = sbr.rel (0) target = $region32
            $region31: #{transformer_encoder_layer.5} parent=27 // pred_region
              // Predicated region
              $region44: #{transformer_encoder_layer.5} parent=31 // pred_check
                _
              $region45: #{transformer_encoder_layer.5} parent=31 // pred_check_branch
                %266 = sbr.rel (0) target = $region47
              $region46: #{transformer_encoder_layer.5} parent=31 // pred_region
                loop: start=0, step=1, limit=1
                $region48: #{transformer_encoder_layer.5} parent=46 // loop_pre_header
                  _
                $region49: #{transformer_encoder_layer.5} parent=46 // loop_header
                  %s268 = sphi 0, %s272
                  %p269 = scmp.ge.s32.totalorder %s268, 1
                  %s273 = sphi %s184, %s184
                  %s274 = sphi %s178, %s178
                $region50: #{transformer_encoder_layer.5} parent=46 // loop_header_branch
                  %271 = sbr.rel (%p269) target = $region54
                $region51: #{transformer_encoder_layer.5} parent=46 // loop_body
                  %v275 = vld [vmem:[%s273] sm:$0xff]
                  %276 = vst [vmem:[%s274] sm:$0xff] %v275
                  %v277 = vld [vmem:[%s273 + $0x18] sm:$0xff]
                  %278 = vst [vmem:[%s274 + $0x8] sm:$0xff] %v277
                  %v279 = vld [vmem:[%s273 + $0x30] sm:$0xff]
                  %280 = vst [vmem:[%s274 + $0x10] sm:$0xff] %v279
                  %v281 = vld [vmem:[%s273 + $0x48] sm:$0xff]
                  %282 = vst [vmem:[%s274 + $0x18] sm:$0xff] %v281
                  %v283 = vld [vmem:[%s273 + $0x60] sm:$0xff]
                  %284 = vst [vmem:[%s274 + $0x20] sm:$0xff] %v283
                  %v285 = vld [vmem:[%s273 + $0x78] sm:$0xff]
                  %286 = vst [vmem:[%s274 + $0x28] sm:$0xff] %v285
                  %v287 = vld [vmem:[%s273 + $0x90] sm:$0xff]
                  %288 = vst [vmem:[%s274 + $0x30] sm:$0xff] %v287
                  %v289 = vld [vmem:[%s273 + $0xa8] sm:$0xff]
                  %290 = vst [vmem:[%s274 + $0x38] sm:$0xff] %v289
                  %v291 = vld [vmem:[%s273 + $0xc0] sm:$0xff]
                  %292 = vst [vmem:[%s274 + $0x40] sm:$0xff] %v291
                  %v293 = vld [vmem:[%s273 + $0xd8] sm:$0xff]
                  %294 = vst [vmem:[%s274 + $0x48] sm:$0xff] %v293
                  %v295 = vld [vmem:[%s273 + $0xf0] sm:$0xff]
                  %296 = vst [vmem:[%s274 + $0x50] sm:$0xff] %v295
                  %v297 = vld [vmem:[%s273 + $0x108] sm:$0xff]
                  %298 = vst [vmem:[%s274 + $0x58] sm:$0xff] %v297
                  %v299 = vld [vmem:[%s273 + $0x120] sm:$0xff]
                  %300 = vst [vmem:[%s274 + $0x60] sm:$0xff] %v299
                  %v301 = vld [vmem:[%s273 + $0x138] sm:$0xff]
                  %302 = vst [vmem:[%s274 + $0x68] sm:$0xff] %v301
                  %v303 = vld [vmem:[%s273 + $0x150] sm:$0xff]
                  %304 = vst [vmem:[%s274 + $0x70] sm:$0xff] %v303
                  %v305 = vld [vmem:[%s273 + $0x168] sm:$0xff]
                  %306 = vst [vmem:[%s274 + $0x78] sm:$0xff] %v305
                  %v307 = vld [vmem:[%s273 + $0x180] sm:$0xff]
                  %308 = vst [vmem:[%s274 + $0x80] sm:$0xff] %v307
                  %v309 = vld [vmem:[%s273 + $0x198] sm:$0xff]
                  %310 = vst [vmem:[%s274 + $0x88] sm:$0xff] %v309
                  %v311 = vld [vmem:[%s273 + $0x1b0] sm:$0xff]
                  %312 = vst [vmem:[%s274 + $0x90] sm:$0xff] %v311
                  %v313 = vld [vmem:[%s273 + $0x1c8] sm:$0xff]
                  %314 = vst [vmem:[%s274 + $0x98] sm:$0xff] %v313
                  %v315 = vld [vmem:[%s273 + $0x1e0] sm:$0xff]
                  %316 = vst [vmem:[%s274 + $0xa0] sm:$0xff] %v315
                  %v317 = vld [vmem:[%s273 + $0x1f8] sm:$0xff]
                  %318 = vst [vmem:[%s274 + $0xa8] sm:$0xff] %v317
                  %v319 = vld [vmem:[%s273 + $0x210] sm:$0xff]
                  %320 = vst [vmem:[%s274 + $0xb0] sm:$0xff] %v319
                  %v321 = vld [vmem:[%s273 + $0x228] sm:$0xff]
                  %322 = vst [vmem:[%s274 + $0xb8] sm:$0xff] %v321
                  %v323 = vld [vmem:[%s273 + $0x240] sm:$0xff]
                  %324 = vst [vmem:[%s274 + $0xc0] sm:$0xff] %v323
                  %v325 = vld [vmem:[%s273 + $0x258] sm:$0xff]
                  %326 = vst [vmem:[%s274 + $0xc8] sm:$0xff] %v325
                  %v327 = vld [vmem:[%s273 + $0x270] sm:$0xff]
                  %328 = vst [vmem:[%s274 + $0xd0] sm:$0xff] %v327
                  %v329 = vld [vmem:[%s273 + $0x288] sm:$0xff]
                  %330 = vst [vmem:[%s274 + $0xd8] sm:$0xff] %v329
                  %v331 = vld [vmem:[%s273 + $0x2a0] sm:$0xff]
                  %332 = vst [vmem:[%s274 + $0xe0] sm:$0xff] %v331
                  %v333 = vld [vmem:[%s273 + $0x2b8] sm:$0xff]
                  %334 = vst [vmem:[%s274 + $0xe8] sm:$0xff] %v333
                  %v335 = vld [vmem:[%s273 + $0x2d0] sm:$0xff]
                  %336 = vst [vmem:[%s274 + $0xf0] sm:$0xff] %v335
                  %v337 = vld [vmem:[%s273 + $0x2e8] sm:$0xff]
                  %338 = vst [vmem:[%s274 + $0xf8] sm:$0xff] %v337
                $region52: #{transformer_encoder_layer.5} parent=46 // loop_footer
                  %s272 = sadd.s32 1, %s268
                $region53: #{transformer_encoder_layer.5} parent=46 // loop_footer_branch
                  %267 = sbr.rel target = $region49
                $region54: #{transformer_encoder_layer.5} parent=46 // loop_exit
                  _
              $region47: #{transformer_encoder_layer.5} parent=31 // pred_fallthru
                _
              // Predicated region
              $region55: #{transformer_encoder_layer.5} parent=31 // pred_check
                _
              $region56: #{transformer_encoder_layer.5} parent=31 // pred_check_branch
                %340 = sbr.rel target = $region58
              $region57: #{transformer_encoder_layer.5} parent=31 // pred_region
                _
              $region58: #{transformer_encoder_layer.5} parent=31 // pred_fallthru
                _
            $region32: #{transformer_encoder_layer.5} parent=27 // pred_fallthru
              _
            // Predicated region
            $region33: #{transformer_encoder_layer.5} parent=27 // pred_check
              _
            $region34: #{transformer_encoder_layer.5} parent=27 // pred_check_branch
              %190 = sbr.rel target = $region36
            $region35: #{transformer_encoder_layer.5} parent=27 // pred_region
              %s192 = ssub.s32 256, 1
              loop: start=0, step=1, limit=1
              $region37: #{transformer_encoder_layer.5} parent=35 // loop_pre_header
                _
              $region38: #{transformer_encoder_layer.5} parent=35 // loop_header
                %s194 = sphi 0, %s198
                %p195 = scmp.ge.s32.totalorder %s194, 1
                %s199 = sphi %s184, %s184
                %s200 = sphi %s178, %s178
              $region39: #{transformer_encoder_layer.5} parent=35 // loop_header_branch
                %197 = sbr.rel (%p195) target = $region43
              $region40: #{transformer_encoder_layer.5} parent=35 // loop_body
                %v201 = vld [vmem:[%s199] sm:%s192]
                %202 = vst [vmem:[%s200] sm:%s192] %v201
                %v203 = vld [vmem:[%s199 + $0x18] sm:%s192]
                %204 = vst [vmem:[%s200 + $0x8] sm:%s192] %v203
                %v205 = vld [vmem:[%s199 + $0x30] sm:%s192]
                %206 = vst [vmem:[%s200 + $0x10] sm:%s192] %v205
                %v207 = vld [vmem:[%s199 + $0x48] sm:%s192]
                %208 = vst [vmem:[%s200 + $0x18] sm:%s192] %v207
                %v209 = vld [vmem:[%s199 + $0x60] sm:%s192]
                %210 = vst [vmem:[%s200 + $0x20] sm:%s192] %v209
                %v211 = vld [vmem:[%s199 + $0x78] sm:%s192]
                %212 = vst [vmem:[%s200 + $0x28] sm:%s192] %v211
                %v213 = vld [vmem:[%s199 + $0x90] sm:%s192]
                %214 = vst [vmem:[%s200 + $0x30] sm:%s192] %v213
                %v215 = vld [vmem:[%s199 + $0xa8] sm:%s192]
                %216 = vst [vmem:[%s200 + $0x38] sm:%s192] %v215
                %v217 = vld [vmem:[%s199 + $0xc0] sm:%s192]
                %218 = vst [vmem:[%s200 + $0x40] sm:%s192] %v217
                %v219 = vld [vmem:[%s199 + $0xd8] sm:%s192]
                %220 = vst [vmem:[%s200 + $0x48] sm:%s192] %v219
                %v221 = vld [vmem:[%s199 + $0xf0] sm:%s192]
                %222 = vst [vmem:[%s200 + $0x50] sm:%s192] %v221
                %v223 = vld [vmem:[%s199 + $0x108] sm:%s192]
                %224 = vst [vmem:[%s200 + $0x58] sm:%s192] %v223
                %v225 = vld [vmem:[%s199 + $0x120] sm:%s192]
                %226 = vst [vmem:[%s200 + $0x60] sm:%s192] %v225
                %v227 = vld [vmem:[%s199 + $0x138] sm:%s192]
                %228 = vst [vmem:[%s200 + $0x68] sm:%s192] %v227
                %v229 = vld [vmem:[%s199 + $0x150] sm:%s192]
                %230 = vst [vmem:[%s200 + $0x70] sm:%s192] %v229
                %v231 = vld [vmem:[%s199 + $0x168] sm:%s192]
                %232 = vst [vmem:[%s200 + $0x78] sm:%s192] %v231
                %v233 = vld [vmem:[%s199 + $0x180] sm:%s192]
                %234 = vst [vmem:[%s200 + $0x80] sm:%s192] %v233
                %v235 = vld [vmem:[%s199 + $0x198] sm:%s192]
                %236 = vst [vmem:[%s200 + $0x88] sm:%s192] %v235
                %v237 = vld [vmem:[%s199 + $0x1b0] sm:%s192]
                %238 = vst [vmem:[%s200 + $0x90] sm:%s192] %v237
                %v239 = vld [vmem:[%s199 + $0x1c8] sm:%s192]
                %240 = vst [vmem:[%s200 + $0x98] sm:%s192] %v239
                %v241 = vld [vmem:[%s199 + $0x1e0] sm:%s192]
                %242 = vst [vmem:[%s200 + $0xa0] sm:%s192] %v241
                %v243 = vld [vmem:[%s199 + $0x1f8] sm:%s192]
                %244 = vst [vmem:[%s200 + $0xa8] sm:%s192] %v243
                %v245 = vld [vmem:[%s199 + $0x210] sm:%s192]
                %246 = vst [vmem:[%s200 + $0xb0] sm:%s192] %v245
                %v247 = vld [vmem:[%s199 + $0x228] sm:%s192]
                %248 = vst [vmem:[%s200 + $0xb8] sm:%s192] %v247
                %v249 = vld [vmem:[%s199 + $0x240] sm:%s192]
                %250 = vst [vmem:[%s200 + $0xc0] sm:%s192] %v249
                %v251 = vld [vmem:[%s199 + $0x258] sm:%s192]
                %252 = vst [vmem:[%s200 + $0xc8] sm:%s192] %v251
                %v253 = vld [vmem:[%s199 + $0x270] sm:%s192]
                %254 = vst [vmem:[%s200 + $0xd0] sm:%s192] %v253
                %v255 = vld [vmem:[%s199 + $0x288] sm:%s192]
                %256 = vst [vmem:[%s200 + $0xd8] sm:%s192] %v255
                %v257 = vld [vmem:[%s199 + $0x2a0] sm:%s192]
                %258 = vst [vmem:[%s200 + $0xe0] sm:%s192] %v257
                %v259 = vld [vmem:[%s199 + $0x2b8] sm:%s192]
                %260 = vst [vmem:[%s200 + $0xe8] sm:%s192] %v259
                %v261 = vld [vmem:[%s199 + $0x2d0] sm:%s192]
                %262 = vst [vmem:[%s200 + $0xf0] sm:%s192] %v261
                %v263 = vld [vmem:[%s199 + $0x2e8] sm:%s192]
                %264 = vst [vmem:[%s200 + $0xf8] sm:%s192] %v263
              $region41: #{transformer_encoder_layer.5} parent=35 // loop_footer
                %s198 = sadd.s32 1, %s194
              $region42: #{transformer_encoder_layer.5} parent=35 // loop_footer_branch
                %193 = sbr.rel target = $region38
              $region43: #{transformer_encoder_layer.5} parent=35 // loop_exit
                _
            $region36: #{transformer_encoder_layer.5} parent=27 // pred_fallthru
              _
          $region28: #{transformer_encoder_layer.5} parent=23 // pred_fallthru
            _
          %341 = vnop
        $region24: #{transformer_encoder_layer.5} parent=19 // pred_fallthru
          _
        // Predicated region
        $region59: #{transformer_encoder_layer.5} parent=19 // pred_check
          %p342 = pneg %p104
        $region60: #{transformer_encoder_layer.5} parent=19 // pred_check_branch
          %344 = sbr.rel (%p342) target = $region62
        $region61: #{transformer_encoder_layer.5} parent=19 // pred_region
          %s345 = smul.u32 2, %s17
          %p346 = scmp.lt.s32.totalorder %s345, 5
          %s347 = scalar_select %p346, %s345, 5
          %s348 = scalar_lea.vmem %s2, %s347
          %s349 = smul.u32 2, %s17
        $region62: #{transformer_encoder_layer.5} parent=19 // pred_fallthru
          _
      $region20: #{transformer_encoder_layer.5} parent=5 // pred_fallthru
        _
      %p350 = scmp.le.s32.totalorder 1, %s9
      %p351 = scmp.lt.s32.totalorder %s9, 4
      %p352 = pnand %p350, %p351
      %p353 = pneg %p352
      // Predicated region
      $region63: #{transformer_encoder_layer.5} parent=5 // pred_check
        _
      $region64: #{transformer_encoder_layer.5} parent=5 // pred_check_branch
        %355 = sbr.rel (%p352) target = $region66
      $region65: #{transformer_encoder_layer.5} parent=5 // pred_region
        %s356 = ssub.s32 %s9, 1
        %s357 = sand.u32 %s71, 1
        %s358 = sand.u32 %s71, 1
        %s359 = smul.addr %s358, 256
        %s360 = scalar_lea.vmem [#allocation3], %s359
        // Predicated region
        $region67: #{transformer_encoder_layer.5} parent=65 // pred_check
          %p361 = pneg %p84
        $region68: #{transformer_encoder_layer.5} parent=65 // pred_check_branch
          %363 = sbr.rel (%p361) target = $region70
        $region69: #{transformer_encoder_layer.5} parent=65 // pred_region
          _
        $region70: #{transformer_encoder_layer.5} parent=65 // pred_fallthru
          _
        %s364 = smul.u32 4, %s19
        %s365 = smul.u32 2, %s21
        %p366 = scmp.lt.s32.totalorder %s364, 3
        %s367 = scalar_select %p366, %s364, 3
        %p368 = scmp.lt.s32.totalorder %s365, 1
        %s369 = scalar_select %p368, %s365, 1
        %s370 = smul.addr %s367, 2
        %s371 = sadd.s32 %s369, %s370
        %s372 = smul.addr %s371, 4
        %s373 = scalar_lea.vmem %s0, %s372
        %p374 = pneg %p56
        %p375 = pneg %p53
        %s376 = sand.u32 %s71, 1
        %s377 = sand.u32 %s71, 1
        %s378 = smul.addr %s377, 256
        %s379 = scalar_lea.vmem [#allocation3], %s378
        %p380 = pneg %p84
        %p381 = pneg %p81
        %s382 = smul.u32 2, %s20
        %p383 = scmp.lt.s32.totalorder %s382, 5
        %s384 = scalar_select %p383, %s382, 5
        %s385 = scalar_lea.vmem %s2, %s384
        %p386 = pneg %p110
        %p387 = pneg %p107
        %p388 = pneg %p138
        %p389 = pneg %p135
        %s390 = sand.u32 %s125, 1
        %s391 = sand.u32 %s125, 1
        %s392 = smul.addr %s391, 32
        %s393 = scalar_lea.vmem [#allocation4], %s392
        %s394 = smul.u32 4, %s19
        %s395 = smul.u32 2, %s21
        %p396 = scmp.lt.s32.totalorder %s394, 3
        %s397 = scalar_select %p396, %s394, 3
        %p398 = scmp.lt.s32.totalorder %s395, 1
        %s399 = scalar_select %p398, %s395, 1
        %s400 = smul.addr %s397, 2
        %s401 = sadd.s32 %s399, %s400
        %s402 = smul.addr %s401, 4
        %s403 = scalar_lea.vmem %s0, %s402
        %s404 = smul.u32 4, %s19
        %s405 = smul.u32 2, %s21
        %s406 = smul.u32 32, %s21
        %s407 = smul.u32 2, %s20
        %s408 = smul.u32 2, %s20
        %p409 = scmp.lt.s32.totalorder %s408, 5
        %s410 = scalar_select %p409, %s408, 5
        %s411 = scalar_lea.vmem %s2, %s410
        %s412 = smul.u32 2, %s20
        %s413 = smul.u32 4, %s19
        %s414 = smul.u32 2, %s20
        %p415 = scmp.eq.s32.totalorder %s21, 0
        // Predicated region
        $region71: #{transformer_encoder_layer.5} parent=65 // pred_check
          %p416 = pneg %p415
        $region72: #{transformer_encoder_layer.5} parent=65 // pred_check_branch
          %418 = sbr.rel (%p416) target = $region74
        $region73: #{transformer_encoder_layer.5} parent=65 // pred_region
          %419 = vst [vmem:[#allocation2] sm:$0xff] 0.0
          %420 = vst [vmem:[#allocation2 + $0x8] sm:$0xff] 0.0
          %421 = vst [vmem:[#allocation2 + $0x10] sm:$0xff] 0.0
          %422 = vst [vmem:[#allocation2 + $0x18] sm:$0xff] 0.0
          %423 = vst [vmem:[#allocation2 + $0x20] sm:$0xff] 0.0
          %424 = vst [vmem:[#allocation2 + $0x28] sm:$0xff] 0.0
          %425 = vst [vmem:[#allocation2 + $0x30] sm:$0xff] 0.0
          %426 = vst [vmem:[#allocation2 + $0x38] sm:$0xff] 0.0
        $region74: #{transformer_encoder_layer.5} parent=65 // pred_fallthru
          _
        %v427 = vld [vmem:[#allocation2] sm:$0xff]
        %v428 = vld [vmem:[#allocation2 + $0x8] sm:$0xff]
        %v429 = vld [vmem:[#allocation2 + $0x10] sm:$0xff]
        %v430 = vld [vmem:[#allocation2 + $0x18] sm:$0xff]
        %v431 = vld [vmem:[#allocation2 + $0x20] sm:$0xff]
        %v432 = vld [vmem:[#allocation2 + $0x28] sm:$0xff]
        %v433 = vld [vmem:[#allocation2 + $0x30] sm:$0xff]
        %v434 = vld [vmem:[#allocation2 + $0x38] sm:$0xff]
        %v435 = vld [vmem:[%s403] sm:$0xff]
        %v436 = vld [vmem:[%s403 + $0x8] sm:$0xff]
        %v437 = vld [vmem:[%s403 + $0x10] sm:$0xff]
        %v438 = vld [vmem:[%s403 + $0x18] sm:$0xff]
        %v439 = vld [vmem:[%s360] sm:$0xff]
        %v440 = vld [vmem:[%s360 + $0x8] sm:$0xff]
        %v441 = vld [vmem:[%s360 + $0x10] sm:$0xff]
        %v442 = vld [vmem:[%s360 + $0x18] sm:$0xff]
        %v443 = vld [vmem:[%s360 + $0x20] sm:$0xff]
        %v444 = vld [vmem:[%s360 + $0x28] sm:$0xff]
        %v445 = vld [vmem:[%s360 + $0x30] sm:$0xff]
        %v446 = vld [vmem:[%s360 + $0x38] sm:$0xff]
        %v447 = vld [vmem:[%s360 + $0x40] sm:$0xff]
        %v448 = vld [vmem:[%s360 + $0x48] sm:$0xff]
        %v449 = vld [vmem:[%s360 + $0x50] sm:$0xff]
        %v450 = vld [vmem:[%s360 + $0x58] sm:$0xff]
        %v451 = vld [vmem:[%s360 + $0x60] sm:$0xff]
        %v452 = vld [vmem:[%s360 + $0x68] sm:$0xff]
        %v453 = vld [vmem:[%s360 + $0x70] sm:$0xff]
        %v454 = vld [vmem:[%s360 + $0x78] sm:$0xff]
        %v455 = vld [vmem:[%s360 + $0x80] sm:$0xff]
        %v456 = vld [vmem:[%s360 + $0x88] sm:$0xff]
        %v457 = vld [vmem:[%s360 + $0x90] sm:$0xff]
        %v458 = vld [vmem:[%s360 + $0x98] sm:$0xff]
        %v459 = vld [vmem:[%s360 + $0xa0] sm:$0xff]
        %v460 = vld [vmem:[%s360 + $0xa8] sm:$0xff]
        %v461 = vld [vmem:[%s360 + $0xb0] sm:$0xff]
        %v462 = vld [vmem:[%s360 + $0xb8] sm:$0xff]
        %v463 = vld [vmem:[%s360 + $0xc0] sm:$0xff]
        %v464 = vld [vmem:[%s360 + $0xc8] sm:$0xff]
        %v465 = vld [vmem:[%s360 + $0xd0] sm:$0xff]
        %v466 = vld [vmem:[%s360 + $0xd8] sm:$0xff]
        %v467 = vld [vmem:[%s360 + $0xe0] sm:$0xff]
        %v468 = vld [vmem:[%s360 + $0xe8] sm:$0xff]
        %v469 = vld [vmem:[%s360 + $0xf0] sm:$0xff]
        %v470 = vld [vmem:[%s360 + $0xf8] sm:$0xff]
        %v475 = vunpack.c.l.b16 %v435
        %v476 = vunpack.c.h.b16 %v435
        %v477 = vunpack.c.l.b16 %v436
        %v478 = vunpack.c.h.b16 %v436
        %v479 = vunpack.c.l.b16 %v437
        %v480 = vunpack.c.h.b16 %v437
        %v481 = vunpack.c.l.b16 %v438
        %v482 = vunpack.c.h.b16 %v438
        %v483 = vpack.c.b16 %v477, %v475
        %v484 = vpack.c.b16 %v478, %v476
        %v485 = vpack.c.b16 %v481, %v479
        %v486 = vpack.c.b16 %v482, %v480
        %v523 = vunpack.c.l.b16 %v439
        %v524 = vunpack.c.h.b16 %v439
        %v525 = vunpack.c.l.b16 %v440
        %v526 = vunpack.c.h.b16 %v440
        %v527 = vunpack.c.l.b16 %v441
        %v528 = vunpack.c.h.b16 %v441
        %v529 = vunpack.c.l.b16 %v442
        %v530 = vunpack.c.h.b16 %v442
        %v531 = vunpack.c.l.b16 %v443
        %v532 = vunpack.c.h.b16 %v443
        %v533 = vunpack.c.l.b16 %v444
        %v534 = vunpack.c.h.b16 %v444
        %v535 = vunpack.c.l.b16 %v445
        %v536 = vunpack.c.h.b16 %v445
        %v537 = vunpack.c.l.b16 %v446
        %v538 = vunpack.c.h.b16 %v446
        %v539 = vunpack.c.l.b16 %v447
        %v540 = vunpack.c.h.b16 %v447
        %v541 = vunpack.c.l.b16 %v448
        %v542 = vunpack.c.h.b16 %v448
        %v543 = vunpack.c.l.b16 %v449
        %v544 = vunpack.c.h.b16 %v449
        %v545 = vunpack.c.l.b16 %v450
        %v546 = vunpack.c.h.b16 %v450
        %v547 = vunpack.c.l.b16 %v451
        %v548 = vunpack.c.h.b16 %v451
        %v549 = vunpack.c.l.b16 %v452
        %v550 = vunpack.c.h.b16 %v452
        %v551 = vunpack.c.l.b16 %v453
        %v552 = vunpack.c.h.b16 %v453
        %v553 = vunpack.c.l.b16 %v454
        %v554 = vunpack.c.h.b16 %v454
        %v555 = vunpack.c.l.b16 %v455
        %v556 = vunpack.c.h.b16 %v455
        %v557 = vunpack.c.l.b16 %v456
        %v558 = vunpack.c.h.b16 %v456
        %v559 = vunpack.c.l.b16 %v457
        %v560 = vunpack.c.h.b16 %v457
        %v561 = vunpack.c.l.b16 %v458
        %v562 = vunpack.c.h.b16 %v458
        %v563 = vunpack.c.l.b16 %v459
        %v564 = vunpack.c.h.b16 %v459
        %v565 = vunpack.c.l.b16 %v460
        %v566 = vunpack.c.h.b16 %v460
        %v567 = vunpack.c.l.b16 %v461
        %v568 = vunpack.c.h.b16 %v461
        %v569 = vunpack.c.l.b16 %v462
        %v570 = vunpack.c.h.b16 %v462
        %v571 = vunpack.c.l.b16 %v463
        %v572 = vunpack.c.h.b16 %v463
        %v573 = vunpack.c.l.b16 %v464
        %v574 = vunpack.c.h.b16 %v464
        %v575 = vunpack.c.l.b16 %v465
        %v576 = vunpack.c.h.b16 %v465
        %v577 = vunpack.c.l.b16 %v466
        %v578 = vunpack.c.h.b16 %v466
        %v579 = vunpack.c.l.b16 %v467
        %v580 = vunpack.c.h.b16 %v467
        %v581 = vunpack.c.l.b16 %v468
        %v582 = vunpack.c.h.b16 %v468
        %v583 = vunpack.c.l.b16 %v469
        %v584 = vunpack.c.h.b16 %v469
        %v585 = vunpack.c.l.b16 %v470
        %v586 = vunpack.c.h.b16 %v470
        %v587 = vpack.c.b16 %v525, %v523
        %v588 = vpack.c.b16 %v526, %v524
        %v589 = vpack.c.b16 %v529, %v527
        %v590 = vpack.c.b16 %v530, %v528
        %v591 = vpack.c.b16 %v533, %v531
        %v592 = vpack.c.b16 %v534, %v532
        %v593 = vpack.c.b16 %v537, %v535
        %v594 = vpack.c.b16 %v538, %v536
        %v595 = vpack.c.b16 %v541, %v539
        %v596 = vpack.c.b16 %v542, %v540
        %v597 = vpack.c.b16 %v545, %v543
        %v598 = vpack.c.b16 %v546, %v544
        %v599 = vpack.c.b16 %v549, %v547
        %v600 = vpack.c.b16 %v550, %v548
        %v601 = vpack.c.b16 %v553, %v551
        %v602 = vpack.c.b16 %v554, %v552
        %v603 = vpack.c.b16 %v557, %v555
        %v604 = vpack.c.b16 %v558, %v556
        %v605 = vpack.c.b16 %v561, %v559
        %v606 = vpack.c.b16 %v562, %v560
        %v607 = vpack.c.b16 %v565, %v563
        %v608 = vpack.c.b16 %v566, %v564
        %v609 = vpack.c.b16 %v569, %v567
        %v610 = vpack.c.b16 %v570, %v568
        %v611 = vpack.c.b16 %v573, %v571
        %v612 = vpack.c.b16 %v574, %v572
        %v613 = vpack.c.b16 %v577, %v575
        %v614 = vpack.c.b16 %v578, %v576
        %v615 = vpack.c.b16 %v581, %v579
        %v616 = vpack.c.b16 %v582, %v580
        %v617 = vpack.c.b16 %v585, %v583
        %v618 = vpack.c.b16 %v586, %v584
        %651 = vmatpush.bf16.msra.mxu0 %v601
        %652 = vmatpush.bf16.msra.mxu0 %v599
        %653 = vmatpush.bf16.msra.mxu0 %v597
        %654 = vmatpush.bf16.msra.mxu0 %v595
        %655 = vmatpush.bf16.msra.mxu0 %v593
        %656 = vmatpush.bf16.msra.mxu0 %v591
        %657 = vmatpush.bf16.msra.mxu0 %v589
        %658 = vmatpush.bf16.msra.mxu0 %v587
        %659 = vmatmul.bf16.gmra.mxu0 %v483
        %v660 = vpop.f32.mrf.mxu0
        %v661 = vadd.f32 0.0, %v660
        %v662 = vpop.f32.mrf.mxu0
        %v663 = vadd.f32 0.0, %v662
        %664 = vmatmul.bf16.gmra.mxu0 %v485
        %v665 = vpop.f32.mrf.mxu0
        %v666 = vadd.f32 0.0, %v665
        %v667 = vpop.f32.mrf.mxu0
        %v668 = vadd.f32 0.0, %v667
        %669 = vdwg.mxu0
        %670 = vmatpush.bf16.msra.mxu0 %v617
        %671 = vmatpush.bf16.msra.mxu0 %v615
        %672 = vmatpush.bf16.msra.mxu0 %v613
        %673 = vmatpush.bf16.msra.mxu0 %v611
        %674 = vmatpush.bf16.msra.mxu0 %v609
        %675 = vmatpush.bf16.msra.mxu0 %v607
        %676 = vmatpush.bf16.msra.mxu0 %v605
        %677 = vmatpush.bf16.msra.mxu0 %v603
        %678 = vmatmul.bf16.gmra.mxu0 %v484
        %v679 = vpop.f32.mrf.mxu0
        %v680 = vadd.f32 %v661, %v679
        %v681 = vpop.f32.mrf.mxu0
        %v682 = vadd.f32 %v663, %v681
        %683 = vmatmul.bf16.gmra.mxu0 %v486
        %v684 = vpop.f32.mrf.mxu0
        %v685 = vadd.f32 %v666, %v684
        %v686 = vpop.f32.mrf.mxu0
        %v687 = vadd.f32 %v668, %v686
        %688 = vdwg.mxu0
        %689 = vmatpush.bf16.msra.mxu0 %v602
        %690 = vmatpush.bf16.msra.mxu0 %v600
        %691 = vmatpush.bf16.msra.mxu0 %v598
        %692 = vmatpush.bf16.msra.mxu0 %v596
        %693 = vmatpush.bf16.msra.mxu0 %v594
        %694 = vmatpush.bf16.msra.mxu0 %v592
        %695 = vmatpush.bf16.msra.mxu0 %v590
        %696 = vmatpush.bf16.msra.mxu0 %v588
        %697 = vmatmul.bf16.gmra.mxu0 %v483
        %v698 = vpop.f32.mrf.mxu0
        %v699 = vadd.f32 0.0, %v698
        %v700 = vpop.f32.mrf.mxu0
        %v701 = vadd.f32 0.0, %v700
        %702 = vmatmul.bf16.gmra.mxu0 %v485
        %v703 = vpop.f32.mrf.mxu0
        %v704 = vadd.f32 0.0, %v703
        %v705 = vpop.f32.mrf.mxu0
        %v706 = vadd.f32 0.0, %v705
        %707 = vdwg.mxu0
        %708 = vmatpush.bf16.msra.mxu0 %v618
        %709 = vmatpush.bf16.msra.mxu0 %v616
        %710 = vmatpush.bf16.msra.mxu0 %v614
        %711 = vmatpush.bf16.msra.mxu0 %v612
        %712 = vmatpush.bf16.msra.mxu0 %v610
        %713 = vmatpush.bf16.msra.mxu0 %v608
        %714 = vmatpush.bf16.msra.mxu0 %v606
        %715 = vmatpush.bf16.msra.mxu0 %v604
        %716 = vmatmul.bf16.gmra.mxu0 %v484
        %v717 = vpop.f32.mrf.mxu0
        %v718 = vadd.f32 %v699, %v717
        %v719 = vpop.f32.mrf.mxu0
        %v720 = vadd.f32 %v701, %v719
        %721 = vmatmul.bf16.gmra.mxu0 %v486
        %v722 = vpop.f32.mrf.mxu0
        %v723 = vadd.f32 %v704, %v722
        %v724 = vpop.f32.mrf.mxu0
        %v725 = vadd.f32 %v706, %v724
        %726 = vdwg.mxu0
        %v727 = vadd.f32 %v427, %v680
        %v728 = vadd.f32 %v428, %v718
        %v729 = vadd.f32 %v429, %v682
        %v730 = vadd.f32 %v430, %v720
        %v731 = vadd.f32 %v431, %v685
        %v732 = vadd.f32 %v432, %v723
        %v733 = vadd.f32 %v433, %v687
        %v734 = vadd.f32 %v434, %v725
        %735 = vst [vmem:[#allocation2] sm:$0xff] %v727
        %736 = vst [vmem:[#allocation2 + $0x8] sm:$0xff] %v728
        %737 = vst [vmem:[#allocation2 + $0x10] sm:$0xff] %v729
        %738 = vst [vmem:[#allocation2 + $0x18] sm:$0xff] %v730
        %739 = vst [vmem:[#allocation2 + $0x20] sm:$0xff] %v731
        %740 = vst [vmem:[#allocation2 + $0x28] sm:$0xff] %v732
        %741 = vst [vmem:[#allocation2 + $0x30] sm:$0xff] %v733
        %742 = vst [vmem:[#allocation2 + $0x38] sm:$0xff] %v734
        // Predicated region
        $region75: #{transformer_encoder_layer.5} parent=65 // pred_check
          %p743 = pneg %p415
        $region76: #{transformer_encoder_layer.5} parent=65 // pred_check_branch
          %745 = sbr.rel (%p743) target = $region78
        $region77: #{transformer_encoder_layer.5} parent=65 // pred_region
          %v746 = vld [vmem:[#allocation2] sm:$0xff]
          %v747 = vld [vmem:[#allocation2 + $0x8] sm:$0xff]
          %v748 = vld [vmem:[#allocation2 + $0x10] sm:$0xff]
          %v749 = vld [vmem:[#allocation2 + $0x18] sm:$0xff]
          %v750 = vld [vmem:[#allocation2 + $0x20] sm:$0xff]
          %v751 = vld [vmem:[#allocation2 + $0x28] sm:$0xff]
          %v752 = vld [vmem:[#allocation2 + $0x30] sm:$0xff]
          %v753 = vld [vmem:[#allocation2 + $0x38] sm:$0xff]
          %v754 = vld [vmem:[%s411] sm:$0x3]
          %v756 = vperm.slane %v754, 0
          %v757 = vperm.slane %v754, 1
          %v760 = vadd.f32 %v746, %v756
          %v761 = vadd.f32 %v747, %v757
          %v762 = vadd.f32 %v748, %v756
          %v763 = vadd.f32 %v749, %v757
          %v764 = vadd.f32 %v750, %v756
          %v765 = vadd.f32 %v751, %v757
          %v766 = vadd.f32 %v752, %v756
          %v767 = vadd.f32 %v753, %v757
          %v768 = vpack.c.bf16 %v761, %v760
          %v769 = vpack.c.bf16 %v763, %v762
          %v770 = vpack.c.bf16 %v765, %v764
          %v771 = vpack.c.bf16 %v767, %v766
          %772 = vst [vmem:[%s393] sm:$0xff] %v768
          %773 = vst [vmem:[%s393 + $0x8] sm:$0xff] %v769
          %774 = vst [vmem:[%s393 + $0x10] sm:$0xff] %v770
          %775 = vst [vmem:[%s393 + $0x18] sm:$0xff] %v771
        $region78: #{transformer_encoder_layer.5} parent=65 // pred_fallthru
          _
        %s776 = sand.u32 %s125, 1
        %s777 = sand.u32 %s125, 1
        %s778 = smul.addr %s777, 32
        %s779 = scalar_lea.vmem [#allocation4], %s778
        // Predicated region
        $region79: #{transformer_encoder_layer.5} parent=65 // pred_check
          %p780 = pneg %p135
        $region80: #{transformer_encoder_layer.5} parent=65 // pred_check_branch
          %782 = sbr.rel (%p780) target = $region82
        $region81: #{transformer_encoder_layer.5} parent=65 // pred_region
          %s783 = smul.u32 4, %s19
          %s784 = smul.u32 2, %s20
          %s785 = smul.addr %s783, 6
          %s786 = sadd.s32 %s784, %s785
          %s787 = smul.addr %s786, 4
          %s788 = scalar_lea.vmem %s3, %s787
          // Predicated region
          $region83: #{transformer_encoder_layer.5} parent=81 // pred_check
            _
          $region84: #{transformer_encoder_layer.5} parent=81 // pred_check_branch
            %790 = sbr.rel (0) target = $region86
          $region85: #{transformer_encoder_layer.5} parent=81 // pred_region
            // Predicated region
            $region87: #{transformer_encoder_layer.5} parent=85 // pred_check
              _
            $region88: #{transformer_encoder_layer.5} parent=85 // pred_check_branch
              %792 = sbr.rel (0) target = $region90
            $region89: #{transformer_encoder_layer.5} parent=85 // pred_region
              // Predicated region
              $region102: #{transformer_encoder_layer.5} parent=89 // pred_check
                _
              $region103: #{transformer_encoder_layer.5} parent=89 // pred_check_branch
                %814 = sbr.rel (0) target = $region105
              $region104: #{transformer_encoder_layer.5} parent=89 // pred_region
                loop: start=0, step=1, limit=1
                $region106: #{transformer_encoder_layer.5} parent=104 // loop_pre_header
                  _
                $region107: #{transformer_encoder_layer.5} parent=104 // loop_header
                  %s816 = sphi 0, %s820
                  %p817 = scmp.ge.s32.totalorder %s816, 1
                  %s821 = sphi %s779, %s779
                  %s822 = sphi %s788, %s788
                $region108: #{transformer_encoder_layer.5} parent=104 // loop_header_branch
                  %819 = sbr.rel (%p817) target = $region112
                $region109: #{transformer_encoder_layer.5} parent=104 // loop_body
                  %v823 = vld [vmem:[%s821] sm:$0xff]
                  %824 = vst [vmem:[%s822] sm:$0xff] %v823
                  %v825 = vld [vmem:[%s821 + $0x8] sm:$0xff]
                  %826 = vst [vmem:[%s822 + $0x18] sm:$0xff] %v825
                  %v827 = vld [vmem:[%s821 + $0x10] sm:$0xff]
                  %828 = vst [vmem:[%s822 + $0x30] sm:$0xff] %v827
                  %v829 = vld [vmem:[%s821 + $0x18] sm:$0xff]
                  %830 = vst [vmem:[%s822 + $0x48] sm:$0xff] %v829
                $region110: #{transformer_encoder_layer.5} parent=104 // loop_footer
                  %s820 = sadd.s32 1, %s816
                $region111: #{transformer_encoder_layer.5} parent=104 // loop_footer_branch
                  %815 = sbr.rel target = $region107
                $region112: #{transformer_encoder_layer.5} parent=104 // loop_exit
                  _
              $region105: #{transformer_encoder_layer.5} parent=89 // pred_fallthru
                _
              // Predicated region
              $region113: #{transformer_encoder_layer.5} parent=89 // pred_check
                _
              $region114: #{transformer_encoder_layer.5} parent=89 // pred_check_branch
                %832 = sbr.rel target = $region116
              $region115: #{transformer_encoder_layer.5} parent=89 // pred_region
                _
              $region116: #{transformer_encoder_layer.5} parent=89 // pred_fallthru
                _
            $region90: #{transformer_encoder_layer.5} parent=85 // pred_fallthru
              _
            // Predicated region
            $region91: #{transformer_encoder_layer.5} parent=85 // pred_check
              _
            $region92: #{transformer_encoder_layer.5} parent=85 // pred_check_branch
              %794 = sbr.rel target = $region94
            $region93: #{transformer_encoder_layer.5} parent=85 // pred_region
              %s796 = ssub.s32 256, 1
              loop: start=0, step=1, limit=1
              $region95: #{transformer_encoder_layer.5} parent=93 // loop_pre_header
                _
              $region96: #{transformer_encoder_layer.5} parent=93 // loop_header
                %s798 = sphi 0, %s802
                %p799 = scmp.ge.s32.totalorder %s798, 1
                %s803 = sphi %s779, %s779
                %s804 = sphi %s788, %s788
              $region97: #{transformer_encoder_layer.5} parent=93 // loop_header_branch
                %801 = sbr.rel (%p799) target = $region101
              $region98: #{transformer_encoder_layer.5} parent=93 // loop_body
                %v805 = vld [vmem:[%s803] sm:%s796]
                %806 = vst [vmem:[%s804] sm:%s796] %v805
                %v807 = vld [vmem:[%s803 + $0x8] sm:%s796]
                %808 = vst [vmem:[%s804 + $0x18] sm:%s796] %v807
                %v809 = vld [vmem:[%s803 + $0x10] sm:%s796]
                %810 = vst [vmem:[%s804 + $0x30] sm:%s796] %v809
                %v811 = vld [vmem:[%s803 + $0x18] sm:%s796]
                %812 = vst [vmem:[%s804 + $0x48] sm:%s796] %v811
              $region99: #{transformer_encoder_layer.5} parent=93 // loop_footer
                %s802 = sadd.s32 1, %s798
              $region100: #{transformer_encoder_layer.5} parent=93 // loop_footer_branch
                %797 = sbr.rel target = $region96
              $region101: #{transformer_encoder_layer.5} parent=93 // loop_exit
                _
            $region94: #{transformer_encoder_layer.5} parent=85 // pred_fallthru
              _
          $region86: #{transformer_encoder_layer.5} parent=81 // pred_fallthru
            _
          %833 = vnop
        $region82: #{transformer_encoder_layer.5} parent=65 // pred_fallthru
          _
      $region66: #{transformer_encoder_layer.5} parent=5 // pred_fallthru
        _
      %p834 = scmp.le.s32.totalorder 2, %s9
      // Predicated region
      $region117: #{transformer_encoder_layer.5} parent=5 // pred_check
        %p835 = pneg %p834
      $region118: #{transformer_encoder_layer.5} parent=5 // pred_check_branch
        %837 = sbr.rel (%p835) target = $region120
      $region119: #{transformer_encoder_layer.5} parent=5 // pred_region
        %s838 = ssub.s32 %s9, 2
        // Predicated region
        $region121: #{transformer_encoder_layer.5} parent=119 // pred_check
          %p839 = pneg %p141
        $region122: #{transformer_encoder_layer.5} parent=119 // pred_check_branch
          %841 = sbr.rel (%p839) target = $region124
        $region123: #{transformer_encoder_layer.5} parent=119 // pred_region
          %s842 = sand.u32 %s126, 1
          %s843 = sand.u32 %s126, 1
          %s844 = smul.addr %s843, 32
          %s845 = scalar_lea.vmem [#allocation4], %s844
        $region124: #{transformer_encoder_layer.5} parent=119 // pred_fallthru
          _
      $region120: #{transformer_encoder_layer.5} parent=5 // pred_fallthru
        _
    $region6: #{transformer_encoder_layer.5} parent=1 // loop_footer
      %s13 = sadd.s32 1, %s9
    $region7: #{transformer_encoder_layer.5} parent=1 // loop_footer_branch
      %8 = sbr.rel target = $region3
    $region8: #{transformer_encoder_layer.5} parent=1 // loop_exit
      _

// kernel: transformer_encoder_layer.8
$region0: #{transformer_encoder_layer.8}
  #allocation0 [shape = 'u32[]', space=smem, size = 0x4, offset = 0x4, fixed_abs, tag = 'smem constant byte address 0x4 - core index']
  #allocation1 [shape = 'u32[72,128]{1,0:T(1,128)}', space=vmem, size = 0x9000, scoped, tag = 'internal scratch']
  #allocation2 [shape = 'f32[32,256]{1,0:T(8,128)}', space=vmem, size = 0x8000, scoped, tag = 'scratch operand']
  %s0 = inlined_call_operand.vmem [shape: bf16[32,256], index: 0, kind: input, shape index: {}]
  %s1 = inlined_call_operand.vmem [shape: bf16[256,512], index: 1, kind: input, shape index: {}]
  %s2 = inlined_call_operand.vmem [shape: f32[1,512], index: 2, kind: input, shape index: {}]
  %s3 = inlined_call_operand.vmem [shape: bf16[32,512], index: 3, kind: output, shape index: {}]
  %s4 = sld [smem:[#allocation0]]
  $region125: #{transformer_encoder_layer.8} parent=0
    _
  %s6 = ssub.s32 1, %s4
  %s7 = scalar_select 0, %s6, %s4
  $region1: #{transformer_encoder_layer.8} parent=0
    #allocation3 [shape = 'u8[262144]{0}', space=vmem, size = 0x40000, scoped, tag = 'input window, operand 1']
    #allocation4 [shape = 'u8[32768]{0}', space=vmem, size = 0x8000, scoped, tag = 'output window, operand 0']
    loop: start=0, step=1, limit=4
    $region2: #{transformer_encoder_layer.8} parent=1 // loop_pre_header
      _
    $region3: #{transformer_encoder_layer.8} parent=1 // loop_header
      %s9 = sphi 0, %s13
      %p10 = scmp.ge.s32.totalorder %s9, 4
      %s16 = sphi 0, %s35
      %s17 = sphi 0, %s31
      %s18 = sphi 0, %s27
      %s19 = sphi 0, %s16
      %s20 = sphi 0, %s17
      %s21 = sphi 0, %s18
      %s22 = sphi 0, %s19
      %s23 = sphi 0, %s20
      %s24 = sphi 0, %s21
      %s40 = sphi 0, %s42
      %s43 = sphi 0, %s40
      %s44 = sphi 0, %s43
      %s60 = sphi 0, %s44
      %s68 = sphi 0, %s70
      %s71 = sphi 0, %s68
      %s72 = sphi 0, %s71
      %s88 = sphi 0, %s72
      %s94 = sphi 0, %s96
      %s97 = sphi 0, %s94
      %s98 = sphi 0, %s97
      %s114 = sphi 0, %s98
      %s122 = sphi 0, %s124
      %s125 = sphi 0, %s122
      %s126 = sphi 0, %s125
      %s142 = sphi 0, %s126
    $region4: #{transformer_encoder_layer.8} parent=1 // loop_header_branch
      %12 = sbr.rel (%p10) target = $region8
    $region5: #{transformer_encoder_layer.8} parent=1 // loop_body
      %s14 = ssub.s32 %s9, 1
      %s15 = ssub.s32 %s9, 2
      %s25 = sadd.s32 1, %s18
      %p26 = scmp.ge.s32.totalorder %s25, 1
      %s27 = scalar_select %p26, 0, %s25
      %s28 = sadd.s32 1, %s17
      %s29 = scalar_select %p26, %s28, %s17
      %p30 = scmp.ge.s32.totalorder %s29, 2
      %s31 = scalar_select %p30, 0, %s29
      %s32 = sadd.s32 1, %s16
      %s33 = scalar_select %p30, %s32, %s16
      %p34 = scmp.ge.s32.totalorder %s33, 1
      %s35 = scalar_select %p34, 0, %s33
      %s36 = ssub.s32 %s16, %s35
      %s37 = ssub.s32 %s18, %s27
      %s38 = sor.u32 %s36, %s37
      %p39 = scmp.eq.s32.totalorder %s38, 0
      %s41 = sadd.s32 %s40, 1
      %s42 = scalar_select %p39, %s40, %s41
      %p45 = pneg %p39
      %p46 = scmp.eq.s32.totalorder %s9, 1
      %p47 = por %p45, %p46
      %p48 = scmp.ne.s32.totalorder %s40, %s43
      %p49 = scmp.eq.s32.totalorder %s9, 0
      %p50 = por %p48, %p49
      %p51 = scmp.ne.s32.totalorder %s40, %s43
      %p52 = scmp.eq.s32.totalorder %s14, 1
      %p53 = por %p51, %p52
      %p54 = scmp.ne.s32.totalorder %s43, %s44
      %p55 = scmp.eq.s32.totalorder %s14, 0
      %p56 = por %p54, %p55
      %p57 = scmp.ne.s32.totalorder %s43, %s44
      %p58 = scmp.eq.s32.totalorder %s15, 1
      %p59 = por %p57, %p58
      %p61 = scmp.ne.s32.totalorder %s44, %s60
      %p62 = scmp.eq.s32.totalorder %s15, 0
      %p63 = por %p61, %p62
      %s64 = ssub.s32 %s18, %s27
      %s65 = ssub.s32 %s17, %s31
      %s66 = sor.u32 %s64, %s65
      %p67 = scmp.eq.s32.totalorder %s66, 0
      %s69 = sadd.s32 %s68, 1
      %s70 = scalar_select %p67, %s68, %s69
      %p73 = pneg %p67
      %p74 = scmp.eq.s32.totalorder %s9, 1
      %p75 = por %p73, %p74
      %p76 = scmp.ne.s32.totalorder %s68, %s71
      %p77 = scmp.eq.s32.totalorder %s9, 0
      %p78 = por %p76, %p77
      %p79 = scmp.ne.s32.totalorder %s68, %s71
      %p80 = scmp.eq.s32.totalorder %s14, 1
      %p81 = por %p79, %p80
      %p82 = scmp.ne.s32.totalorder %s71, %s72
      %p83 = scmp.eq.s32.totalorder %s14, 0
      %p84 = por %p82, %p83
      %p85 = scmp.ne.s32.totalorder %s71, %s72
      %p86 = scmp.eq.s32.totalorder %s15, 1
      %p87 = por %p85, %p86
      %p89 = scmp.ne.s32.totalorder %s72, %s88
      %p90 = scmp.eq.s32.totalorder %s15, 0
      %p91 = por %p89, %p90
      %s92 = ssub.s32 %s17, %s31
      %p93 = scmp.eq.s32.totalorder %s92, 0
      %s95 = sadd.s32 %s94, 1
      %s96 = scalar_select %p93, %s94, %s95
      %p99 = pneg %p93
      %p100 = scmp.eq.s32.totalorder %s9, 1
      %p101 = por %p99, %p100
      %p102 = scmp.ne.s32.totalorder %s94, %s97
      %p103 = scmp.eq.s32.totalorder %s9, 0
      %p104 = por %p102, %p103
      %p105 = scmp.ne.s32.totalorder %s94, %s97
      %p106 = scmp.eq.s32.totalorder %s14, 1
      %p107 = por %p105, %p106
      %p108 = scmp.ne.s32.totalorder %s97, %s98
      %p109 = scmp.eq.s32.totalorder %s14, 0
      %p110 = por %p108, %p109
      %p111 = scmp.ne.s32.totalorder %s97, %s98
      %p112 = scmp.eq.s32.totalorder %s15, 1
      %p113 = por %p111, %p112
      %p115 = scmp.ne.s32.totalorder %s98, %s114
      %p116 = scmp.eq.s32.totalorder %s15, 0
      %p117 = por %p115, %p116
      %s118 = ssub.s32 %s16, %s35
      %s119 = ssub.s32 %s17, %s31
      %s120 = sor.u32 %s118, %s119
      %p121 = scmp.eq.s32.totalorder %s120, 0
      %s123 = sadd.s32 %s122, 1
      %s124 = scalar_select %p121, %s122, %s123
      %p127 = pneg %p121
      %p128 = scmp.eq.s32.totalorder %s9, 1
      %p129 = por %p127, %p128
      %p130 = scmp.ne.s32.totalorder %s122, %s125
      %p131 = scmp.eq.s32.totalorder %s9, 0
      %p132 = por %p130, %p131
      %p133 = scmp.ne.s32.totalorder %s122, %s125
      %p134 = scmp.eq.s32.totalorder %s14, 1
      %p135 = por %p133, %p134
      %p136 = scmp.ne.s32.totalorder %s125, %s126
      %p137 = scmp.eq.s32.totalorder %s14, 0
      %p138 = por %p136, %p137
      %p139 = scmp.ne.s32.totalorder %s125, %s126
      %p140 = scmp.eq.s32.totalorder %s15, 1
      %p141 = por %p139, %p140
      %p143 = scmp.ne.s32.totalorder %s126, %s142
      %p144 = scmp.eq.s32.totalorder %s15, 0
      %p145 = por %p143, %p144
      %p146 = scmp.le.s32.totalorder 1, %s9
      %p147 = scmp.lt.s32.totalorder %s9, 3
      %p148 = pnand %p146, %p147
      %p149 = pneg %p148
      // Predicated region
      $region9: #{transformer_encoder_layer.8} parent=5 // pred_check
        _
      $region10: #{transformer_encoder_layer.8} parent=5 // pred_check_branch
        %151 = sbr.rel (%p148) target = $region12
      $region11: #{transformer_encoder_layer.8} parent=5 // pred_region
        %s152 = ssub.s32 %s9, 1
        // Predicated region
        $region13: #{transformer_encoder_layer.8} parent=11 // pred_check
          %p153 = pneg %p56
        $region14: #{transformer_encoder_layer.8} parent=11 // pred_check_branch
          %155 = sbr.rel (%p153) target = $region16
        $region15: #{transformer_encoder_layer.8} parent=11 // pred_region
          %s156 = smul.u32 4, %s19
          %s157 = smul.u32 2, %s21
          %p158 = scmp.lt.s32.totalorder %s156, 3
          %s159 = scalar_select %p158, %s156, 3
          %p160 = scmp.lt.s32.totalorder %s157, 1
          %s161 = scalar_select %p160, %s157, 1
          %s162 = smul.addr %s159, 2
          %s163 = sadd.s32 %s161, %s162
          %s164 = smul.addr %s163, 4
          %s165 = scalar_lea.vmem %s0, %s164
          %s166 = smul.u32 4, %s19
          %s167 = smul.u32 2, %s21
        $region16: #{transformer_encoder_layer.8} parent=11 // pred_fallthru
          _
      $region12: #{transformer_encoder_layer.8} parent=5 // pred_fallthru
        _
      %p168 = scmp.lt.s32.totalorder %s9, 2
      // Predicated region
      $region17: #{transformer_encoder_layer.8} parent=5 // pred_check
        %p169 = pneg %p168
      $region18: #{transformer_encoder_layer.8} parent=5 // pred_check_branch
        %171 = sbr.rel (%p169) target = $region20
      $region19: #{transformer_encoder_layer.8} parent=5 // pred_region
        // Predicated region
        $region21: #{transformer_encoder_layer.8} parent=19 // pred_check
          %p172 = pneg %p78
        $region22: #{transformer_encoder_layer.8} parent=19 // pred_check_branch
          %174 = sbr.rel (%p172) target = $region24
        $region23: #{transformer_encoder_layer.8} parent=19 // pred_region
          %s175 = sand.u32 %s68, 1
          %s176 = sand.u32 %s68, 1
          %s177 = smul.addr %s176, 256
          %s178 = scalar_lea.vmem [#allocation3], %s177
          %s179 = smul.u32 32, %s18
          %s180 = smul.u32 2, %s17
          %s181 = smul.addr %s179, 4
          %s182 = sadd.s32 %s180, %s181
          %s183 = smul.addr %s182, 4
          %s184 = scalar_lea.vmem %s1, %s183
          // Predicated region
          $region25: #{transformer_encoder_layer.8} parent=23 // pred_check
            _
          $region26: #{transformer_encoder_layer.8} parent=23 // pred_check_branch
            %186 = sbr.rel (0) target = $region28
          $region27: #{transformer_encoder_layer.8} parent=23 // pred_region
            // Predicated region
            $region29: #{transformer_encoder_layer.8} parent=27 // pred_check
              _
            $region30: #{transformer_encoder_layer.8} parent=27 // pred_check_branch
              %188 = sbr.rel (0) target = $region32
            $region31: #{transformer_encoder_layer.8} parent=27 // pred_region
              // Predicated region
              $region44: #{transformer_encoder_layer.8} parent=31 // pred_check
                _
              $region45: #{transformer_encoder_layer.8} parent=31 // pred_check_branch
                %266 = sbr.rel (0) target = $region47
              $region46: #{transformer_encoder_layer.8} parent=31 // pred_region
                loop: start=0, step=1, limit=1
                $region48: #{transformer_encoder_layer.8} parent=46 // loop_pre_header
                  _
                $region49: #{transformer_encoder_layer.8} parent=46 // loop_header
                  %s268 = sphi 0, %s272
                  %p269 = scmp.ge.s32.totalorder %s268, 1
                  %s273 = sphi %s184, %s184
                  %s274 = sphi %s178, %s178
                $region50: #{transformer_encoder_layer.8} parent=46 // loop_header_branch
                  %271 = sbr.rel (%p269) target = $region54
                $region51: #{transformer_encoder_layer.8} parent=46 // loop_body
                  %v275 = vld [vmem:[%s273] sm:$0xff]
                  %276 = vst [vmem:[%s274] sm:$0xff] %v275
                  %v277 = vld [vmem:[%s273 + $0x10] sm:$0xff]
                  %278 = vst [vmem:[%s274 + $0x8] sm:$0xff] %v277
                  %v279 = vld [vmem:[%s273 + $0x20] sm:$0xff]
                  %280 = vst [vmem:[%s274 + $0x10] sm:$0xff] %v279
                  %v281 = vld [vmem:[%s273 + $0x30] sm:$0xff]
                  %282 = vst [vmem:[%s274 + $0x18] sm:$0xff] %v281
                  %v283 = vld [vmem:[%s273 + $0x40] sm:$0xff]
                  %284 = vst [vmem:[%s274 + $0x20] sm:$0xff] %v283
                  %v285 = vld [vmem:[%s273 + $0x50] sm:$0xff]
                  %286 = vst [vmem:[%s274 + $0x28] sm:$0xff] %v285
                  %v287 = vld [vmem:[%s273 + $0x60] sm:$0xff]
                  %288 = vst [vmem:[%s274 + $0x30] sm:$0xff] %v287
                  %v289 = vld [vmem:[%s273 + $0x70] sm:$0xff]
                  %290 = vst [vmem:[%s274 + $0x38] sm:$0xff] %v289
                  %v291 = vld [vmem:[%s273 + $0x80] sm:$0xff]
                  %292 = vst [vmem:[%s274 + $0x40] sm:$0xff] %v291
                  %v293 = vld [vmem:[%s273 + $0x90] sm:$0xff]
                  %294 = vst [vmem:[%s274 + $0x48] sm:$0xff] %v293
                  %v295 = vld [vmem:[%s273 + $0xa0] sm:$0xff]
                  %296 = vst [vmem:[%s274 + $0x50] sm:$0xff] %v295
                  %v297 = vld [vmem:[%s273 + $0xb0] sm:$0xff]
                  %298 = vst [vmem:[%s274 + $0x58] sm:$0xff] %v297
                  %v299 = vld [vmem:[%s273 + $0xc0] sm:$0xff]
                  %300 = vst [vmem:[%s274 + $0x60] sm:$0xff] %v299
                  %v301 = vld [vmem:[%s273 + $0xd0] sm:$0xff]
                  %302 = vst [vmem:[%s274 + $0x68] sm:$0xff] %v301
                  %v303 = vld [vmem:[%s273 + $0xe0] sm:$0xff]
                  %304 = vst [vmem:[%s274 + $0x70] sm:$0xff] %v303
                  %v305 = vld [vmem:[%s273 + $0xf0] sm:$0xff]
                  %306 = vst [vmem:[%s274 + $0x78] sm:$0xff] %v305
                  %v307 = vld [vmem:[%s273 + $0x100] sm:$0xff]
                  %308 = vst [vmem:[%s274 + $0x80] sm:$0xff] %v307
                  %v309 = vld [vmem:[%s273 + $0x110] sm:$0xff]
                  %310 = vst [vmem:[%s274 + $0x88] sm:$0xff] %v309
                  %v311 = vld [vmem:[%s273 + $0x120] sm:$0xff]
                  %312 = vst [vmem:[%s274 + $0x90] sm:$0xff] %v311
                  %v313 = vld [vmem:[%s273 + $0x130] sm:$0xff]
                  %314 = vst [vmem:[%s274 + $0x98] sm:$0xff] %v313
                  %v315 = vld [vmem:[%s273 + $0x140] sm:$0xff]
                  %316 = vst [vmem:[%s274 + $0xa0] sm:$0xff] %v315
                  %v317 = vld [vmem:[%s273 + $0x150] sm:$0xff]
                  %318 = vst [vmem:[%s274 + $0xa8] sm:$0xff] %v317
                  %v319 = vld [vmem:[%s273 + $0x160] sm:$0xff]
                  %320 = vst [vmem:[%s274 + $0xb0] sm:$0xff] %v319
                  %v321 = vld [vmem:[%s273 + $0x170] sm:$0xff]
                  %322 = vst [vmem:[%s274 + $0xb8] sm:$0xff] %v321
                  %v323 = vld [vmem:[%s273 + $0x180] sm:$0xff]
                  %324 = vst [vmem:[%s274 + $0xc0] sm:$0xff] %v323
                  %v325 = vld [vmem:[%s273 + $0x190] sm:$0xff]
                  %326 = vst [vmem:[%s274 + $0xc8] sm:$0xff] %v325
                  %v327 = vld [vmem:[%s273 + $0x1a0] sm:$0xff]
                  %328 = vst [vmem:[%s274 + $0xd0] sm:$0xff] %v327
                  %v329 = vld [vmem:[%s273 + $0x1b0] sm:$0xff]
                  %330 = vst [vmem:[%s274 + $0xd8] sm:$0xff] %v329
                  %v331 = vld [vmem:[%s273 + $0x1c0] sm:$0xff]
                  %332 = vst [vmem:[%s274 + $0xe0] sm:$0xff] %v331
                  %v333 = vld [vmem:[%s273 + $0x1d0] sm:$0xff]
                  %334 = vst [vmem:[%s274 + $0xe8] sm:$0xff] %v333
                  %v335 = vld [vmem:[%s273 + $0x1e0] sm:$0xff]
                  %336 = vst [vmem:[%s274 + $0xf0] sm:$0xff] %v335
                  %v337 = vld [vmem:[%s273 + $0x1f0] sm:$0xff]
                  %338 = vst [vmem:[%s274 + $0xf8] sm:$0xff] %v337
                $region52: #{transformer_encoder_layer.8} parent=46 // loop_footer
                  %s272 = sadd.s32 1, %s268
                $region53: #{transformer_encoder_layer.8} parent=46 // loop_footer_branch
                  %267 = sbr.rel target = $region49
                $region54: #{transformer_encoder_layer.8} parent=46 // loop_exit
                  _
              $region47: #{transformer_encoder_layer.8} parent=31 // pred_fallthru
                _
              // Predicated region
              $region55: #{transformer_encoder_layer.8} parent=31 // pred_check
                _
              $region56: #{transformer_encoder_layer.8} parent=31 // pred_check_branch
                %340 = sbr.rel target = $region58
              $region57: #{transformer_encoder_layer.8} parent=31 // pred_region
                _
              $region58: #{transformer_encoder_layer.8} parent=31 // pred_fallthru
                _
            $region32: #{transformer_encoder_layer.8} parent=27 // pred_fallthru
              _
            // Predicated region
            $region33: #{transformer_encoder_layer.8} parent=27 // pred_check
              _
            $region34: #{transformer_encoder_layer.8} parent=27 // pred_check_branch
              %190 = sbr.rel target = $region36
            $region35: #{transformer_encoder_layer.8} parent=27 // pred_region
              %s192 = ssub.s32 256, 1
              loop: start=0, step=1, limit=1
              $region37: #{transformer_encoder_layer.8} parent=35 // loop_pre_header
                _
              $region38: #{transformer_encoder_layer.8} parent=35 // loop_header
                %s194 = sphi 0, %s198
                %p195 = scmp.ge.s32.totalorder %s194, 1
                %s199 = sphi %s184, %s184
                %s200 = sphi %s178, %s178
              $region39: #{transformer_encoder_layer.8} parent=35 // loop_header_branch
                %197 = sbr.rel (%p195) target = $region43
              $region40: #{transformer_encoder_layer.8} parent=35 // loop_body
                %v201 = vld [vmem:[%s199] sm:%s192]
                %202 = vst [vmem:[%s200] sm:%s192] %v201
                %v203 = vld [vmem:[%s199 + $0x10] sm:%s192]
                %204 = vst [vmem:[%s200 + $0x8] sm:%s192] %v203
                %v205 = vld [vmem:[%s199 + $0x20] sm:%s192]
                %206 = vst [vmem:[%s200 + $0x10] sm:%s192] %v205
                %v207 = vld [vmem:[%s199 + $0x30] sm:%s192]
                %208 = vst [vmem:[%s200 + $0x18] sm:%s192] %v207
                %v209 = vld [vmem:[%s199 + $0x40] sm:%s192]
                %210 = vst [vmem:[%s200 + $0x20] sm:%s192] %v209
                %v211 = vld [vmem:[%s199 + $0x50] sm:%s192]
                %212 = vst [vmem:[%s200 + $0x28] sm:%s192] %v211
                %v213 = vld [vmem:[%s199 + $0x60] sm:%s192]
                %214 = vst [vmem:[%s200 + $0x30] sm:%s192] %v213
                %v215 = vld [vmem:[%s199 + $0x70] sm:%s192]
                %216 = vst [vmem:[%s200 + $0x38] sm:%s192] %v215
                %v217 = vld [vmem:[%s199 + $0x80] sm:%s192]
                %218 = vst [vmem:[%s200 + $0x40] sm:%s192] %v217
                %v219 = vld [vmem:[%s199 + $0x90] sm:%s192]
                %220 = vst [vmem:[%s200 + $0x48] sm:%s192] %v219
                %v221 = vld [vmem:[%s199 + $0xa0] sm:%s192]
                %222 = vst [vmem:[%s200 + $0x50] sm:%s192] %v221
                %v223 = vld [vmem:[%s199 + $0xb0] sm:%s192]
                %224 = vst [vmem:[%s200 + $0x58] sm:%s192] %v223
                %v225 = vld [vmem:[%s199 + $0xc0] sm:%s192]
                %226 = vst [vmem:[%s200 + $0x60] sm:%s192] %v225
                %v227 = vld [vmem:[%s199 + $0xd0] sm:%s192]
                %228 = vst [vmem:[%s200 + $0x68] sm:%s192] %v227
                %v229 = vld [vmem:[%s199 + $0xe0] sm:%s192]
                %230 = vst [vmem:[%s200 + $0x70] sm:%s192] %v229
                %v231 = vld [vmem:[%s199 + $0xf0] sm:%s192]
                %232 = vst [vmem:[%s200 + $0x78] sm:%s192] %v231
                %v233 = vld [vmem:[%s199 + $0x100] sm:%s192]
                %234 = vst [vmem:[%s200 + $0x80] sm:%s192] %v233
                %v235 = vld [vmem:[%s199 + $0x110] sm:%s192]
                %236 = vst [vmem:[%s200 + $0x88] sm:%s192] %v235
                %v237 = vld [vmem:[%s199 + $0x120] sm:%s192]
                %238 = vst [vmem:[%s200 + $0x90] sm:%s192] %v237
                %v239 = vld [vmem:[%s199 + $0x130] sm:%s192]
                %240 = vst [vmem:[%s200 + $0x98] sm:%s192] %v239
                %v241 = vld [vmem:[%s199 + $0x140] sm:%s192]
                %242 = vst [vmem:[%s200 + $0xa0] sm:%s192] %v241
                %v243 = vld [vmem:[%s199 + $0x150] sm:%s192]
                %244 = vst [vmem:[%s200 + $0xa8] sm:%s192] %v243
                %v245 = vld [vmem:[%s199 + $0x160] sm:%s192]
                %246 = vst [vmem:[%s200 + $0xb0] sm:%s192] %v245
                %v247 = vld [vmem:[%s199 + $0x170] sm:%s192]
                %248 = vst [vmem:[%s200 + $0xb8] sm:%s192] %v247
                %v249 = vld [vmem:[%s199 + $0x180] sm:%s192]
                %250 = vst [vmem:[%s200 + $0xc0] sm:%s192] %v249
                %v251 = vld [vmem:[%s199 + $0x190] sm:%s192]
                %252 = vst [vmem:[%s200 + $0xc8] sm:%s192] %v251
                %v253 = vld [vmem:[%s199 + $0x1a0] sm:%s192]
                %254 = vst [vmem:[%s200 + $0xd0] sm:%s192] %v253
                %v255 = vld [vmem:[%s199 + $0x1b0] sm:%s192]
                %256 = vst [vmem:[%s200 + $0xd8] sm:%s192] %v255
                %v257 = vld [vmem:[%s199 + $0x1c0] sm:%s192]
                %258 = vst [vmem:[%s200 + $0xe0] sm:%s192] %v257
                %v259 = vld [vmem:[%s199 + $0x1d0] sm:%s192]
                %260 = vst [vmem:[%s200 + $0xe8] sm:%s192] %v259
                %v261 = vld [vmem:[%s199 + $0x1e0] sm:%s192]
                %262 = vst [vmem:[%s200 + $0xf0] sm:%s192] %v261
                %v263 = vld [vmem:[%s199 + $0x1f0] sm:%s192]
                %264 = vst [vmem:[%s200 + $0xf8] sm:%s192] %v263
              $region41: #{transformer_encoder_layer.8} parent=35 // loop_footer
                %s198 = sadd.s32 1, %s194
              $region42: #{transformer_encoder_layer.8} parent=35 // loop_footer_branch
                %193 = sbr.rel target = $region38
              $region43: #{transformer_encoder_layer.8} parent=35 // loop_exit
                _
            $region36: #{transformer_encoder_layer.8} parent=27 // pred_fallthru
              _
          $region28: #{transformer_encoder_layer.8} parent=23 // pred_fallthru
            _
          %341 = vnop
        $region24: #{transformer_encoder_layer.8} parent=19 // pred_fallthru
          _
        // Predicated region
        $region59: #{transformer_encoder_layer.8} parent=19 // pred_check
          %p342 = pneg %p104
        $region60: #{transformer_encoder_layer.8} parent=19 // pred_check_branch
          %344 = sbr.rel (%p342) target = $region62
        $region61: #{transformer_encoder_layer.8} parent=19 // pred_region
          %s345 = smul.u32 2, %s17
          %p346 = scmp.lt.s32.totalorder %s345, 3
          %s347 = scalar_select %p346, %s345, 3
          %s348 = scalar_lea.vmem %s2, %s347
          %s349 = smul.u32 2, %s17
        $region62: #{transformer_encoder_layer.8} parent=19 // pred_fallthru
          _
      $region20: #{transformer_encoder_layer.8} parent=5 // pred_fallthru
        _
      %p350 = scmp.le.s32.totalorder 1, %s9
      %p351 = scmp.lt.s32.totalorder %s9, 3
      %p352 = pnand %p350, %p351
      %p353 = pneg %p352
      // Predicated region
      $region63: #{transformer_encoder_layer.8} parent=5 // pred_check
        _
      $region64: #{transformer_encoder_layer.8} parent=5 // pred_check_branch
        %355 = sbr.rel (%p352) target = $region66
      $region65: #{transformer_encoder_layer.8} parent=5 // pred_region
        %s356 = ssub.s32 %s9, 1
        %s357 = sand.u32 %s71, 1
        %s358 = sand.u32 %s71, 1
        %s359 = smul.addr %s358, 256
        %s360 = scalar_lea.vmem [#allocation3], %s359
        // Predicated region
        $region67: #{transformer_encoder_layer.8} parent=65 // pred_check
          %p361 = pneg %p84
        $region68: #{transformer_encoder_layer.8} parent=65 // pred_check_branch
          %363 = sbr.rel (%p361) target = $region70
        $region69: #{transformer_encoder_layer.8} parent=65 // pred_region
          _
        $region70: #{transformer_encoder_layer.8} parent=65 // pred_fallthru
          _
        %s364 = smul.u32 4, %s19
        %s365 = smul.u32 2, %s21
        %p366 = scmp.lt.s32.totalorder %s364, 3
        %s367 = scalar_select %p366, %s364, 3
        %p368 = scmp.lt.s32.totalorder %s365, 1
        %s369 = scalar_select %p368, %s365, 1
        %s370 = smul.addr %s367, 2
        %s371 = sadd.s32 %s369, %s370
        %s372 = smul.addr %s371, 4
        %s373 = scalar_lea.vmem %s0, %s372
        %p374 = pneg %p56
        %p375 = pneg %p53
        %s376 = sand.u32 %s71, 1
        %s377 = sand.u32 %s71, 1
        %s378 = smul.addr %s377, 256
        %s379 = scalar_lea.vmem [#allocation3], %s378
        %p380 = pneg %p84
        %p381 = pneg %p81
        %s382 = smul.u32 2, %s20
        %p383 = scmp.lt.s32.totalorder %s382, 3
        %s384 = scalar_select %p383, %s382, 3
        %s385 = scalar_lea.vmem %s2, %s384
        %p386 = pneg %p110
        %p387 = pneg %p107
        %p388 = pneg %p138
        %p389 = pneg %p135
        %s390 = sand.u32 %s125, 1
        %s391 = sand.u32 %s125, 1
        %s392 = smul.addr %s391, 32
        %s393 = scalar_lea.vmem [#allocation4], %s392
        %s394 = smul.u32 4, %s19
        %s395 = smul.u32 2, %s21
        %p396 = scmp.lt.s32.totalorder %s394, 3
        %s397 = scalar_select %p396, %s394, 3
        %p398 = scmp.lt.s32.totalorder %s395, 1
        %s399 = scalar_select %p398, %s395, 1
        %s400 = smul.addr %s397, 2
        %s401 = sadd.s32 %s399, %s400
        %s402 = smul.addr %s401, 4
        %s403 = scalar_lea.vmem %s0, %s402
        %s404 = smul.u32 4, %s19
        %s405 = smul.u32 2, %s21
        %s406 = smul.u32 32, %s21
        %s407 = smul.u32 2, %s20
        %s408 = smul.u32 2, %s20
        %p409 = scmp.lt.s32.totalorder %s408, 3
        %s410 = scalar_select %p409, %s408, 3
        %s411 = scalar_lea.vmem %s2, %s410
        %s412 = smul.u32 2, %s20
        %s413 = smul.u32 4, %s19
        %s414 = smul.u32 2, %s20
        %p415 = scmp.eq.s32.totalorder %s21, 0
        // Predicated region
        $region71: #{transformer_encoder_layer.8} parent=65 // pred_check
          %p416 = pneg %p415
        $region72: #{transformer_encoder_layer.8} parent=65 // pred_check_branch
          %418 = sbr.rel (%p416) target = $region74
        $region73: #{transformer_encoder_layer.8} parent=65 // pred_region
          %419 = vst [vmem:[#allocation2] sm:$0xff] 0.0
          %420 = vst [vmem:[#allocation2 + $0x8] sm:$0xff] 0.0
          %421 = vst [vmem:[#allocation2 + $0x10] sm:$0xff] 0.0
          %422 = vst [vmem:[#allocation2 + $0x18] sm:$0xff] 0.0
          %423 = vst [vmem:[#allocation2 + $0x20] sm:$0xff] 0.0
          %424 = vst [vmem:[#allocation2 + $0x28] sm:$0xff] 0.0
          %425 = vst [vmem:[#allocation2 + $0x30] sm:$0xff] 0.0
          %426 = vst [vmem:[#allocation2 + $0x38] sm:$0xff] 0.0
        $region74: #{transformer_encoder_layer.8} parent=65 // pred_fallthru
          _
        %v427 = vld [vmem:[#allocation2] sm:$0xff]
        %v428 = vld [vmem:[#allocation2 + $0x8] sm:$0xff]
        %v429 = vld [vmem:[#allocation2 + $0x10] sm:$0xff]
        %v430 = vld [vmem:[#allocation2 + $0x18] sm:$0xff]
        %v431 = vld [vmem:[#allocation2 + $0x20] sm:$0xff]
        %v432 = vld [vmem:[#allocation2 + $0x28] sm:$0xff]
        %v433 = vld [vmem:[#allocation2 + $0x30] sm:$0xff]
        %v434 = vld [vmem:[#allocation2 + $0x38] sm:$0xff]
        %v435 = vld [vmem:[%s403] sm:$0xff]
        %v436 = vld [vmem:[%s403 + $0x8] sm:$0xff]
        %v437 = vld [vmem:[%s403 + $0x10] sm:$0xff]
        %v438 = vld [vmem:[%s403 + $0x18] sm:$0xff]
        %v439 = vld [vmem:[%s360] sm:$0xff]
        %v440 = vld [vmem:[%s360 + $0x8] sm:$0xff]
        %v441 = vld [vmem:[%s360 + $0x10] sm:$0xff]
        %v442 = vld [vmem:[%s360 + $0x18] sm:$0xff]
        %v443 = vld [vmem:[%s360 + $0x20] sm:$0xff]
        %v444 = vld [vmem:[%s360 + $0x28] sm:$0xff]
        %v445 = vld [vmem:[%s360 + $0x30] sm:$0xff]
        %v446 = vld [vmem:[%s360 + $0x38] sm:$0xff]
        %v447 = vld [vmem:[%s360 + $0x40] sm:$0xff]
        %v448 = vld [vmem:[%s360 + $0x48] sm:$0xff]
        %v449 = vld [vmem:[%s360 + $0x50] sm:$0xff]
        %v450 = vld [vmem:[%s360 + $0x58] sm:$0xff]
        %v451 = vld [vmem:[%s360 + $0x60] sm:$0xff]
        %v452 = vld [vmem:[%s360 + $0x68] sm:$0xff]
        %v453 = vld [vmem:[%s360 + $0x70] sm:$0xff]
        %v454 = vld [vmem:[%s360 + $0x78] sm:$0xff]
        %v455 = vld [vmem:[%s360 + $0x80] sm:$0xff]
        %v456 = vld [vmem:[%s360 + $0x88] sm:$0xff]
        %v457 = vld [vmem:[%s360 + $0x90] sm:$0xff]
        %v458 = vld [vmem:[%s360 + $0x98] sm:$0xff]
        %v459 = vld [vmem:[%s360 + $0xa0] sm:$0xff]
        %v460 = vld [vmem:[%s360 + $0xa8] sm:$0xff]
        %v461 = vld [vmem:[%s360 + $0xb0] sm:$0xff]
        %v462 = vld [vmem:[%s360 + $0xb8] sm:$0xff]
        %v463 = vld [vmem:[%s360 + $0xc0] sm:$0xff]
        %v464 = vld [vmem:[%s360 + $0xc8] sm:$0xff]
        %v465 = vld [vmem:[%s360 + $0xd0] sm:$0xff]
        %v466 = vld [vmem:[%s360 + $0xd8] sm:$0xff]
        %v467 = vld [vmem:[%s360 + $0xe0] sm:$0xff]
        %v468 = vld [vmem:[%s360 + $0xe8] sm:$0xff]
        %v469 = vld [vmem:[%s360 + $0xf0] sm:$0xff]
        %v470 = vld [vmem:[%s360 + $0xf8] sm:$0xff]
        %v475 = vunpack.c.l.b16 %v435
        %v476 = vunpack.c.h.b16 %v435
        %v477 = vunpack.c.l.b16 %v436
        %v478 = vunpack.c.h.b16 %v436
        %v479 = vunpack.c.l.b16 %v437
        %v480 = vunpack.c.h.b16 %v437
        %v481 = vunpack.c.l.b16 %v438
        %v482 = vunpack.c.h.b16 %v438
        %v483 = vpack.c.b16 %v477, %v475
        %v484 = vpack.c.b16 %v478, %v476
        %v485 = vpack.c.b16 %v481, %v479
        %v486 = vpack.c.b16 %v482, %v480
        %v523 = vunpack.c.l.b16 %v439
        %v524 = vunpack.c.h.b16 %v439
        %v525 = vunpack.c.l.b16 %v440
        %v526 = vunpack.c.h.b16 %v440
        %v527 = vunpack.c.l.b16 %v441
        %v528 = vunpack.c.h.b16 %v441
        %v529 = vunpack.c.l.b16 %v442
        %v530 = vunpack.c.h.b16 %v442
        %v531 = vunpack.c.l.b16 %v443
        %v532 = vunpack.c.h.b16 %v443
        %v533 = vunpack.c.l.b16 %v444
        %v534 = vunpack.c.h.b16 %v444
        %v535 = vunpack.c.l.b16 %v445
        %v536 = vunpack.c.h.b16 %v445
        %v537 = vunpack.c.l.b16 %v446
        %v538 = vunpack.c.h.b16 %v446
        %v539 = vunpack.c.l.b16 %v447
        %v540 = vunpack.c.h.b16 %v447
        %v541 = vunpack.c.l.b16 %v448
        %v542 = vunpack.c.h.b16 %v448
        %v543 = vunpack.c.l.b16 %v449
        %v544 = vunpack.c.h.b16 %v449
        %v545 = vunpack.c.l.b16 %v450
        %v546 = vunpack.c.h.b16 %v450
        %v547 = vunpack.c.l.b16 %v451
        %v548 = vunpack.c.h.b16 %v451
        %v549 = vunpack.c.l.b16 %v452
        %v550 = vunpack.c.h.b16 %v452
        %v551 = vunpack.c.l.b16 %v453
        %v552 = vunpack.c.h.b16 %v453
        %v553 = vunpack.c.l.b16 %v454
        %v554 = vunpack.c.h.b16 %v454
        %v555 = vunpack.c.l.b16 %v455
        %v556 = vunpack.c.h.b16 %v455
        %v557 = vunpack.c.l.b16 %v456
        %v558 = vunpack.c.h.b16 %v456
        %v559 = vunpack.c.l.b16 %v457
        %v560 = vunpack.c.h.b16 %v457
        %v561 = vunpack.c.l.b16 %v458
        %v562 = vunpack.c.h.b16 %v458
        %v563 = vunpack.c.l.b16 %v459
        %v564 = vunpack.c.h.b16 %v459
        %v565 = vunpack.c.l.b16 %v460
        %v566 = vunpack.c.h.b16 %v460
        %v567 = vunpack.c.l.b16 %v461
        %v568 = vunpack.c.h.b16 %v461
        %v569 = vunpack.c.l.b16 %v462
        %v570 = vunpack.c.h.b16 %v462
        %v571 = vunpack.c.l.b16 %v463
        %v572 = vunpack.c.h.b16 %v463
        %v573 = vunpack.c.l.b16 %v464
        %v574 = vunpack.c.h.b16 %v464
        %v575 = vunpack.c.l.b16 %v465
        %v576 = vunpack.c.h.b16 %v465
        %v577 = vunpack.c.l.b16 %v466
        %v578 = vunpack.c.h.b16 %v466
        %v579 = vunpack.c.l.b16 %v467
        %v580 = vunpack.c.h.b16 %v467
        %v581 = vunpack.c.l.b16 %v468
        %v582 = vunpack.c.h.b16 %v468
        %v583 = vunpack.c.l.b16 %v469
        %v584 = vunpack.c.h.b16 %v469
        %v585 = vunpack.c.l.b16 %v470
        %v586 = vunpack.c.h.b16 %v470
        %v587 = vpack.c.b16 %v525, %v523
        %v588 = vpack.c.b16 %v526, %v524
        %v589 = vpack.c.b16 %v529, %v527
        %v590 = vpack.c.b16 %v530, %v528
        %v591 = vpack.c.b16 %v533, %v531
        %v592 = vpack.c.b16 %v534, %v532
        %v593 = vpack.c.b16 %v537, %v535
        %v594 = vpack.c.b16 %v538, %v536
        %v595 = vpack.c.b16 %v541, %v539
        %v596 = vpack.c.b16 %v542, %v540
        %v597 = vpack.c.b16 %v545, %v543
        %v598 = vpack.c.b16 %v546, %v544
        %v599 = vpack.c.b16 %v549, %v547
        %v600 = vpack.c.b16 %v550, %v548
        %v601 = vpack.c.b16 %v553, %v551
        %v602 = vpack.c.b16 %v554, %v552
        %v603 = vpack.c.b16 %v557, %v555
        %v604 = vpack.c.b16 %v558, %v556
        %v605 = vpack.c.b16 %v561, %v559
        %v606 = vpack.c.b16 %v562, %v560
        %v607 = vpack.c.b16 %v565, %v563
        %v608 = vpack.c.b16 %v566, %v564
        %v609 = vpack.c.b16 %v569, %v567
        %v610 = vpack.c.b16 %v570, %v568
        %v611 = vpack.c.b16 %v573, %v571
        %v612 = vpack.c.b16 %v574, %v572
        %v613 = vpack.c.b16 %v577, %v575
        %v614 = vpack.c.b16 %v578, %v576
        %v615 = vpack.c.b16 %v581, %v579
        %v616 = vpack.c.b16 %v582, %v580
        %v617 = vpack.c.b16 %v585, %v583
        %v618 = vpack.c.b16 %v586, %v584
        %651 = vmatpush.bf16.msra.mxu0 %v601
        %652 = vmatpush.bf16.msra.mxu0 %v599
        %653 = vmatpush.bf16.msra.mxu0 %v597
        %654 = vmatpush.bf16.msra.mxu0 %v595
        %655 = vmatpush.bf16.msra.mxu0 %v593
        %656 = vmatpush.bf16.msra.mxu0 %v591
        %657 = vmatpush.bf16.msra.mxu0 %v589
        %658 = vmatpush.bf16.msra.mxu0 %v587
        %659 = vmatmul.bf16.gmra.mxu0 %v483
        %v660 = vpop.f32.mrf.mxu0
        %v661 = vadd.f32 0.0, %v660
        %v662 = vpop.f32.mrf.mxu0
        %v663 = vadd.f32 0.0, %v662
        %664 = vmatmul.bf16.gmra.mxu0 %v485
        %v665 = vpop.f32.mrf.mxu0
        %v666 = vadd.f32 0.0, %v665
        %v667 = vpop.f32.mrf.mxu0
        %v668 = vadd.f32 0.0, %v667
        %669 = vdwg.mxu0
        %670 = vmatpush.bf16.msra.mxu0 %v617
        %671 = vmatpush.bf16.msra.mxu0 %v615
        %672 = vmatpush.bf16.msra.mxu0 %v613
        %673 = vmatpush.bf16.msra.mxu0 %v611
        %674 = vmatpush.bf16.msra.mxu0 %v609
        %675 = vmatpush.bf16.msra.mxu0 %v607
        %676 = vmatpush.bf16.msra.mxu0 %v605
        %677 = vmatpush.bf16.msra.mxu0 %v603
        %678 = vmatmul.bf16.gmra.mxu0 %v484
        %v679 = vpop.f32.mrf.mxu0
        %v680 = vadd.f32 %v661, %v679
        %v681 = vpop.f32.mrf.mxu0
        %v682 = vadd.f32 %v663, %v681
        %683 = vmatmul.bf16.gmra.mxu0 %v486
        %v684 = vpop.f32.mrf.mxu0
        %v685 = vadd.f32 %v666, %v684
        %v686 = vpop.f32.mrf.mxu0
        %v687 = vadd.f32 %v668, %v686
        %688 = vdwg.mxu0
        %689 = vmatpush.bf16.msra.mxu0 %v602
        %690 = vmatpush.bf16.msra.mxu0 %v600
        %691 = vmatpush.bf16.msra.mxu0 %v598
        %692 = vmatpush.bf16.msra.mxu0 %v596
        %693 = vmatpush.bf16.msra.mxu0 %v594
        %694 = vmatpush.bf16.msra.mxu0 %v592
        %695 = vmatpush.bf16.msra.mxu0 %v590
        %696 = vmatpush.bf16.msra.mxu0 %v588
        %697 = vmatmul.bf16.gmra.mxu0 %v483
        %v698 = vpop.f32.mrf.mxu0
        %v699 = vadd.f32 0.0, %v698
        %v700 = vpop.f32.mrf.mxu0
        %v701 = vadd.f32 0.0, %v700
        %702 = vmatmul.bf16.gmra.mxu0 %v485
        %v703 = vpop.f32.mrf.mxu0
        %v704 = vadd.f32 0.0, %v703
        %v705 = vpop.f32.mrf.mxu0
        %v706 = vadd.f32 0.0, %v705
        %707 = vdwg.mxu0
        %708 = vmatpush.bf16.msra.mxu0 %v618
        %709 = vmatpush.bf16.msra.mxu0 %v616
        %710 = vmatpush.bf16.msra.mxu0 %v614
        %711 = vmatpush.bf16.msra.mxu0 %v612
        %712 = vmatpush.bf16.msra.mxu0 %v610
        %713 = vmatpush.bf16.msra.mxu0 %v608
        %714 = vmatpush.bf16.msra.mxu0 %v606
        %715 = vmatpush.bf16.msra.mxu0 %v604
        %716 = vmatmul.bf16.gmra.mxu0 %v484
        %v717 = vpop.f32.mrf.mxu0
        %v718 = vadd.f32 %v699, %v717
        %v719 = vpop.f32.mrf.mxu0
        %v720 = vadd.f32 %v701, %v719
        %721 = vmatmul.bf16.gmra.mxu0 %v486
        %v722 = vpop.f32.mrf.mxu0
        %v723 = vadd.f32 %v704, %v722
        %v724 = vpop.f32.mrf.mxu0
        %v725 = vadd.f32 %v706, %v724
        %726 = vdwg.mxu0
        %v727 = vadd.f32 %v427, %v680
        %v728 = vadd.f32 %v428, %v718
        %v729 = vadd.f32 %v429, %v682
        %v730 = vadd.f32 %v430, %v720
        %v731 = vadd.f32 %v431, %v685
        %v732 = vadd.f32 %v432, %v723
        %v733 = vadd.f32 %v433, %v687
        %v734 = vadd.f32 %v434, %v725
        %735 = vst [vmem:[#allocation2] sm:$0xff] %v727
        %736 = vst [vmem:[#allocation2 + $0x8] sm:$0xff] %v728
        %737 = vst [vmem:[#allocation2 + $0x10] sm:$0xff] %v729
        %738 = vst [vmem:[#allocation2 + $0x18] sm:$0xff] %v730
        %739 = vst [vmem:[#allocation2 + $0x20] sm:$0xff] %v731
        %740 = vst [vmem:[#allocation2 + $0x28] sm:$0xff] %v732
        %741 = vst [vmem:[#allocation2 + $0x30] sm:$0xff] %v733
        %742 = vst [vmem:[#allocation2 + $0x38] sm:$0xff] %v734
        // Predicated region
        $region75: #{transformer_encoder_layer.8} parent=65 // pred_check
          %p743 = pneg %p415
        $region76: #{transformer_encoder_layer.8} parent=65 // pred_check_branch
          %745 = sbr.rel (%p743) target = $region78
        $region77: #{transformer_encoder_layer.8} parent=65 // pred_region
          %v746 = vld [vmem:[#allocation2] sm:$0xff]
          %v747 = vld [vmem:[#allocation2 + $0x8] sm:$0xff]
          %v748 = vld [vmem:[#allocation2 + $0x10] sm:$0xff]
          %v749 = vld [vmem:[#allocation2 + $0x18] sm:$0xff]
          %v750 = vld [vmem:[#allocation2 + $0x20] sm:$0xff]
          %v751 = vld [vmem:[#allocation2 + $0x28] sm:$0xff]
          %v752 = vld [vmem:[#allocation2 + $0x30] sm:$0xff]
          %v753 = vld [vmem:[#allocation2 + $0x38] sm:$0xff]
          %v754 = vld [vmem:[%s411] sm:$0x3]
          %v756 = vperm.slane %v754, 0
          %v757 = vperm.slane %v754, 1
          %v760 = vadd.f32 %v746, %v756
          %v761 = vadd.f32 %v747, %v757
          %v762 = vadd.f32 %v748, %v756
          %v763 = vadd.f32 %v749, %v757
          %v764 = vadd.f32 %v750, %v756
          %v765 = vadd.f32 %v751, %v757
          %v766 = vadd.f32 %v752, %v756
          %v767 = vadd.f32 %v753, %v757
          %v768 = vmax.f32 %v760, 0.0
          %v769 = vmax.f32 %v761, 0.0
          %v770 = vmax.f32 %v762, 0.0
          %v771 = vmax.f32 %v763, 0.0
          %v772 = vmax.f32 %v764, 0.0
          %v773 = vmax.f32 %v765, 0.0
          %v774 = vmax.f32 %v766, 0.0
          %v775 = vmax.f32 %v767, 0.0
          %v776 = vpack.c.bf16 %v769, %v768
          %v777 = vpack.c.bf16 %v771, %v770
          %v778 = vpack.c.bf16 %v773, %v772
          %v779 = vpack.c.bf16 %v775, %v774
          %780 = vst [vmem:[%s393] sm:$0xff] %v776
          %781 = vst [vmem:[%s393 + $0x8] sm:$0xff] %v777
          %782 = vst [vmem:[%s393 + $0x10] sm:$0xff] %v778
          %783 = vst [vmem:[%s393 + $0x18] sm:$0xff] %v779
        $region78: #{transformer_encoder_layer.8} parent=65 // pred_fallthru
          _
        %s784 = sand.u32 %s125, 1
        %s785 = sand.u32 %s125, 1
        %s786 = smul.addr %s785, 32
        %s787 = scalar_lea.vmem [#allocation4], %s786
        // Predicated region
        $region79: #{transformer_encoder_layer.8} parent=65 // pred_check
          %p788 = pneg %p135
        $region80: #{transformer_encoder_layer.8} parent=65 // pred_check_branch
          %790 = sbr.rel (%p788) target = $region82
        $region81: #{transformer_encoder_layer.8} parent=65 // pred_region
          %s791 = smul.u32 4, %s19
          %s792 = smul.u32 2, %s20
          %s793 = smul.addr %s791, 4
          %s794 = sadd.s32 %s792, %s793
          %s795 = smul.addr %s794, 4
          %s796 = scalar_lea.vmem %s3, %s795
          // Predicated region
          $region83: #{transformer_encoder_layer.8} parent=81 // pred_check
            _
          $region84: #{transformer_encoder_layer.8} parent=81 // pred_check_branch
            %798 = sbr.rel (0) target = $region86
          $region85: #{transformer_encoder_layer.8} parent=81 // pred_region
            // Predicated region
            $region87: #{transformer_encoder_layer.8} parent=85 // pred_check
              _
            $region88: #{transformer_encoder_layer.8} parent=85 // pred_check_branch
              %800 = sbr.rel (0) target = $region90
            $region89: #{transformer_encoder_layer.8} parent=85 // pred_region
              // Predicated region
              $region102: #{transformer_encoder_layer.8} parent=89 // pred_check
                _
              $region103: #{transformer_encoder_layer.8} parent=89 // pred_check_branch
                %822 = sbr.rel (0) target = $region105
              $region104: #{transformer_encoder_layer.8} parent=89 // pred_region
                loop: start=0, step=1, limit=1
                $region106: #{transformer_encoder_layer.8} parent=104 // loop_pre_header
                  _
                $region107: #{transformer_encoder_layer.8} parent=104 // loop_header
                  %s824 = sphi 0, %s828
                  %p825 = scmp.ge.s32.totalorder %s824, 1
                  %s829 = sphi %s787, %s787
                  %s830 = sphi %s796, %s796
                $region108: #{transformer_encoder_layer.8} parent=104 // loop_header_branch
                  %827 = sbr.rel (%p825) target = $region112
                $region109: #{transformer_encoder_layer.8} parent=104 // loop_body
                  %v831 = vld [vmem:[%s829] sm:$0xff]
                  %832 = vst [vmem:[%s830] sm:$0xff] %v831
                  %v833 = vld [vmem:[%s829 + $0x8] sm:$0xff]
                  %834 = vst [vmem:[%s830 + $0x10] sm:$0xff] %v833
                  %v835 = vld [vmem:[%s829 + $0x10] sm:$0xff]
                  %836 = vst [vmem:[%s830 + $0x20] sm:$0xff] %v835
                  %v837 = vld [vmem:[%s829 + $0x18] sm:$0xff]
                  %838 = vst [vmem:[%s830 + $0x30] sm:$0xff] %v837
                $region110: #{transformer_encoder_layer.8} parent=104 // loop_footer
                  %s828 = sadd.s32 1, %s824
                $region111: #{transformer_encoder_layer.8} parent=104 // loop_footer_branch
                  %823 = sbr.rel target = $region107
                $region112: #{transformer_encoder_layer.8} parent=104 // loop_exit
                  _
              $region105: #{transformer_encoder_layer.8} parent=89 // pred_fallthru
                _
              // Predicated region
              $region113: #{transformer_encoder_layer.8} parent=89 // pred_check
                _
              $region114: #{transformer_encoder_layer.8} parent=89 // pred_check_branch
                %840 = sbr.rel target = $region116
              $region115: #{transformer_encoder_layer.8} parent=89 // pred_region
                _
              $region116: #{transformer_encoder_layer.8} parent=89 // pred_fallthru
                _
            $region90: #{transformer_encoder_layer.8} parent=85 // pred_fallthru
              _
            // Predicated region
            $region91: #{transformer_encoder_layer.8} parent=85 // pred_check
              _
            $region92: #{transformer_encoder_layer.8} parent=85 // pred_check_branch
              %802 = sbr.rel target = $region94
            $region93: #{transformer_encoder_layer.8} parent=85 // pred_region
              %s804 = ssub.s32 256, 1
              loop: start=0, step=1, limit=1
              $region95: #{transformer_encoder_layer.8} parent=93 // loop_pre_header
                _
              $region96: #{transformer_encoder_layer.8} parent=93 // loop_header
                %s806 = sphi 0, %s810
                %p807 = scmp.ge.s32.totalorder %s806, 1
                %s811 = sphi %s787, %s787
                %s812 = sphi %s796, %s796
              $region97: #{transformer_encoder_layer.8} parent=93 // loop_header_branch
                %809 = sbr.rel (%p807) target = $region101
              $region98: #{transformer_encoder_layer.8} parent=93 // loop_body
                %v813 = vld [vmem:[%s811] sm:%s804]
                %814 = vst [vmem:[%s812] sm:%s804] %v813
                %v815 = vld [vmem:[%s811 + $0x8] sm:%s804]
                %816 = vst [vmem:[%s812 + $0x10] sm:%s804] %v815
                %v817 = vld [vmem:[%s811 + $0x10] sm:%s804]
                %818 = vst [vmem:[%s812 + $0x20] sm:%s804] %v817
                %v819 = vld [vmem:[%s811 + $0x18] sm:%s804]
                %820 = vst [vmem:[%s812 + $0x30] sm:%s804] %v819
              $region99: #{transformer_encoder_layer.8} parent=93 // loop_footer
                %s810 = sadd.s32 1, %s806
              $region100: #{transformer_encoder_layer.8} parent=93 // loop_footer_branch
                %805 = sbr.rel target = $region96
              $region101: #{transformer_encoder_layer.8} parent=93 // loop_exit
                _
            $region94: #{transformer_encoder_layer.8} parent=85 // pred_fallthru
              _
          $region86: #{transformer_encoder_layer.8} parent=81 // pred_fallthru
            _
          %841 = vnop
        $region82: #{transformer_encoder_layer.8} parent=65 // pred_fallthru
          _
      $region66: #{transformer_encoder_layer.8} parent=5 // pred_fallthru
        _
      %p842 = scmp.le.s32.totalorder 2, %s9
      // Predicated region
      $region117: #{transformer_encoder_layer.8} parent=5 // pred_check
        %p843 = pneg %p842
      $region118: #{transformer_encoder_layer.8} parent=5 // pred_check_branch
        %845 = sbr.rel (%p843) target = $region120
      $region119: #{transformer_encoder_layer.8} parent=5 // pred_region
        %s846 = ssub.s32 %s9, 2
        // Predicated region
        $region121: #{transformer_encoder_layer.8} parent=119 // pred_check
          %p847 = pneg %p141
        $region122: #{transformer_encoder_layer.8} parent=119 // pred_check_branch
          %849 = sbr.rel (%p847) target = $region124
        $region123: #{transformer_encoder_layer.8} parent=119 // pred_region
          %s850 = sand.u32 %s126, 1
          %s851 = sand.u32 %s126, 1
          %s852 = smul.addr %s851, 32
          %s853 = scalar_lea.vmem [#allocation4], %s852
        $region124: #{transformer_encoder_layer.8} parent=119 // pred_fallthru
          _
      $region120: #{transformer_encoder_layer.8} parent=5 // pred_fallthru
        _
    $region6: #{transformer_encoder_layer.8} parent=1 // loop_footer
      %s13 = sadd.s32 1, %s9
    $region7: #{transformer_encoder_layer.8} parent=1 // loop_footer_branch
      %8 = sbr.rel target = $region3
    $region8: #{transformer_encoder_layer.8} parent=1 // loop_exit
      _

// kernel: transformer_encoder_layer.7
$region0: #{transformer_encoder_layer.7}
  #allocation0 [shape = 'u32[]', space=smem, size = 0x4, offset = 0x4, fixed_abs, tag = 'smem constant byte address 0x4 - core index']
  #allocation1 [shape = 'u32[72,128]{1,0:T(1,128)}', space=vmem, size = 0x9000, scoped, tag = 'internal scratch']
  #allocation2 [shape = 'f32[32,256]{1,0:T(8,128)}', space=vmem, size = 0x8000, scoped, tag = 'scratch operand']
  %s0 = inlined_call_operand.vmem [shape: bf16[32,256], index: 0, kind: input, shape index: {}]
  %s1 = inlined_call_operand.vmem [shape: bf16[256,256], index: 1, kind: input, shape index: {}]
  %s2 = inlined_call_operand.vmem [shape: f32[1,256], index: 2, kind: input, shape index: {}]
  %s3 = inlined_call_operand.vmem [shape: bf16[32,256], index: 3, kind: input, shape index: {}]
  %s4 = inlined_call_operand.vmem [shape: f32[1,256], index: 4, kind: input, shape index: {}]
  %s5 = inlined_call_operand.vmem [shape: f32[1,256], index: 5, kind: input, shape index: {}]
  %s6 = inlined_call_operand.vmem [shape: bf16[32,256], index: 6, kind: output, shape index: {}]
  %s7 = sld [smem:[#allocation0]]
  $region42: #{transformer_encoder_layer.7} parent=0
    _
  %s9 = ssub.s32 1, %s7
  %s10 = scalar_select 0, %s9, %s7
  // Predicated region
  $region2: #{transformer_encoder_layer.7} parent=0 // pred_check
    _
  $region3: #{transformer_encoder_layer.7} parent=0 // pred_check_branch
    %12 = sbr.rel (0) target = $region5
  $region4: #{transformer_encoder_layer.7} parent=0 // pred_region
    _
  $region5: #{transformer_encoder_layer.7} parent=0 // pred_fallthru
    _
  // Predicated region
  $region6: #{transformer_encoder_layer.7} parent=0 // pred_check
    _
  $region7: #{transformer_encoder_layer.7} parent=0 // pred_check_branch
    %14 = sbr.rel (0) target = $region9
  $region8: #{transformer_encoder_layer.7} parent=0 // pred_region
    _
  $region9: #{transformer_encoder_layer.7} parent=0 // pred_fallthru
    _
  // Predicated region
  $region10: #{transformer_encoder_layer.7} parent=0 // pred_check
    _
  $region11: #{transformer_encoder_layer.7} parent=0 // pred_check_branch
    %16 = sbr.rel (0) target = $region13
  $region12: #{transformer_encoder_layer.7} parent=0 // pred_region
    _
  $region13: #{transformer_encoder_layer.7} parent=0 // pred_fallthru
    _
  // Predicated region
  $region14: #{transformer_encoder_layer.7} parent=0 // pred_check
    _
  $region15: #{transformer_encoder_layer.7} parent=0 // pred_check_branch
    %18 = sbr.rel (0) target = $region17
  $region16: #{transformer_encoder_layer.7} parent=0 // pred_region
    _
  $region17: #{transformer_encoder_layer.7} parent=0 // pred_fallthru
    _
  // Predicated region
  $region18: #{transformer_encoder_layer.7} parent=0 // pred_check
    _
  $region19: #{transformer_encoder_layer.7} parent=0 // pred_check_branch
    %20 = sbr.rel (0) target = $region21
  $region20: #{transformer_encoder_layer.7} parent=0 // pred_region
    _
  $region21: #{transformer_encoder_layer.7} parent=0 // pred_fallthru
    _
  // Predicated region
  $region22: #{transformer_encoder_layer.7} parent=0 // pred_check
    _
  $region23: #{transformer_encoder_layer.7} parent=0 // pred_check_branch
    %22 = sbr.rel (0) target = $region25
  $region24: #{transformer_encoder_layer.7} parent=0 // pred_region
    _
  $region25: #{transformer_encoder_layer.7} parent=0 // pred_fallthru
    _
  %p23 = scmp.eq.s32.totalorder 0, 0
  // Predicated region
  $region26: #{transformer_encoder_layer.7} parent=0 // pred_check
    %p24 = pneg %p23
  $region27: #{transformer_encoder_layer.7} parent=0 // pred_check_branch
    %26 = sbr.rel (%p24) target = $region29
  $region28: #{transformer_encoder_layer.7} parent=0 // pred_region
    %27 = vst [vmem:[#allocation2] sm:$0xff] 0.0
    %28 = vst [vmem:[#allocation2 + $0x8] sm:$0xff] 0.0
    %29 = vst [vmem:[#allocation2 + $0x10] sm:$0xff] 0.0
    %30 = vst [vmem:[#allocation2 + $0x18] sm:$0xff] 0.0
    %31 = vst [vmem:[#allocation2 + $0x20] sm:$0xff] 0.0
    %32 = vst [vmem:[#allocation2 + $0x28] sm:$0xff] 0.0
    %33 = vst [vmem:[#allocation2 + $0x30] sm:$0xff] 0.0
    %34 = vst [vmem:[#allocation2 + $0x38] sm:$0xff] 0.0
  $region29: #{transformer_encoder_layer.7} parent=0 // pred_fallthru
    _
  %v35 = vld [vmem:[#allocation2] sm:$0xff]
  %v36 = vld [vmem:[#allocation2 + $0x8] sm:$0xff]
  %v37 = vld [vmem:[#allocation2 + $0x10] sm:$0xff]
  %v38 = vld [vmem:[#allocation2 + $0x18] sm:$0xff]
  %v39 = vld [vmem:[#allocation2 + $0x20] sm:$0xff]
  %v40 = vld [vmem:[#allocation2 + $0x28] sm:$0xff]
  %v41 = vld [vmem:[#allocation2 + $0x30] sm:$0xff]
  %v42 = vld [vmem:[#allocation2 + $0x38] sm:$0xff]
  %v43 = vld [vmem:[%s0] sm:$0xff]
  %v44 = vld [vmem:[%s0 + $0x8] sm:$0xff]
  %v45 = vld [vmem:[%s0 + $0x10] sm:$0xff]
  %v46 = vld [vmem:[%s0 + $0x18] sm:$0xff]
  %v47 = vld [vmem:[%s1] sm:$0xff]
  %v48 = vld [vmem:[%s1 + $0x8] sm:$0xff]
  %v49 = vld [vmem:[%s1 + $0x10] sm:$0xff]
  %v50 = vld [vmem:[%s1 + $0x18] sm:$0xff]
  %v51 = vld [vmem:[%s1 + $0x20] sm:$0xff]
  %v52 = vld [vmem:[%s1 + $0x28] sm:$0xff]
  %v53 = vld [vmem:[%s1 + $0x30] sm:$0xff]
  %v54 = vld [vmem:[%s1 + $0x38] sm:$0xff]
  %v55 = vld [vmem:[%s1 + $0x40] sm:$0xff]
  %v56 = vld [vmem:[%s1 + $0x48] sm:$0xff]
  %v57 = vld [vmem:[%s1 + $0x50] sm:$0xff]
  %v58 = vld [vmem:[%s1 + $0x58] sm:$0xff]
  %v59 = vld [vmem:[%s1 + $0x60] sm:$0xff]
  %v60 = vld [vmem:[%s1 + $0x68] sm:$0xff]
  %v61 = vld [vmem:[%s1 + $0x70] sm:$0xff]
  %v62 = vld [vmem:[%s1 + $0x78] sm:$0xff]
  %v63 = vld [vmem:[%s1 + $0x80] sm:$0xff]
  %v64 = vld [vmem:[%s1 + $0x88] sm:$0xff]
  %v65 = vld [vmem:[%s1 + $0x90] sm:$0xff]
  %v66 = vld [vmem:[%s1 + $0x98] sm:$0xff]
  %v67 = vld [vmem:[%s1 + $0xa0] sm:$0xff]
  %v68 = vld [vmem:[%s1 + $0xa8] sm:$0xff]
  %v69 = vld [vmem:[%s1 + $0xb0] sm:$0xff]
  %v70 = vld [vmem:[%s1 + $0xb8] sm:$0xff]
  %v71 = vld [vmem:[%s1 + $0xc0] sm:$0xff]
  %v72 = vld [vmem:[%s1 + $0xc8] sm:$0xff]
  %v73 = vld [vmem:[%s1 + $0xd0] sm:$0xff]
  %v74 = vld [vmem:[%s1 + $0xd8] sm:$0xff]
  %v75 = vld [vmem:[%s1 + $0xe0] sm:$0xff]
  %v76 = vld [vmem:[%s1 + $0xe8] sm:$0xff]
  %v77 = vld [vmem:[%s1 + $0xf0] sm:$0xff]
  %v78 = vld [vmem:[%s1 + $0xf8] sm:$0xff]
  %v83 = vunpack.c.l.b16 %v43
  %v84 = vunpack.c.h.b16 %v43
  %v85 = vunpack.c.l.b16 %v44
  %v86 = vunpack.c.h.b16 %v44
  %v87 = vunpack.c.l.b16 %v45
  %v88 = vunpack.c.h.b16 %v45
  %v89 = vunpack.c.l.b16 %v46
  %v90 = vunpack.c.h.b16 %v46
  %v91 = vpack.c.b16 %v85, %v83
  %v92 = vpack.c.b16 %v86, %v84
  %v93 = vpack.c.b16 %v89, %v87
  %v94 = vpack.c.b16 %v90, %v88
  %v131 = vunpack.c.l.b16 %v47
  %v132 = vunpack.c.h.b16 %v47
  %v133 = vunpack.c.l.b16 %v48
  %v134 = vunpack.c.h.b16 %v48
  %v135 = vunpack.c.l.b16 %v49
  %v136 = vunpack.c.h.b16 %v49
  %v137 = vunpack.c.l.b16 %v50
  %v138 = vunpack.c.h.b16 %v50
  %v139 = vunpack.c.l.b16 %v51
  %v140 = vunpack.c.h.b16 %v51
  %v141 = vunpack.c.l.b16 %v52
  %v142 = vunpack.c.h.b16 %v52
  %v143 = vunpack.c.l.b16 %v53
  %v144 = vunpack.c.h.b16 %v53
  %v145 = vunpack.c.l.b16 %v54
  %v146 = vunpack.c.h.b16 %v54
  %v147 = vunpack.c.l.b16 %v55
  %v148 = vunpack.c.h.b16 %v55
  %v149 = vunpack.c.l.b16 %v56
  %v150 = vunpack.c.h.b16 %v56
  %v151 = vunpack.c.l.b16 %v57
  %v152 = vunpack.c.h.b16 %v57
  %v153 = vunpack.c.l.b16 %v58
  %v154 = vunpack.c.h.b16 %v58
  %v155 = vunpack.c.l.b16 %v59
  %v156 = vunpack.c.h.b16 %v59
  %v157 = vunpack.c.l.b16 %v60
  %v158 = vunpack.c.h.b16 %v60
  %v159 = vunpack.c.l.b16 %v61
  %v160 = vunpack.c.h.b16 %v61
  %v161 = vunpack.c.l.b16 %v62
  %v162 = vunpack.c.h.b16 %v62
  %v163 = vunpack.c.l.b16 %v63
  %v164 = vunpack.c.h.b16 %v63
  %v165 = vunpack.c.l.b16 %v64
  %v166 = vunpack.c.h.b16 %v64
  %v167 = vunpack.c.l.b16 %v65
  %v168 = vunpack.c.h.b16 %v65
  %v169 = vunpack.c.l.b16 %v66
  %v170 = vunpack.c.h.b16 %v66
  %v171 = vunpack.c.l.b16 %v67
  %v172 = vunpack.c.h.b16 %v67
  %v173 = vunpack.c.l.b16 %v68
  %v174 = vunpack.c.h.b16 %v68
  %v175 = vunpack.c.l.b16 %v69
  %v176 = vunpack.c.h.b16 %v69
  %v177 = vunpack.c.l.b16 %v70
  %v178 = vunpack.c.h.b16 %v70
  %v179 = vunpack.c.l.b16 %v71
  %v180 = vunpack.c.h.b16 %v71
  %v181 = vunpack.c.l.b16 %v72
  %v182 = vunpack.c.h.b16 %v72
  %v183 = vunpack.c.l.b16 %v73
  %v184 = vunpack.c.h.b16 %v73
  %v185 = vunpack.c.l.b16 %v74
  %v186 = vunpack.c.h.b16 %v74
  %v187 = vunpack.c.l.b16 %v75
  %v188 = vunpack.c.h.b16 %v75
  %v189 = vunpack.c.l.b16 %v76
  %v190 = vunpack.c.h.b16 %v76
  %v191 = vunpack.c.l.b16 %v77
  %v192 = vunpack.c.h.b16 %v77
  %v193 = vunpack.c.l.b16 %v78
  %v194 = vunpack.c.h.b16 %v78
  %v195 = vpack.c.b16 %v133, %v131
  %v196 = vpack.c.b16 %v134, %v132
  %v197 = vpack.c.b16 %v137, %v135
  %v198 = vpack.c.b16 %v138, %v136
  %v199 = vpack.c.b16 %v141, %v139
  %v200 = vpack.c.b16 %v142, %v140
  %v201 = vpack.c.b16 %v145, %v143
  %v202 = vpack.c.b16 %v146, %v144
  %v203 = vpack.c.b16 %v149, %v147
  %v204 = vpack.c.b16 %v150, %v148
  %v205 = vpack.c.b16 %v153, %v151
  %v206 = vpack.c.b16 %v154, %v152
  %v207 = vpack.c.b16 %v157, %v155
  %v208 = vpack.c.b16 %v158, %v156
  %v209 = vpack.c.b16 %v161, %v159
  %v210 = vpack.c.b16 %v162, %v160
  %v211 = vpack.c.b16 %v165, %v163
  %v212 = vpack.c.b16 %v166, %v164
  %v213 = vpack.c.b16 %v169, %v167
  %v214 = vpack.c.b16 %v170, %v168
  %v215 = vpack.c.b16 %v173, %v171
  %v216 = vpack.c.b16 %v174, %v172
  %v217 = vpack.c.b16 %v177, %v175
  %v218 = vpack.c.b16 %v178, %v176
  %v219 = vpack.c.b16 %v181, %v179
  %v220 = vpack.c.b16 %v182, %v180
  %v221 = vpack.c.b16 %v185, %v183
  %v222 = vpack.c.b16 %v186, %v184
  %v223 = vpack.c.b16 %v189, %v187
  %v224 = vpack.c.b16 %v190, %v188
  %v225 = vpack.c.b16 %v193, %v191
  %v226 = vpack.c.b16 %v194, %v192
  %259 = vmatpush.bf16.msra.mxu0 %v209
  %260 = vmatpush.bf16.msra.mxu0 %v207
  %261 = vmatpush.bf16.msra.mxu0 %v205
  %262 = vmatpush.bf16.msra.mxu0 %v203
  %263 = vmatpush.bf16.msra.mxu0 %v201
  %264 = vmatpush.bf16.msra.mxu0 %v199
  %265 = vmatpush.bf16.msra.mxu0 %v197
  %266 = vmatpush.bf16.msra.mxu0 %v195
  %267 = vmatmul.bf16.gmra.mxu0 %v91
  %v268 = vpop.f32.mrf.mxu0
  %v269 = vadd.f32 0.0, %v268
  %v270 = vpop.f32.mrf.mxu0
  %v271 = vadd.f32 0.0, %v270
  %272 = vmatmul.bf16.gmra.mxu0 %v93
  %v273 = vpop.f32.mrf.mxu0
  %v274 = vadd.f32 0.0, %v273
  %v275 = vpop.f32.mrf.mxu0
  %v276 = vadd.f32 0.0, %v275
  %277 = vdwg.mxu0
  %278 = vmatpush.bf16.msra.mxu0 %v225
  %279 = vmatpush.bf16.msra.mxu0 %v223
  %280 = vmatpush.bf16.msra.mxu0 %v221
  %281 = vmatpush.bf16.msra.mxu0 %v219
  %282 = vmatpush.bf16.msra.mxu0 %v217
  %283 = vmatpush.bf16.msra.mxu0 %v215
  %284 = vmatpush.bf16.msra.mxu0 %v213
  %285 = vmatpush.bf16.msra.mxu0 %v211
  %286 = vmatmul.bf16.gmra.mxu0 %v92
  %v287 = vpop.f32.mrf.mxu0
  %v288 = vadd.f32 %v269, %v287
  %v289 = vpop.f32.mrf.mxu0
  %v290 = vadd.f32 %v271, %v289
  %291 = vmatmul.bf16.gmra.mxu0 %v94
  %v292 = vpop.f32.mrf.mxu0
  %v293 = vadd.f32 %v274, %v292
  %v294 = vpop.f32.mrf.mxu0
  %v295 = vadd.f32 %v276, %v294
  %296 = vdwg.mxu0
  %297 = vmatpush.bf16.msra.mxu0 %v210
  %298 = vmatpush.bf16.msra.mxu0 %v208
  %299 = vmatpush.bf16.msra.mxu0 %v206
  %300 = vmatpush.bf16.msra.mxu0 %v204
  %301 = vmatpush.bf16.msra.mxu0 %v202
  %302 = vmatpush.bf16.msra.mxu0 %v200
  %303 = vmatpush.bf16.msra.mxu0 %v198
  %304 = vmatpush.bf16.msra.mxu0 %v196
  %305 = vmatmul.bf16.gmra.mxu0 %v91
  %v306 = vpop.f32.mrf.mxu0
  %v307 = vadd.f32 0.0, %v306
  %v308 = vpop.f32.mrf.mxu0
  %v309 = vadd.f32 0.0, %v308
  %310 = vmatmul.bf16.gmra.mxu0 %v93
  %v311 = vpop.f32.mrf.mxu0
  %v312 = vadd.f32 0.0, %v311
  %v313 = vpop.f32.mrf.mxu0
  %v314 = vadd.f32 0.0, %v313
  %315 = vdwg.mxu0
  %316 = vmatpush.bf16.msra.mxu0 %v226
  %317 = vmatpush.bf16.msra.mxu0 %v224
  %318 = vmatpush.bf16.msra.mxu0 %v222
  %319 = vmatpush.bf16.msra.mxu0 %v220
  %320 = vmatpush.bf16.msra.mxu0 %v218
  %321 = vmatpush.bf16.msra.mxu0 %v216
  %322 = vmatpush.bf16.msra.mxu0 %v214
  %323 = vmatpush.bf16.msra.mxu0 %v212
  %324 = vmatmul.bf16.gmra.mxu0 %v92
  %v325 = vpop.f32.mrf.mxu0
  %v326 = vadd.f32 %v307, %v325
  %v327 = vpop.f32.mrf.mxu0
  %v328 = vadd.f32 %v309, %v327
  %329 = vmatmul.bf16.gmra.mxu0 %v94
  %v330 = vpop.f32.mrf.mxu0
  %v331 = vadd.f32 %v312, %v330
  %v332 = vpop.f32.mrf.mxu0
  %v333 = vadd.f32 %v314, %v332
  %334 = vdwg.mxu0
  %v335 = vadd.f32 %v35, %v288
  %v336 = vadd.f32 %v36, %v326
  %v337 = vadd.f32 %v37, %v290
  %v338 = vadd.f32 %v38, %v328
  %v339 = vadd.f32 %v39, %v293
  %v340 = vadd.f32 %v40, %v331
  %v341 = vadd.f32 %v41, %v295
  %v342 = vadd.f32 %v42, %v333
  %343 = vst [vmem:[#allocation2] sm:$0xff] %v335
  %344 = vst [vmem:[#allocation2 + $0x8] sm:$0xff] %v336
  %345 = vst [vmem:[#allocation2 + $0x10] sm:$0xff] %v337
  %346 = vst [vmem:[#allocation2 + $0x18] sm:$0xff] %v338
  %347 = vst [vmem:[#allocation2 + $0x20] sm:$0xff] %v339
  %348 = vst [vmem:[#allocation2 + $0x28] sm:$0xff] %v340
  %349 = vst [vmem:[#allocation2 + $0x30] sm:$0xff] %v341
  %350 = vst [vmem:[#allocation2 + $0x38] sm:$0xff] %v342
  // Predicated region
  $region30: #{transformer_encoder_layer.7} parent=0 // pred_check
    %p351 = pneg %p23
  $region31: #{transformer_encoder_layer.7} parent=0 // pred_check_branch
    %353 = sbr.rel (%p351) target = $region33
  $region32: #{transformer_encoder_layer.7} parent=0 // pred_region
    %v354 = vld [vmem:[#allocation2] sm:$0xff]
    %v355 = vld [vmem:[#allocation2 + $0x8] sm:$0xff]
    %v356 = vld [vmem:[#allocation2 + $0x10] sm:$0xff]
    %v357 = vld [vmem:[#allocation2 + $0x18] sm:$0xff]
    %v358 = vld [vmem:[#allocation2 + $0x20] sm:$0xff]
    %v359 = vld [vmem:[#allocation2 + $0x28] sm:$0xff]
    %v360 = vld [vmem:[#allocation2 + $0x30] sm:$0xff]
    %v361 = vld [vmem:[#allocation2 + $0x38] sm:$0xff]
    %v362 = vld [vmem:[%s2] sm:$0x3]
    %v364 = vperm.slane %v362, 0
    %v365 = vperm.slane %v362, 1
    %v368 = vadd.f32 %v354, %v364
    %v369 = vadd.f32 %v355, %v365
    %v370 = vadd.f32 %v356, %v364
    %v371 = vadd.f32 %v357, %v365
    %v372 = vadd.f32 %v358, %v364
    %v373 = vadd.f32 %v359, %v365
    %v374 = vadd.f32 %v360, %v364
    %v375 = vadd.f32 %v361, %v365
    %v376 = vld [vmem:[%s3] sm:$0xff]
    %v377 = vld [vmem:[%s3 + $0x8] sm:$0xff]
    %v378 = vld [vmem:[%s3 + $0x10] sm:$0xff]
    %v379 = vld [vmem:[%s3 + $0x18] sm:$0xff]
    %v380 = vunpack.c.l.bf16 %v376
    %v381 = vunpack.c.h.bf16 %v376
    %v382 = vunpack.c.l.bf16 %v377
    %v383 = vunpack.c.h.bf16 %v377
    %v384 = vunpack.c.l.bf16 %v378
    %v385 = vunpack.c.h.bf16 %v378
    %v386 = vunpack.c.l.bf16 %v379
    %v387 = vunpack.c.h.bf16 %v379
    %v388 = vadd.f32 %v368, %v380
    %v389 = vadd.f32 %v369, %v381
    %v390 = vadd.f32 %v370, %v382
    %v391 = vadd.f32 %v371, %v383
    %v392 = vadd.f32 %v372, %v384
    %v393 = vadd.f32 %v373, %v385
    %v394 = vadd.f32 %v374, %v386
    %v395 = vadd.f32 %v375, %v387
    %v396 = vadd.f32 %v388, %v389
    %397 = vadd.xlane.f32.xlu0 %v396
    %v398 = vpop.xlane.xlu0 %397
    %v399 = vadd.f32 %v390, %v391
    %400 = vadd.xlane.f32.xlu0 %v399
    %v401 = vpop.xlane.xlu0 %400
    %v402 = vadd.f32 %v392, %v393
    %403 = vadd.xlane.f32.xlu0 %v402
    %v404 = vpop.xlane.xlu0 %403
    %v405 = vadd.f32 %v394, %v395
    %406 = vadd.xlane.f32.xlu0 %v405
    %v407 = vpop.xlane.xlu0 %406
    %v408 = vrcp.pop 256.0
    %v409 = vmul.f32 256.0, %v408
    %v410 = vsub.f32 1.0, %v409
    %v411 = vmul.f32 %v408, %v410
    %v412 = vadd.f32 %v408, %v411
    %vm413 = vweird.f32 %v408
    %v414 = vsel %vm413, %v408, %v412
    %v415 = vmul.f32 %v398, %v414
    %v416 = vmul.f32 %v401, %v414
    %v417 = vmul.f32 %v404, %v414
    %v418 = vmul.f32 %v407, %v414
    %v419 = vsub.f32 %v388, %v415
    %v420 = vsub.f32 %v389, %v415
    %v421 = vsub.f32 %v390, %v416
    %v422 = vsub.f32 %v391, %v416
    %v423 = vsub.f32 %v392, %v417
    %v424 = vsub.f32 %v393, %v417
    %v425 = vsub.f32 %v394, %v418
    %v426 = vsub.f32 %v395, %v418
    %v427 = vmul.f32 %v419, %v419
    %v428 = vmul.f32 %v420, %v420
    %v429 = vmul.f32 %v421, %v421
    %v430 = vmul.f32 %v422, %v422
    %v431 = vmul.f32 %v423, %v423
    %v432 = vmul.f32 %v424, %v424
    %v433 = vmul.f32 %v425, %v425
    %v434 = vmul.f32 %v426, %v426
    %v435 = vadd.f32 %v427, %v428
    %436 = vadd.xlane.f32.xlu0 %v435
    %v437 = vpop.xlane.xlu0 %436
    %v438 = vadd.f32 %v429, %v430
    %439 = vadd.xlane.f32.xlu0 %v438
    %v440 = vpop.xlane.xlu0 %439
    %v441 = vadd.f32 %v431, %v432
    %442 = vadd.xlane.f32.xlu0 %v441
    %v443 = vpop.xlane.xlu0 %442
    %v444 = vadd.f32 %v433, %v434
    %445 = vadd.xlane.f32.xlu0 %v444
    %v446 = vpop.xlane.xlu0 %445
    %v447 = vmul.f32 %v437, %v414
    %v448 = vmul.f32 %v440, %v414
    %v449 = vmul.f32 %v443, %v414
    %v450 = vmul.f32 %v446, %v414
    %v451 = vadd.f32 %v447, 1e-05
    %v452 = vadd.f32 %v448, 1e-05
    %v453 = vadd.f32 %v449, 1e-05
    %v454 = vadd.f32 %v450, 1e-05
    %v455 = vrsqrt.pop %v451
    %v456 = vmul.f32 %v455, %v451
    %v457 = vmul.f32 %v456, %v455
    %v458 = vmul.f32 0.5, %v457
    %v459 = vsub.f32 1.5, %v458
    %v460 = vmul.f32 %v455, %v459
    %vm461 = vweird.f32 %v451
    %vm462 = vweird.f32 %v455
    %vm463 = vmor %vm461, %vm462
    %v464 = vsel %vm463, %v455, %v460
    %v465 = vrsqrt.pop %v452
    %v466 = vmul.f32 %v465, %v452
    %v467 = vmul.f32 %v466, %v465
    %v468 = vmul.f32 0.5, %v467
    %v469 = vsub.f32 1.5, %v468
    %v470 = vmul.f32 %v465, %v469
    %vm471 = vweird.f32 %v452
    %vm472 = vweird.f32 %v465
    %vm473 = vmor %vm471, %vm472
    %v474 = vsel %vm473, %v465, %v470
    %v475 = vrsqrt.pop %v453
    %v476 = vmul.f32 %v475, %v453
    %v477 = vmul.f32 %v476, %v475
    %v478 = vmul.f32 0.5, %v477
    %v479 = vsub.f32 1.5, %v478
    %v480 = vmul.f32 %v475, %v479
    %vm481 = vweird.f32 %v453
    %vm482 = vweird.f32 %v475
    %vm483 = vmor %vm481, %vm482
    %v484 = vsel %vm483, %v475, %v480
    %v485 = vrsqrt.pop %v454
    %v486 = vmul.f32 %v485, %v454
    %v487 = vmul.f32 %v486, %v485
    %v488 = vmul.f32 0.5, %v487
    %v489 = vsub.f32 1.5, %v488
    %v490 = vmul.f32 %v485, %v489
    %vm491 = vweird.f32 %v454
    %vm492 = vweird.f32 %v485
    %vm493 = vmor %vm491, %vm492
    %v494 = vsel %vm493, %v485, %v490
    %v495 = vmul.f32 %v419, %v464
    %v496 = vmul.f32 %v420, %v464
    %v497 = vmul.f32 %v421, %v474
    %v498 = vmul.f32 %v422, %v474
    %v499 = vmul.f32 %v423, %v484
    %v500 = vmul.f32 %v424, %v484
    %v501 = vmul.f32 %v425, %v494
    %v502 = vmul.f32 %v426, %v494
    %v503 = vld [vmem:[%s4] sm:$0x3]
    %v505 = vperm.slane %v503, 0
    %v506 = vperm.slane %v503, 1
    %v509 = vmul.f32 %v495, %v505
    %v510 = vmul.f32 %v496, %v506
    %v511 = vmul.f32 %v497, %v505
    %v512 = vmul.f32 %v498, %v506
    %v513 = vmul.f32 %v499, %v505
    %v514 = vmul.f32 %v500, %v506
    %v515 = vmul.f32 %v501, %v505
    %v516 = vmul.f32 %v502, %v506
    %v517 = vld [vmem:[%s5] sm:$0x3]
    %v519 = vperm.slane %v517, 0
    %v520 = vperm.slane %v517, 1
    %v523 = vadd.f32 %v509, %v519
    %v524 = vadd.f32 %v510, %v520
    %v525 = vadd.f32 %v511, %v519
    %v526 = vadd.f32 %v512, %v520
    %v527 = vadd.f32 %v513, %v519
    %v528 = vadd.f32 %v514, %v520
    %v529 = vadd.f32 %v515, %v519
    %v530 = vadd.f32 %v516, %v520
    %v531 = vpack.c.bf16 %v524, %v523
    %v532 = vpack.c.bf16 %v526, %v525
    %v533 = vpack.c.bf16 %v528, %v527
    %v534 = vpack.c.bf16 %v530, %v529
    %535 = vst [vmem:[%s6] sm:$0xff] %v531
    %536 = vst [vmem:[%s6 + $0x8] sm:$0xff] %v532
    %537 = vst [vmem:[%s6 + $0x10] sm:$0xff] %v533
    %538 = vst [vmem:[%s6 + $0x18] sm:$0xff] %v534
  $region33: #{transformer_encoder_layer.7} parent=0 // pred_fallthru
    _
  // Predicated region
  $region34: #{transformer_encoder_layer.7} parent=0 // pred_check
    _
  $region35: #{transformer_encoder_layer.7} parent=0 // pred_check_branch
    %540 = sbr.rel (0) target = $region37
  $region36: #{transformer_encoder_layer.7} parent=0 // pred_region
    _
  $region37: #{transformer_encoder_layer.7} parent=0 // pred_fallthru
    _
  // Predicated region
  $region38: #{transformer_encoder_layer.7} parent=0 // pred_check
    _
  $region39: #{transformer_encoder_layer.7} parent=0 // pred_check_branch
    %542 = sbr.rel (0) target = $region41
  $region40: #{transformer_encoder_layer.7} parent=0 // pred_region
    _
  $region41: #{transformer_encoder_layer.7} parent=0 // pred_fallthru
    _

// kernel: transformer_encoder_layer.9
$region0: #{transformer_encoder_layer.9}
  #allocation0 [shape = 'u32[]', space=smem, size = 0x4, offset = 0x4, fixed_abs, tag = 'smem constant byte address 0x4 - core index']
  #allocation1 [shape = 'u32[72,128]{1,0:T(1,128)}', space=vmem, size = 0x9000, scoped, tag = 'internal scratch']
  #allocation2 [shape = 'f32[32,256]{1,0:T(8,128)}', space=vmem, size = 0x8000, scoped, tag = 'scratch operand']
  %s0 = inlined_call_operand.vmem [shape: bf16[32,512], index: 0, kind: input, shape index: {}]
  %s1 = inlined_call_operand.vmem [shape: bf16[512,256], index: 1, kind: input, shape index: {}]
  %s2 = inlined_call_operand.vmem [shape: f32[1,256], index: 2, kind: input, shape index: {}]
  %s3 = inlined_call_operand.vmem [shape: bf16[32,256], index: 3, kind: input, shape index: {}]
  %s4 = inlined_call_operand.vmem [shape: f32[1,256], index: 4, kind: input, shape index: {}]
  %s5 = inlined_call_operand.vmem [shape: f32[1,256], index: 5, kind: input, shape index: {}]
  %s6 = inlined_call_operand.vmem [shape: f32[32,256], index: 6, kind: output, shape index: {}]
  %s7 = sld [smem:[#allocation0]]
  $region103: #{transformer_encoder_layer.9} parent=0
    _
  %s9 = ssub.s32 1, %s7
  %s10 = scalar_select 0, %s9, %s7
  $region1: #{transformer_encoder_layer.9} parent=0
    #allocation3 [shape = 'u8[32768]{0}', space=vmem, size = 0x8000, scoped, tag = 'input window, operand 0']
    loop: start=0, step=1, limit=4
    $region2: #{transformer_encoder_layer.9} parent=1 // loop_pre_header
      _
    $region3: #{transformer_encoder_layer.9} parent=1 // loop_header
      %s12 = sphi 0, %s16
      %p13 = scmp.ge.s32.totalorder %s12, 4
      %s19 = sphi 0, %s31
      %s20 = sphi 0, %s27
      %s21 = sphi 0, %s19
      %s22 = sphi 0, %s20
      %s23 = sphi 0, %s21
      %s24 = sphi 0, %s22
      %s36 = sphi 0, %s38
      %s39 = sphi 0, %s36
      %s40 = sphi 0, %s39
      %s56 = sphi 0, %s40
      %s62 = sphi 0, %s64
      %s65 = sphi 0, %s62
      %s66 = sphi 0, %s65
      %s82 = sphi 0, %s66
      %s86 = sphi 0, %s86
      %s88 = sphi 0, %s86
      %s89 = sphi 0, %s88
      %s103 = sphi 0, %s89
      %s109 = sphi 0, %s111
      %s112 = sphi 0, %s109
      %s113 = sphi 0, %s112
      %s129 = sphi 0, %s113
      %s133 = sphi 0, %s133
      %s135 = sphi 0, %s133
      %s136 = sphi 0, %s135
      %s150 = sphi 0, %s136
      %s154 = sphi 0, %s154
      %s156 = sphi 0, %s154
      %s157 = sphi 0, %s156
      %s171 = sphi 0, %s157
      %s177 = sphi 0, %s179
      %s180 = sphi 0, %s177
      %s181 = sphi 0, %s180
      %s197 = sphi 0, %s181
    $region4: #{transformer_encoder_layer.9} parent=1 // loop_header_branch
      %15 = sbr.rel (%p13) target = $region8
    $region5: #{transformer_encoder_layer.9} parent=1 // loop_body
      %s17 = ssub.s32 %s12, 1
      %s18 = ssub.s32 %s12, 2
      %s25 = sadd.s32 1, %s20
      %p26 = scmp.ge.s32.totalorder %s25, 2
      %s27 = scalar_select %p26, 0, %s25
      %s28 = sadd.s32 1, %s19
      %s29 = scalar_select %p26, %s28, %s19
      %p30 = scmp.ge.s32.totalorder %s29, 1
      %s31 = scalar_select %p30, 0, %s29
      %s32 = ssub.s32 %s19, %s31
      %s33 = ssub.s32 %s20, %s27
      %s34 = sor.u32 %s32, %s33
      %p35 = scmp.eq.s32.totalorder %s34, 0
      %s37 = sadd.s32 %s36, 1
      %s38 = scalar_select %p35, %s36, %s37
      %p41 = pneg %p35
      %p42 = scmp.eq.s32.totalorder %s12, 1
      %p43 = por %p41, %p42
      %p44 = scmp.ne.s32.totalorder %s36, %s39
      %p45 = scmp.eq.s32.totalorder %s12, 0
      %p46 = por %p44, %p45
      %p47 = scmp.ne.s32.totalorder %s36, %s39
      %p48 = scmp.eq.s32.totalorder %s17, 1
      %p49 = por %p47, %p48
      %p50 = scmp.ne.s32.totalorder %s39, %s40
      %p51 = scmp.eq.s32.totalorder %s17, 0
      %p52 = por %p50, %p51
      %p53 = scmp.ne.s32.totalorder %s39, %s40
      %p54 = scmp.eq.s32.totalorder %s18, 1
      %p55 = por %p53, %p54
      %p57 = scmp.ne.s32.totalorder %s40, %s56
      %p58 = scmp.eq.s32.totalorder %s18, 0
      %p59 = por %p57, %p58
      %s60 = ssub.s32 %s20, %s27
      %p61 = scmp.eq.s32.totalorder %s60, 0
      %s63 = sadd.s32 %s62, 1
      %s64 = scalar_select %p61, %s62, %s63
      %p67 = pneg %p61
      %p68 = scmp.eq.s32.totalorder %s12, 1
      %p69 = por %p67, %p68
      %p70 = scmp.ne.s32.totalorder %s62, %s65
      %p71 = scmp.eq.s32.totalorder %s12, 0
      %p72 = por %p70, %p71
      %p73 = scmp.ne.s32.totalorder %s62, %s65
      %p74 = scmp.eq.s32.totalorder %s17, 1
      %p75 = por %p73, %p74
      %p76 = scmp.ne.s32.totalorder %s65, %s66
      %p77 = scmp.eq.s32.totalorder %s17, 0
      %p78 = por %p76, %p77
      %p79 = scmp.ne.s32.totalorder %s65, %s66
      %p80 = scmp.eq.s32.totalorder %s18, 1
      %p81 = por %p79, %p80
      %p83 = scmp.ne.s32.totalorder %s66, %s82
      %p84 = scmp.eq.s32.totalorder %s18, 0
      %p85 = por %p83, %p84
      %s87 = sadd.s32 %s86, 1
      %p90 = scmp.eq.s32.totalorder %s12, 1
      %p91 = scmp.ne.s32.totalorder %s86, %s88
      %p92 = scmp.eq.s32.totalorder %s12, 0
      %p93 = por %p91, %p92
      %p94 = scmp.ne.s32.totalorder %s86, %s88
      %p95 = scmp.eq.s32.totalorder %s17, 1
      %p96 = por %p94, %p95
      %p97 = scmp.ne.s32.totalorder %s88, %s89
      %p98 = scmp.eq.s32.totalorder %s17, 0
      %p99 = por %p97, %p98
      %p100 = scmp.ne.s32.totalorder %s88, %s89
      %p101 = scmp.eq.s32.totalorder %s18, 1
      %p102 = por %p100, %p101
      %p104 = scmp.ne.s32.totalorder %s89, %s103
      %p105 = scmp.eq.s32.totalorder %s18, 0
      %p106 = por %p104, %p105
      %s107 = ssub.s32 %s19, %s31
      %p108 = scmp.eq.s32.totalorder %s107, 0
      %s110 = sadd.s32 %s109, 1
      %s111 = scalar_select %p108, %s109, %s110
      %p114 = pneg %p108
      %p115 = scmp.eq.s32.totalorder %s12, 1
      %p116 = por %p114, %p115
      %p117 = scmp.ne.s32.totalorder %s109, %s112
      %p118 = scmp.eq.s32.totalorder %s12, 0
      %p119 = por %p117, %p118
      %p120 = scmp.ne.s32.totalorder %s109, %s112
      %p121 = scmp.eq.s32.totalorder %s17, 1
      %p122 = por %p120, %p121
      %p123 = scmp.ne.s32.totalorder %s112, %s113
      %p124 = scmp.eq.s32.totalorder %s17, 0
      %p125 = por %p123, %p124
      %p126 = scmp.ne.s32.totalorder %s112, %s113
      %p127 = scmp.eq.s32.totalorder %s18, 1
      %p128 = por %p126, %p127
      %p130 = scmp.ne.s32.totalorder %s113, %s129
      %p131 = scmp.eq.s32.totalorder %s18, 0
      %p132 = por %p130, %p131
      %s134 = sadd.s32 %s133, 1
      %p137 = scmp.eq.s32.totalorder %s12, 1
      %p138 = scmp.ne.s32.totalorder %s133, %s135
      %p139 = scmp.eq.s32.totalorder %s12, 0
      %p140 = por %p138, %p139
      %p141 = scmp.ne.s32.totalorder %s133, %s135
      %p142 = scmp.eq.s32.totalorder %s17, 1
      %p143 = por %p141, %p142
      %p144 = scmp.ne.s32.totalorder %s135, %s136
      %p145 = scmp.eq.s32.totalorder %s17, 0
      %p146 = por %p144, %p145
      %p147 = scmp.ne.s32.totalorder %s135, %s136
      %p148 = scmp.eq.s32.totalorder %s18, 1
      %p149 = por %p147, %p148
      %p151 = scmp.ne.s32.totalorder %s136, %s150
      %p152 = scmp.eq.s32.totalorder %s18, 0
      %p153 = por %p151, %p152
      %s155 = sadd.s32 %s154, 1
      %p158 = scmp.eq.s32.totalorder %s12, 1
      %p159 = scmp.ne.s32.totalorder %s154, %s156
      %p160 = scmp.eq.s32.totalorder %s12, 0
      %p161 = por %p159, %p160
      %p162 = scmp.ne.s32.totalorder %s154, %s156
      %p163 = scmp.eq.s32.totalorder %s17, 1
      %p164 = por %p162, %p163
      %p165 = scmp.ne.s32.totalorder %s156, %s157
      %p166 = scmp.eq.s32.totalorder %s17, 0
      %p167 = por %p165, %p166
      %p168 = scmp.ne.s32.totalorder %s156, %s157
      %p169 = scmp.eq.s32.totalorder %s18, 1
      %p170 = por %p168, %p169
      %p172 = scmp.ne.s32.totalorder %s157, %s171
      %p173 = scmp.eq.s32.totalorder %s18, 0
      %p174 = por %p172, %p173
      %s175 = ssub.s32 %s19, %s31
      %p176 = scmp.eq.s32.totalorder %s175, 0
      %s178 = sadd.s32 %s177, 1
      %s179 = scalar_select %p176, %s177, %s178
      %p182 = pneg %p176
      %p183 = scmp.eq.s32.totalorder %s12, 1
      %p184 = por %p182, %p183
      %p185 = scmp.ne.s32.totalorder %s177, %s180
      %p186 = scmp.eq.s32.totalorder %s12, 0
      %p187 = por %p185, %p186
      %p188 = scmp.ne.s32.totalorder %s177, %s180
      %p189 = scmp.eq.s32.totalorder %s17, 1
      %p190 = por %p188, %p189
      %p191 = scmp.ne.s32.totalorder %s180, %s181
      %p192 = scmp.eq.s32.totalorder %s17, 0
      %p193 = por %p191, %p192
      %p194 = scmp.ne.s32.totalorder %s180, %s181
      %p195 = scmp.eq.s32.totalorder %s18, 1
      %p196 = por %p194, %p195
      %p198 = scmp.ne.s32.totalorder %s181, %s197
      %p199 = scmp.eq.s32.totalorder %s18, 0
      %p200 = por %p198, %p199
      %p201 = scmp.le.s32.totalorder 1, %s12
      %p202 = scmp.lt.s32.totalorder %s12, 3
      %p203 = pnand %p201, %p202
      %p204 = pneg %p203
      // Predicated region
      $region9: #{transformer_encoder_layer.9} parent=5 // pred_check
        _
      $region10: #{transformer_encoder_layer.9} parent=5 // pred_check_branch
        %206 = sbr.rel (%p203) target = $region12
      $region11: #{transformer_encoder_layer.9} parent=5 // pred_region
        %s207 = ssub.s32 %s12, 1
        // Predicated region
        $region13: #{transformer_encoder_layer.9} parent=11 // pred_check
          %p208 = pneg %p99
        $region14: #{transformer_encoder_layer.9} parent=11 // pred_check_branch
          %210 = sbr.rel (%p208) target = $region16
        $region15: #{transformer_encoder_layer.9} parent=11 // pred_region
          _
        $region16: #{transformer_encoder_layer.9} parent=11 // pred_fallthru
          _
        // Predicated region
        $region17: #{transformer_encoder_layer.9} parent=11 // pred_check
          %p211 = pneg %p125
        $region18: #{transformer_encoder_layer.9} parent=11 // pred_check_branch
          %213 = sbr.rel (%p211) target = $region20
        $region19: #{transformer_encoder_layer.9} parent=11 // pred_region
          %s214 = smul.u32 4, %s21
          %p215 = scmp.lt.s32.totalorder %s214, 3
          %s216 = scalar_select %p215, %s214, 3
          %s217 = smul.addr %s216, 2
          %s218 = smul.addr %s217, 4
          %s219 = scalar_lea.vmem %s3, %s218
          %s220 = smul.u32 4, %s21
        $region20: #{transformer_encoder_layer.9} parent=11 // pred_fallthru
          _
        // Predicated region
        $region21: #{transformer_encoder_layer.9} parent=11 // pred_check
          %p221 = pneg %p146
        $region22: #{transformer_encoder_layer.9} parent=11 // pred_check_branch
          %223 = sbr.rel (%p221) target = $region24
        $region23: #{transformer_encoder_layer.9} parent=11 // pred_region
          _
        $region24: #{transformer_encoder_layer.9} parent=11 // pred_fallthru
          _
        // Predicated region
        $region25: #{transformer_encoder_layer.9} parent=11 // pred_check
          %p224 = pneg %p167
        $region26: #{transformer_encoder_layer.9} parent=11 // pred_check_branch
          %226 = sbr.rel (%p224) target = $region28
        $region27: #{transformer_encoder_layer.9} parent=11 // pred_region
          _
        $region28: #{transformer_encoder_layer.9} parent=11 // pred_fallthru
          _
      $region12: #{transformer_encoder_layer.9} parent=5 // pred_fallthru
        _
      %p227 = scmp.lt.s32.totalorder %s12, 2
      // Predicated region
      $region29: #{transformer_encoder_layer.9} parent=5 // pred_check
        %p228 = pneg %p227
      $region30: #{transformer_encoder_layer.9} parent=5 // pred_check_branch
        %230 = sbr.rel (%p228) target = $region32
      $region31: #{transformer_encoder_layer.9} parent=5 // pred_region
        // Predicated region
        $region33: #{transformer_encoder_layer.9} parent=31 // pred_check
          %p231 = pneg %p46
        $region34: #{transformer_encoder_layer.9} parent=31 // pred_check_branch
          %233 = sbr.rel (%p231) target = $region36
        $region35: #{transformer_encoder_layer.9} parent=31 // pred_region
          %s234 = sand.u32 %s36, 1
          %s235 = sand.u32 %s36, 1
          %s236 = smul.addr %s235, 32
          %s237 = scalar_lea.vmem [#allocation3], %s236
          %s238 = smul.u32 4, %s19
          %s239 = smul.u32 2, %s20
          %s240 = smul.addr %s238, 4
          %s241 = sadd.s32 %s239, %s240
          %s242 = smul.addr %s241, 4
          %s243 = scalar_lea.vmem %s0, %s242
          // Predicated region
          $region37: #{transformer_encoder_layer.9} parent=35 // pred_check
            _
          $region38: #{transformer_encoder_layer.9} parent=35 // pred_check_branch
            %245 = sbr.rel (0) target = $region40
          $region39: #{transformer_encoder_layer.9} parent=35 // pred_region
            // Predicated region
            $region41: #{transformer_encoder_layer.9} parent=39 // pred_check
              _
            $region42: #{transformer_encoder_layer.9} parent=39 // pred_check_branch
              %247 = sbr.rel (0) target = $region44
            $region43: #{transformer_encoder_layer.9} parent=39 // pred_region
              // Predicated region
              $region56: #{transformer_encoder_layer.9} parent=43 // pred_check
                _
              $region57: #{transformer_encoder_layer.9} parent=43 // pred_check_branch
                %269 = sbr.rel (0) target = $region59
              $region58: #{transformer_encoder_layer.9} parent=43 // pred_region
                loop: start=0, step=1, limit=1
                $region60: #{transformer_encoder_layer.9} parent=58 // loop_pre_header
                  _
                $region61: #{transformer_encoder_layer.9} parent=58 // loop_header
                  %s271 = sphi 0, %s275
                  %p272 = scmp.ge.s32.totalorder %s271, 1
                  %s276 = sphi %s243, %s243
                  %s277 = sphi %s237, %s237
                $region62: #{transformer_encoder_layer.9} parent=58 // loop_header_branch
                  %274 = sbr.rel (%p272) target = $region66
                $region63: #{transformer_encoder_layer.9} parent=58 // loop_body
                  %v278 = vld [vmem:[%s276] sm:$0xff]
                  %279 = vst [vmem:[%s277] sm:$0xff] %v278
                  %v280 = vld [vmem:[%s276 + $0x10] sm:$0xff]
                  %281 = vst [vmem:[%s277 + $0x8] sm:$0xff] %v280
                  %v282 = vld [vmem:[%s276 + $0x20] sm:$0xff]
                  %283 = vst [vmem:[%s277 + $0x10] sm:$0xff] %v282
                  %v284 = vld [vmem:[%s276 + $0x30] sm:$0xff]
                  %285 = vst [vmem:[%s277 + $0x18] sm:$0xff] %v284
                $region64: #{transformer_encoder_layer.9} parent=58 // loop_footer
                  %s275 = sadd.s32 1, %s271
                $region65: #{transformer_encoder_layer.9} parent=58 // loop_footer_branch
                  %270 = sbr.rel target = $region61
                $region66: #{transformer_encoder_layer.9} parent=58 // loop_exit
                  _
              $region59: #{transformer_encoder_layer.9} parent=43 // pred_fallthru
                _
              // Predicated region
              $region67: #{transformer_encoder_layer.9} parent=43 // pred_check
                _
              $region68: #{transformer_encoder_layer.9} parent=43 // pred_check_branch
                %287 = sbr.rel target = $region70
              $region69: #{transformer_encoder_layer.9} parent=43 // pred_region
                _
              $region70: #{transformer_encoder_layer.9} parent=43 // pred_fallthru
                _
            $region44: #{transformer_encoder_layer.9} parent=39 // pred_fallthru
              _
            // Predicated region
            $region45: #{transformer_encoder_layer.9} parent=39 // pred_check
              _
            $region46: #{transformer_encoder_layer.9} parent=39 // pred_check_branch
              %249 = sbr.rel target = $region48
            $region47: #{transformer_encoder_layer.9} parent=39 // pred_region
              %s251 = ssub.s32 256, 1
              loop: start=0, step=1, limit=1
              $region49: #{transformer_encoder_layer.9} parent=47 // loop_pre_header
                _
              $region50: #{transformer_encoder_layer.9} parent=47 // loop_header
                %s253 = sphi 0, %s257
                %p254 = scmp.ge.s32.totalorder %s253, 1
                %s258 = sphi %s243, %s243
                %s259 = sphi %s237, %s237
              $region51: #{transformer_encoder_layer.9} parent=47 // loop_header_branch
                %256 = sbr.rel (%p254) target = $region55
              $region52: #{transformer_encoder_layer.9} parent=47 // loop_body
                %v260 = vld [vmem:[%s258] sm:%s251]
                %261 = vst [vmem:[%s259] sm:%s251] %v260
                %v262 = vld [vmem:[%s258 + $0x10] sm:%s251]
                %263 = vst [vmem:[%s259 + $0x8] sm:%s251] %v262
                %v264 = vld [vmem:[%s258 + $0x20] sm:%s251]
                %265 = vst [vmem:[%s259 + $0x10] sm:%s251] %v264
                %v266 = vld [vmem:[%s258 + $0x30] sm:%s251]
                %267 = vst [vmem:[%s259 + $0x18] sm:%s251] %v266
              $region53: #{transformer_encoder_layer.9} parent=47 // loop_footer
                %s257 = sadd.s32 1, %s253
              $region54: #{transformer_encoder_layer.9} parent=47 // loop_footer_branch
                %252 = sbr.rel target = $region50
              $region55: #{transformer_encoder_layer.9} parent=47 // loop_exit
                _
            $region48: #{transformer_encoder_layer.9} parent=39 // pred_fallthru
              _
          $region40: #{transformer_encoder_layer.9} parent=35 // pred_fallthru
            _
          %288 = vnop
        $region36: #{transformer_encoder_layer.9} parent=31 // pred_fallthru
          _
        // Predicated region
        $region71: #{transformer_encoder_layer.9} parent=31 // pred_check
          %p289 = pneg %p72
        $region72: #{transformer_encoder_layer.9} parent=31 // pred_check_branch
          %291 = sbr.rel (%p289) target = $region74
        $region73: #{transformer_encoder_layer.9} parent=31 // pred_region
          %s292 = smul.u32 32, %s20
          %p293 = scmp.lt.s32.totalorder %s292, 63
          %s294 = scalar_select %p293, %s292, 63
          %s295 = smul.addr %s294, 2
          %s296 = smul.addr %s295, 4
          %s297 = scalar_lea.vmem %s1, %s296
          %s298 = smul.u32 32, %s20
        $region74: #{transformer_encoder_layer.9} parent=31 // pred_fallthru
          _
      $region32: #{transformer_encoder_layer.9} parent=5 // pred_fallthru
        _
      %p299 = scmp.le.s32.totalorder 1, %s12
      %p300 = scmp.lt.s32.totalorder %s12, 3
      %p301 = pnand %p299, %p300
      %p302 = pneg %p301
      // Predicated region
      $region75: #{transformer_encoder_layer.9} parent=5 // pred_check
        _
      $region76: #{transformer_encoder_layer.9} parent=5 // pred_check_branch
        %304 = sbr.rel (%p301) target = $region78
      $region77: #{transformer_encoder_layer.9} parent=5 // pred_region
        %s305 = ssub.s32 %s12, 1
        %s306 = sand.u32 %s39, 1
        %s307 = sand.u32 %s39, 1
        %s308 = smul.addr %s307, 32
        %s309 = scalar_lea.vmem [#allocation3], %s308
        // Predicated region
        $region79: #{transformer_encoder_layer.9} parent=77 // pred_check
          %p310 = pneg %p52
        $region80: #{transformer_encoder_layer.9} parent=77 // pred_check_branch
          %312 = sbr.rel (%p310) target = $region82
        $region81: #{transformer_encoder_layer.9} parent=77 // pred_region
          _
        $region82: #{transformer_encoder_layer.9} parent=77 // pred_fallthru
          _
        %s313 = sand.u32 %s39, 1
        %s314 = sand.u32 %s39, 1
        %s315 = smul.addr %s314, 32
        %s316 = scalar_lea.vmem [#allocation3], %s315
        %p317 = pneg %p52
        %p318 = pneg %p49
        %s319 = smul.u32 32, %s22
        %p320 = scmp.lt.s32.totalorder %s319, 63
        %s321 = scalar_select %p320, %s319, 63
        %s322 = smul.addr %s321, 2
        %s323 = smul.addr %s322, 4
        %s324 = scalar_lea.vmem %s1, %s323
        %p325 = pneg %p78
        %p326 = pneg %p75
        %p327 = pneg %p99
        %p328 = pneg %p96
        %s329 = smul.u32 4, %s21
        %p330 = scmp.lt.s32.totalorder %s329, 3
        %s331 = scalar_select %p330, %s329, 3
        %s332 = smul.addr %s331, 2
        %s333 = smul.addr %s332, 4
        %s334 = scalar_lea.vmem %s3, %s333
        %p335 = pneg %p125
        %p336 = pneg %p122
        %p337 = pneg %p146
        %p338 = pneg %p143
        %p339 = pneg %p167
        %p340 = pneg %p164
        %p341 = pneg %p193
        %p342 = pneg %p190
        %s343 = smul.u32 4, %s21
        %p344 = scmp.lt.s32.totalorder %s343, 3
        %s345 = scalar_select %p344, %s343, 3
        %s346 = smul.addr %s345, 2
        %s347 = smul.addr %s346, 8
        %s348 = scalar_lea.vmem %s6, %s347
        %s349 = smul.u32 4, %s21
        %s350 = smul.u32 2, %s22
        %s351 = smul.u32 32, %s22
        %p352 = scmp.lt.s32.totalorder %s351, 63
        %s353 = scalar_select %p352, %s351, 63
        %s354 = smul.addr %s353, 2
        %s355 = smul.addr %s354, 4
        %s356 = scalar_lea.vmem %s1, %s355
        %s357 = smul.u32 32, %s22
        %s358 = smul.u32 4, %s21
        %p359 = scmp.lt.s32.totalorder %s358, 3
        %s360 = scalar_select %p359, %s358, 3
        %s361 = smul.addr %s360, 2
        %s362 = smul.addr %s361, 4
        %s363 = scalar_lea.vmem %s3, %s362
        %s364 = smul.u32 4, %s21
        %s365 = smul.u32 4, %s21
        %p366 = scmp.lt.s32.totalorder %s365, 3
        %s367 = scalar_select %p366, %s365, 3
        %s368 = smul.addr %s367, 2
        %s369 = smul.addr %s368, 8
        %s370 = scalar_lea.vmem %s6, %s369
        %s371 = smul.u32 4, %s21
        %p372 = scmp.eq.s32.totalorder %s22, 0
        // Predicated region
        $region83: #{transformer_encoder_layer.9} parent=77 // pred_check
          %p373 = pneg %p372
        $region84: #{transformer_encoder_layer.9} parent=77 // pred_check_branch
          %375 = sbr.rel (%p373) target = $region86
        $region85: #{transformer_encoder_layer.9} parent=77 // pred_region
          %376 = vst [vmem:[#allocation2] sm:$0xff] 0.0
          %377 = vst [vmem:[#allocation2 + $0x8] sm:$0xff] 0.0
          %378 = vst [vmem:[#allocation2 + $0x10] sm:$0xff] 0.0
          %379 = vst [vmem:[#allocation2 + $0x18] sm:$0xff] 0.0
          %380 = vst [vmem:[#allocation2 + $0x20] sm:$0xff] 0.0
          %381 = vst [vmem:[#allocation2 + $0x28] sm:$0xff] 0.0
          %382 = vst [vmem:[#allocation2 + $0x30] sm:$0xff] 0.0
          %383 = vst [vmem:[#allocation2 + $0x38] sm:$0xff] 0.0
        $region86: #{transformer_encoder_layer.9} parent=77 // pred_fallthru
          _
        %v384 = vld [vmem:[#allocation2] sm:$0xff]
        %v385 = vld [vmem:[#allocation2 + $0x8] sm:$0xff]
        %v386 = vld [vmem:[#allocation2 + $0x10] sm:$0xff]
        %v387 = vld [vmem:[#allocation2 + $0x18] sm:$0xff]
        %v388 = vld [vmem:[#allocation2 + $0x20] sm:$0xff]
        %v389 = vld [vmem:[#allocation2 + $0x28] sm:$0xff]
        %v390 = vld [vmem:[#allocation2 + $0x30] sm:$0xff]
        %v391 = vld [vmem:[#allocation2 + $0x38] sm:$0xff]
        %v392 = vld [vmem:[%s309] sm:$0xff]
        %v393 = vld [vmem:[%s309 + $0x8] sm:$0xff]
        %v394 = vld [vmem:[%s309 + $0x10] sm:$0xff]
        %v395 = vld [vmem:[%s309 + $0x18] sm:$0xff]
        %v396 = vld [vmem:[%s356] sm:$0xff]
        %v397 = vld [vmem:[%s356 + $0x8] sm:$0xff]
        %v398 = vld [vmem:[%s356 + $0x10] sm:$0xff]
        %v399 = vld [vmem:[%s356 + $0x18] sm:$0xff]
        %v400 = vld [vmem:[%s356 + $0x20] sm:$0xff]
        %v401 = vld [vmem:[%s356 + $0x28] sm:$0xff]
        %v402 = vld [vmem:[%s356 + $0x30] sm:$0xff]
        %v403 = vld [vmem:[%s356 + $0x38] sm:$0xff]
        %v404 = vld [vmem:[%s356 + $0x40] sm:$0xff]
        %v405 = vld [vmem:[%s356 + $0x48] sm:$0xff]
        %v406 = vld [vmem:[%s356 + $0x50] sm:$0xff]
        %v407 = vld [vmem:[%s356 + $0x58] sm:$0xff]
        %v408 = vld [vmem:[%s356 + $0x60] sm:$0xff]
        %v409 = vld [vmem:[%s356 + $0x68] sm:$0xff]
        %v410 = vld [vmem:[%s356 + $0x70] sm:$0xff]
        %v411 = vld [vmem:[%s356 + $0x78] sm:$0xff]
        %v412 = vld [vmem:[%s356 + $0x80] sm:$0xff]
        %v413 = vld [vmem:[%s356 + $0x88] sm:$0xff]
        %v414 = vld [vmem:[%s356 + $0x90] sm:$0xff]
        %v415 = vld [vmem:[%s356 + $0x98] sm:$0xff]
        %v416 = vld [vmem:[%s356 + $0xa0] sm:$0xff]
        %v417 = vld [vmem:[%s356 + $0xa8] sm:$0xff]
        %v418 = vld [vmem:[%s356 + $0xb0] sm:$0xff]
        %v419 = vld [vmem:[%s356 + $0xb8] sm:$0xff]
        %v420 = vld [vmem:[%s356 + $0xc0] sm:$0xff]
        %v421 = vld [vmem:[%s356 + $0xc8] sm:$0xff]
        %v422 = vld [vmem:[%s356 + $0xd0] sm:$0xff]
        %v423 = vld [vmem:[%s356 + $0xd8] sm:$0xff]
        %v424 = vld [vmem:[%s356 + $0xe0] sm:$0xff]
        %v425 = vld [vmem:[%s356 + $0xe8] sm:$0xff]
        %v426 = vld [vmem:[%s356 + $0xf0] sm:$0xff]
        %v427 = vld [vmem:[%s356 + $0xf8] sm:$0xff]
        %v432 = vunpack.c.l.b16 %v392
        %v433 = vunpack.c.h.b16 %v392
        %v434 = vunpack.c.l.b16 %v393
        %v435 = vunpack.c.h.b16 %v393
        %v436 = vunpack.c.l.b16 %v394
        %v437 = vunpack.c.h.b16 %v394
        %v438 = vunpack.c.l.b16 %v395
        %v439 = vunpack.c.h.b16 %v395
        %v440 = vpack.c.b16 %v434, %v432
        %v441 = vpack.c.b16 %v435, %v433
        %v442 = vpack.c.b16 %v438, %v436
        %v443 = vpack.c.b16 %v439, %v437
        %v480 = vunpack.c.l.b16 %v396
        %v481 = vunpack.c.h.b16 %v396
        %v482 = vunpack.c.l.b16 %v397
        %v483 = vunpack.c.h.b16 %v397
        %v484 = vunpack.c.l.b16 %v398
        %v485 = vunpack.c.h.b16 %v398
        %v486 = vunpack.c.l.b16 %v399
        %v487 = vunpack.c.h.b16 %v399
        %v488 = vunpack.c.l.b16 %v400
        %v489 = vunpack.c.h.b16 %v400
        %v490 = vunpack.c.l.b16 %v401
        %v491 = vunpack.c.h.b16 %v401
        %v492 = vunpack.c.l.b16 %v402
        %v493 = vunpack.c.h.b16 %v402
        %v494 = vunpack.c.l.b16 %v403
        %v495 = vunpack.c.h.b16 %v403
        %v496 = vunpack.c.l.b16 %v404
        %v497 = vunpack.c.h.b16 %v404
        %v498 = vunpack.c.l.b16 %v405
        %v499 = vunpack.c.h.b16 %v405
        %v500 = vunpack.c.l.b16 %v406
        %v501 = vunpack.c.h.b16 %v406
        %v502 = vunpack.c.l.b16 %v407
        %v503 = vunpack.c.h.b16 %v407
        %v504 = vunpack.c.l.b16 %v408
        %v505 = vunpack.c.h.b16 %v408
        %v506 = vunpack.c.l.b16 %v409
        %v507 = vunpack.c.h.b16 %v409
        %v508 = vunpack.c.l.b16 %v410
        %v509 = vunpack.c.h.b16 %v410
        %v510 = vunpack.c.l.b16 %v411
        %v511 = vunpack.c.h.b16 %v411
        %v512 = vunpack.c.l.b16 %v412
        %v513 = vunpack.c.h.b16 %v412
        %v514 = vunpack.c.l.b16 %v413
        %v515 = vunpack.c.h.b16 %v413
        %v516 = vunpack.c.l.b16 %v414
        %v517 = vunpack.c.h.b16 %v414
        %v518 = vunpack.c.l.b16 %v415
        %v519 = vunpack.c.h.b16 %v415
        %v520 = vunpack.c.l.b16 %v416
        %v521 = vunpack.c.h.b16 %v416
        %v522 = vunpack.c.l.b16 %v417
        %v523 = vunpack.c.h.b16 %v417
        %v524 = vunpack.c.l.b16 %v418
        %v525 = vunpack.c.h.b16 %v418
        %v526 = vunpack.c.l.b16 %v419
        %v527 = vunpack.c.h.b16 %v419
        %v528 = vunpack.c.l.b16 %v420
        %v529 = vunpack.c.h.b16 %v420
        %v530 = vunpack.c.l.b16 %v421
        %v531 = vunpack.c.h.b16 %v421
        %v532 = vunpack.c.l.b16 %v422
        %v533 = vunpack.c.h.b16 %v422
        %v534 = vunpack.c.l.b16 %v423
        %v535 = vunpack.c.h.b16 %v423
        %v536 = vunpack.c.l.b16 %v424
        %v537 = vunpack.c.h.b16 %v424
        %v538 = vunpack.c.l.b16 %v425
        %v539 = vunpack.c.h.b16 %v425
        %v540 = vunpack.c.l.b16 %v426
        %v541 = vunpack.c.h.b16 %v426
        %v542 = vunpack.c.l.b16 %v427
        %v543 = vunpack.c.h.b16 %v427
        %v544 = vpack.c.b16 %v482, %v480
        %v545 = vpack.c.b16 %v483, %v481
        %v546 = vpack.c.b16 %v486, %v484
        %v547 = vpack.c.b16 %v487, %v485
        %v548 = vpack.c.b16 %v490, %v488
        %v549 = vpack.c.b16 %v491, %v489
        %v550 = vpack.c.b16 %v494, %v492
        %v551 = vpack.c.b16 %v495, %v493
        %v552 = vpack.c.b16 %v498, %v496
        %v553 = vpack.c.b16 %v499, %v497
        %v554 = vpack.c.b16 %v502, %v500
        %v555 = vpack.c.b16 %v503, %v501
        %v556 = vpack.c.b16 %v506, %v504
        %v557 = vpack.c.b16 %v507, %v505
        %v558 = vpack.c.b16 %v510, %v508
        %v559 = vpack.c.b16 %v511, %v509
        %v560 = vpack.c.b16 %v514, %v512
        %v561 = vpack.c.b16 %v515, %v513
        %v562 = vpack.c.b16 %v518, %v516
        %v563 = vpack.c.b16 %v519, %v517
        %v564 = vpack.c.b16 %v522, %v520
        %v565 = vpack.c.b16 %v523, %v521
        %v566 = vpack.c.b16 %v526, %v524
        %v567 = vpack.c.b16 %v527, %v525
        %v568 = vpack.c.b16 %v530, %v528
        %v569 = vpack.c.b16 %v531, %v529
        %v570 = vpack.c.b16 %v534, %v532
        %v571 = vpack.c.b16 %v535, %v533
        %v572 = vpack.c.b16 %v538, %v536
        %v573 = vpack.c.b16 %v539, %v537
        %v574 = vpack.c.b16 %v542, %v540
        %v575 = vpack.c.b16 %v543, %v541
        %608 = vmatpush.bf16.msra.mxu0 %v558
        %609 = vmatpush.bf16.msra.mxu0 %v556
        %610 = vmatpush.bf16.msra.mxu0 %v554
        %611 = vmatpush.bf16.msra.mxu0 %v552
        %612 = vmatpush.bf16.msra.mxu0 %v550
        %613 = vmatpush.bf16.msra.mxu0 %v548
        %614 = vmatpush.bf16.msra.mxu0 %v546
        %615 = vmatpush.bf16.msra.mxu0 %v544
        %616 = vmatmul.bf16.gmra.mxu0 %v440
        %v617 = vpop.f32.mrf.mxu0
        %v618 = vadd.f32 0.0, %v617
        %v619 = vpop.f32.mrf.mxu0
        %v620 = vadd.f32 0.0, %v619
        %621 = vmatmul.bf16.gmra.mxu0 %v442
        %v622 = vpop.f32.mrf.mxu0
        %v623 = vadd.f32 0.0, %v622
        %v624 = vpop.f32.mrf.mxu0
        %v625 = vadd.f32 0.0, %v624
        %626 = vdwg.mxu0
        %627 = vmatpush.bf16.msra.mxu0 %v574
        %628 = vmatpush.bf16.msra.mxu0 %v572
        %629 = vmatpush.bf16.msra.mxu0 %v570
        %630 = vmatpush.bf16.msra.mxu0 %v568
        %631 = vmatpush.bf16.msra.mxu0 %v566
        %632 = vmatpush.bf16.msra.mxu0 %v564
        %633 = vmatpush.bf16.msra.mxu0 %v562
        %634 = vmatpush.bf16.msra.mxu0 %v560
        %635 = vmatmul.bf16.gmra.mxu0 %v441
        %v636 = vpop.f32.mrf.mxu0
        %v637 = vadd.f32 %v618, %v636
        %v638 = vpop.f32.mrf.mxu0
        %v639 = vadd.f32 %v620, %v638
        %640 = vmatmul.bf16.gmra.mxu0 %v443
        %v641 = vpop.f32.mrf.mxu0
        %v642 = vadd.f32 %v623, %v641
        %v643 = vpop.f32.mrf.mxu0
        %v644 = vadd.f32 %v625, %v643
        %645 = vdwg.mxu0
        %646 = vmatpush.bf16.msra.mxu0 %v559
        %647 = vmatpush.bf16.msra.mxu0 %v557
        %648 = vmatpush.bf16.msra.mxu0 %v555
        %649 = vmatpush.bf16.msra.mxu0 %v553
        %650 = vmatpush.bf16.msra.mxu0 %v551
        %651 = vmatpush.bf16.msra.mxu0 %v549
        %652 = vmatpush.bf16.msra.mxu0 %v547
        %653 = vmatpush.bf16.msra.mxu0 %v545
        %654 = vmatmul.bf16.gmra.mxu0 %v440
        %v655 = vpop.f32.mrf.mxu0
        %v656 = vadd.f32 0.0, %v655
        %v657 = vpop.f32.mrf.mxu0
        %v658 = vadd.f32 0.0, %v657
        %659 = vmatmul.bf16.gmra.mxu0 %v442
        %v660 = vpop.f32.mrf.mxu0
        %v661 = vadd.f32 0.0, %v660
        %v662 = vpop.f32.mrf.mxu0
        %v663 = vadd.f32 0.0, %v662
        %664 = vdwg.mxu0
        %665 = vmatpush.bf16.msra.mxu0 %v575
        %666 = vmatpush.bf16.msra.mxu0 %v573
        %667 = vmatpush.bf16.msra.mxu0 %v571
        %668 = vmatpush.bf16.msra.mxu0 %v569
        %669 = vmatpush.bf16.msra.mxu0 %v567
        %670 = vmatpush.bf16.msra.mxu0 %v565
        %671 = vmatpush.bf16.msra.mxu0 %v563
        %672 = vmatpush.bf16.msra.mxu0 %v561
        %673 = vmatmul.bf16.gmra.mxu0 %v441
        %v674 = vpop.f32.mrf.mxu0
        %v675 = vadd.f32 %v656, %v674
        %v676 = vpop.f32.mrf.mxu0
        %v677 = vadd.f32 %v658, %v676
        %678 = vmatmul.bf16.gmra.mxu0 %v443
        %v679 = vpop.f32.mrf.mxu0
        %v680 = vadd.f32 %v661, %v679
        %v681 = vpop.f32.mrf.mxu0
        %v682 = vadd.f32 %v663, %v681
        %683 = vdwg.mxu0
        %v684 = vadd.f32 %v384, %v637
        %v685 = vadd.f32 %v385, %v675
        %v686 = vadd.f32 %v386, %v639
        %v687 = vadd.f32 %v387, %v677
        %v688 = vadd.f32 %v388, %v642
        %v689 = vadd.f32 %v389, %v680
        %v690 = vadd.f32 %v390, %v644
        %v691 = vadd.f32 %v391, %v682
        %692 = vst [vmem:[#allocation2] sm:$0xff] %v684
        %693 = vst [vmem:[#allocation2 + $0x8] sm:$0xff] %v685
        %694 = vst [vmem:[#allocation2 + $0x10] sm:$0xff] %v686
        %695 = vst [vmem:[#allocation2 + $0x18] sm:$0xff] %v687
        %696 = vst [vmem:[#allocation2 + $0x20] sm:$0xff] %v688
        %697 = vst [vmem:[#allocation2 + $0x28] sm:$0xff] %v689
        %698 = vst [vmem:[#allocation2 + $0x30] sm:$0xff] %v690
        %699 = vst [vmem:[#allocation2 + $0x38] sm:$0xff] %v691
        %p700 = scmp.eq.s32.totalorder %s22, 1
        // Predicated region
        $region87: #{transformer_encoder_layer.9} parent=77 // pred_check
          %p701 = pneg %p700
        $region88: #{transformer_encoder_layer.9} parent=77 // pred_check_branch
          %703 = sbr.rel (%p701) target = $region90
        $region89: #{transformer_encoder_layer.9} parent=77 // pred_region
          %v704 = vld [vmem:[#allocation2] sm:$0xff]
          %v705 = vld [vmem:[#allocation2 + $0x8] sm:$0xff]
          %v706 = vld [vmem:[#allocation2 + $0x10] sm:$0xff]
          %v707 = vld [vmem:[#allocation2 + $0x18] sm:$0xff]
          %v708 = vld [vmem:[#allocation2 + $0x20] sm:$0xff]
          %v709 = vld [vmem:[#allocation2 + $0x28] sm:$0xff]
          %v710 = vld [vmem:[#allocation2 + $0x30] sm:$0xff]
          %v711 = vld [vmem:[#allocation2 + $0x38] sm:$0xff]
          %v712 = vld [vmem:[%s2] sm:$0x3]
          %v714 = vperm.slane %v712, 0
          %v715 = vperm.slane %v712, 1
          %v718 = vadd.f32 %v704, %v714
          %v719 = vadd.f32 %v705, %v715
          %v720 = vadd.f32 %v706, %v714
          %v721 = vadd.f32 %v707, %v715
          %v722 = vadd.f32 %v708, %v714
          %v723 = vadd.f32 %v709, %v715
          %v724 = vadd.f32 %v710, %v714
          %v725 = vadd.f32 %v711, %v715
          %v726 = vld [vmem:[%s363] sm:$0xff]
          %v727 = vld [vmem:[%s363 + $0x8] sm:$0xff]
          %v728 = vld [vmem:[%s363 + $0x10] sm:$0xff]
          %v729 = vld [vmem:[%s363 + $0x18] sm:$0xff]
          %v730 = vunpack.c.l.bf16 %v726
          %v731 = vunpack.c.h.bf16 %v726
          %v732 = vunpack.c.l.bf16 %v727
          %v733 = vunpack.c.h.bf16 %v727
          %v734 = vunpack.c.l.bf16 %v728
          %v735 = vunpack.c.h.bf16 %v728
          %v736 = vunpack.c.l.bf16 %v729
          %v737 = vunpack.c.h.bf16 %v729
          %v738 = vadd.f32 %v718, %v730
          %v739 = vadd.f32 %v719, %v731
          %v740 = vadd.f32 %v720, %v732
          %v741 = vadd.f32 %v721, %v733
          %v742 = vadd.f32 %v722, %v734
          %v743 = vadd.f32 %v723, %v735
          %v744 = vadd.f32 %v724, %v736
          %v745 = vadd.f32 %v725, %v737
          %v746 = vadd.f32 %v738, %v739
          %747 = vadd.xlane.f32.xlu0 %v746
          %v748 = vpop.xlane.xlu0 %747
          %v749 = vadd.f32 %v740, %v741
          %750 = vadd.xlane.f32.xlu0 %v749
          %v751 = vpop.xlane.xlu0 %750
          %v752 = vadd.f32 %v742, %v743
          %753 = vadd.xlane.f32.xlu0 %v752
          %v754 = vpop.xlane.xlu0 %753
          %v755 = vadd.f32 %v744, %v745
          %756 = vadd.xlane.f32.xlu0 %v755
          %v757 = vpop.xlane.xlu0 %756
          %v758 = vrcp.pop 256.0
          %v759 = vmul.f32 256.0, %v758
          %v760 = vsub.f32 1.0, %v759
          %v761 = vmul.f32 %v758, %v760
          %v762 = vadd.f32 %v758, %v761
          %vm763 = vweird.f32 %v758
          %v764 = vsel %vm763, %v758, %v762
          %v765 = vmul.f32 %v748, %v764
          %v766 = vmul.f32 %v751, %v764
          %v767 = vmul.f32 %v754, %v764
          %v768 = vmul.f32 %v757, %v764
          %v769 = vsub.f32 %v738, %v765
          %v770 = vsub.f32 %v739, %v765
          %v771 = vsub.f32 %v740, %v766
          %v772 = vsub.f32 %v741, %v766
          %v773 = vsub.f32 %v742, %v767
          %v774 = vsub.f32 %v743, %v767
          %v775 = vsub.f32 %v744, %v768
          %v776 = vsub.f32 %v745, %v768
          %v777 = vmul.f32 %v769, %v769
          %v778 = vmul.f32 %v770, %v770
          %v779 = vmul.f32 %v771, %v771
          %v780 = vmul.f32 %v772, %v772
          %v781 = vmul.f32 %v773, %v773
          %v782 = vmul.f32 %v774, %v774
          %v783 = vmul.f32 %v775, %v775
          %v784 = vmul.f32 %v776, %v776
          %v785 = vadd.f32 %v777, %v778
          %786 = vadd.xlane.f32.xlu0 %v785
          %v787 = vpop.xlane.xlu0 %786
          %v788 = vadd.f32 %v779, %v780
          %789 = vadd.xlane.f32.xlu0 %v788
          %v790 = vpop.xlane.xlu0 %789
          %v791 = vadd.f32 %v781, %v782
          %792 = vadd.xlane.f32.xlu0 %v791
          %v793 = vpop.xlane.xlu0 %792
          %v794 = vadd.f32 %v783, %v784
          %795 = vadd.xlane.f32.xlu0 %v794
          %v796 = vpop.xlane.xlu0 %795
          %v797 = vmul.f32 %v787, %v764
          %v798 = vmul.f32 %v790, %v764
          %v799 = vmul.f32 %v793, %v764
          %v800 = vmul.f32 %v796, %v764
          %v801 = vadd.f32 %v797, 1e-05
          %v802 = vadd.f32 %v798, 1e-05
          %v803 = vadd.f32 %v799, 1e-05
          %v804 = vadd.f32 %v800, 1e-05
          %v805 = vrsqrt.pop %v801
          %v806 = vmul.f32 %v805, %v801
          %v807 = vmul.f32 %v806, %v805
          %v808 = vmul.f32 0.5, %v807
          %v809 = vsub.f32 1.5, %v808
          %v810 = vmul.f32 %v805, %v809
          %vm811 = vweird.f32 %v801
          %vm812 = vweird.f32 %v805
          %vm813 = vmor %vm811, %vm812
          %v814 = vsel %vm813, %v805, %v810
          %v815 = vrsqrt.pop %v802
          %v816 = vmul.f32 %v815, %v802
          %v817 = vmul.f32 %v816, %v815
          %v818 = vmul.f32 0.5, %v817
          %v819 = vsub.f32 1.5, %v818
          %v820 = vmul.f32 %v815, %v819
          %vm821 = vweird.f32 %v802
          %vm822 = vweird.f32 %v815
          %vm823 = vmor %vm821, %vm822
          %v824 = vsel %vm823, %v815, %v820
          %v825 = vrsqrt.pop %v803
          %v826 = vmul.f32 %v825, %v803
          %v827 = vmul.f32 %v826, %v825
          %v828 = vmul.f32 0.5, %v827
          %v829 = vsub.f32 1.5, %v828
          %v830 = vmul.f32 %v825, %v829
          %vm831 = vweird.f32 %v803
          %vm832 = vweird.f32 %v825
          %vm833 = vmor %vm831, %vm832
          %v834 = vsel %vm833, %v825, %v830
          %v835 = vrsqrt.pop %v804
          %v836 = vmul.f32 %v835, %v804
          %v837 = vmul.f32 %v836, %v835
          %v838 = vmul.f32 0.5, %v837
          %v839 = vsub.f32 1.5, %v838
          %v840 = vmul.f32 %v835, %v839
          %vm841 = vweird.f32 %v804
          %vm842 = vweird.f32 %v835
          %vm843 = vmor %vm841, %vm842
          %v844 = vsel %vm843, %v835, %v840
          %v845 = vmul.f32 %v769, %v814
          %v846 = vmul.f32 %v770, %v814
          %v847 = vmul.f32 %v771, %v824
          %v848 = vmul.f32 %v772, %v824
          %v849 = vmul.f32 %v773, %v834
          %v850 = vmul.f32 %v774, %v834
          %v851 = vmul.f32 %v775, %v844
          %v852 = vmul.f32 %v776, %v844
          %v853 = vld [vmem:[%s4] sm:$0x3]
          %v855 = vperm.slane %v853, 0
          %v856 = vperm.slane %v853, 1
          %v859 = vmul.f32 %v845, %v855
          %v860 = vmul.f32 %v846, %v856
          %v861 = vmul.f32 %v847, %v855
          %v862 = vmul.f32 %v848, %v856
          %v863 = vmul.f32 %v849, %v855
          %v864 = vmul.f32 %v850, %v856
          %v865 = vmul.f32 %v851, %v855
          %v866 = vmul.f32 %v852, %v856
          %v867 = vld [vmem:[%s5] sm:$0x3]
          %v869 = vperm.slane %v867, 0
          %v870 = vperm.slane %v867, 1
          %v873 = vadd.f32 %v859, %v869
          %v874 = vadd.f32 %v860, %v870
          %v875 = vadd.f32 %v861, %v869
          %v876 = vadd.f32 %v862, %v870
          %v877 = vadd.f32 %v863, %v869
          %v878 = vadd.f32 %v864, %v870
          %v879 = vadd.f32 %v865, %v869
          %v880 = vadd.f32 %v866, %v870
          %881 = vst [vmem:[%s370] sm:$0xff] %v873
          %882 = vst [vmem:[%s370 + $0x8] sm:$0xff] %v874
          %883 = vst [vmem:[%s370 + $0x10] sm:$0xff] %v875
          %884 = vst [vmem:[%s370 + $0x18] sm:$0xff] %v876
          %885 = vst [vmem:[%s370 + $0x20] sm:$0xff] %v877
          %886 = vst [vmem:[%s370 + $0x28] sm:$0xff] %v878
          %887 = vst [vmem:[%s370 + $0x30] sm:$0xff] %v879
          %888 = vst [vmem:[%s370 + $0x38] sm:$0xff] %v880
        $region90: #{transformer_encoder_layer.9} parent=77 // pred_fallthru
          _
        %s889 = smul.u32 4, %s21
        %p890 = scmp.lt.s32.totalorder %s889, 3
        %s891 = scalar_select %p890, %s889, 3
        %s892 = smul.addr %s891, 2
        %s893 = smul.addr %s892, 8
        %s894 = scalar_lea.vmem %s6, %s893
        // Predicated region
        $region91: #{transformer_encoder_layer.9} parent=77 // pred_check
          %p895 = pneg %p190
        $region92: #{transformer_encoder_layer.9} parent=77 // pred_check_branch
          %897 = sbr.rel (%p895) target = $region94
        $region93: #{transformer_encoder_layer.9} parent=77 // pred_region
          %s898 = smul.u32 4, %s21
        $region94: #{transformer_encoder_layer.9} parent=77 // pred_fallthru
          _
        // Predicated region
        $region95: #{transformer_encoder_layer.9} parent=77 // pred_check
          %p899 = pneg %p190
        $region96: #{transformer_encoder_layer.9} parent=77 // pred_check_branch
          %901 = sbr.rel (%p899) target = $region98
        $region97: #{transformer_encoder_layer.9} parent=77 // pred_region
          %s902 = smul.u32 4, %s21
          %p903 = scmp.lt.s32.totalorder %s902, 3
          %s904 = scalar_select %p903, %s902, 3
          %s905 = smul.addr %s904, 2
          %s906 = smul.addr %s905, 8
          %s907 = scalar_lea.vmem %s6, %s906
        $region98: #{transformer_encoder_layer.9} parent=77 // pred_fallthru
          _
      $region78: #{transformer_encoder_layer.9} parent=5 // pred_fallthru
        _
      %p908 = scmp.le.s32.totalorder 2, %s12
      // Predicated region
      $region99: #{transformer_encoder_layer.9} parent=5 // pred_check
        %p909 = pneg %p908
      $region100: #{transformer_encoder_layer.9} parent=5 // pred_check_branch
        %911 = sbr.rel (%p909) target = $region102
      $region101: #{transformer_encoder_layer.9} parent=5 // pred_region
        %s912 = ssub.s32 %s12, 2
      $region102: #{transformer_encoder_layer.9} parent=5 // pred_fallthru
        _
    $region6: #{transformer_encoder_layer.9} parent=1 // loop_footer
      %s16 = sadd.s32 1, %s12
    $region7: #{transformer_encoder_layer.9} parent=1 // loop_footer_branch
      %11 = sbr.rel target = $region3
    $region8: #{transformer_encoder_layer.9} parent=1 // loop_exit
      _

</llo_original>
